<compile_context>
chip_gen: v7x
topology: tpu7x:2x2x1
jax: 0.10.0
libtpu: 0.0.40
codegen_flags: <defaults>
</compile_context>

<pallas_src>
import functools

import jax
import jax.numpy as jnp
from jax.experimental import pallas as pl
from jax.experimental.pallas import tpu as pltpu


_K = 7         # conv kernel size
_DIL = 3       # dilation
_PAD = 9       # logical halo -> "same" spatial output size
_PAD_TOP = 16  # physical top pad (sublane-aligned interior), >= _PAD
_VMEM_BUDGET = 24 * 1024 * 1024   # stay well inside v7x's 32 MiB scoped default


def _spatial_att_kernel(x_ref, w_ref, b_ref, o_ref, pad_ref, shift_ref,
                        *, N, C, H, W):
    """Fused: channel mean/max -> dilated 2x7x7 conv -> sigmoid.

    x_ref    : (N, C, H, W)     VMEM, native dtype
    w_ref    : (98,)            SMEM f32, flat [c][ky][kx]
    b_ref    : (1,)             SMEM f32
    o_ref    : (H, N*W)         VMEM f32 (batch packed along lanes)
    pad_ref  : (2, Hp, N*Wp)    VMEM f32, zero-padded avg/max planes
    shift_ref: (2*7, Hp, N*W)   VMEM f32, kx-lane-shifted copies of the planes
    """
    Wp = W + 2 * _PAD
    f32 = jnp.float32

    # Zero the padded planes unconditionally: single grid step, no cross-step
    # persistence, safe under any core sharding (fixes the v7x hazard).
    pad_ref[...] = jnp.zeros(pad_ref.shape, f32)

    # Fused single pass over C: channel sum & max, written straight into the
    # padded planes (batch n occupies its own lane strip with a 9-wide halo).
    inv_c = 1.0 / C
    for n in range(N):
        col = n * Wp + _PAD
        s = x_ref[n, 0].astype(f32)
        m = s
        for c in range(1, C):
            xc = x_ref[n, c].astype(f32)
            s = s + xc
            m = jnp.maximum(m, xc)
        pad_ref[0, _PAD_TOP:_PAD_TOP + H, col:col + W] = s * inv_c
        pad_ref[1, _PAD_TOP:_PAD_TOP + H, col:col + W] = m

    # Hoist the kx lane shifts: 2 planes x 7 shifted, batch packed densely
    # along lanes.  Every element of shift_ref is overwritten here, so the
    # scratch needs no zero-init.
    for c in range(2):
        for kx in range(_K):
            plane = c * _K + kx
            for n in range(N):
                src_col = n * Wp + kx * _DIL
                shift_ref[plane, :, n * W:(n + 1) * W] = (
                    pad_ref[c, :, src_col:src_col + W])

    # 98-tap dilated conv: only sublane-offset VMEM loads remain; 4
    # independent accumulator chains keep the VALU slots fed.
    row0 = _PAD_TOP - _PAD   # padded-plane row holding logical halo row 0
    accs = [None, None, None, None]
    tap = 0
    for c in range(2):
        for kx in range(_K):
            plane = c * _K + kx
            for ky in range(_K):
                w = w_ref[c * _K * _K + ky * _K + kx]
                r0 = row0 + ky * _DIL
                contrib = w * shift_ref[plane, r0:r0 + H, :]
                i = tap % 4
                accs[i] = contrib if accs[i] is None else accs[i] + contrib
                tap += 1
    acc = (accs[0] + accs[1]) + (accs[2] + accs[3])
    o_ref[...] = jax.nn.sigmoid(acc + b_ref[0])


def _spatial_att_group(t, w_flat, bias):
    """t: (N, C, H, W) -> (N, 1, H, W) attention map; one pallas_call."""
    N, C, H, W = t.shape
    Hp = H + _PAD_TOP + _PAD
    Wp = W + 2 * _PAD
    NW = N * W

    # VMEM guard (v7x has only 64 MiB physical / 32 MiB scoped default).
    itemsize = jnp.dtype(t.dtype).itemsize
    est = (2 * N * C * H * W * itemsize              # double-buffered input
           + 2 * H * NW * 4                          # output
           + (2 * Hp * N * Wp + 2 * _K * Hp * NW) * 4)   # scratch planes
    if est > _VMEM_BUDGET:
        # TODO(synk): add a C-tiled "arbitrary" grid axis with running
        # sum/max accumulation for production shapes that exceed VMEM.
        raise NotImplementedError(
            f"block {t.shape} needs ~{est} B VMEM > {_VMEM_BUDGET} B budget")

    kernel = functools.partial(_spatial_att_kernel, N=N, C=C, H=H, W=W)
    out = pl.pallas_call(
        kernel,
        out_shape=jax.ShapeDtypeStruct((H, NW), jnp.float32),
        grid_spec=pltpu.PrefetchScalarGridSpec(
            num_scalar_prefetch=0,
            grid=(1,),
            in_specs=[
                pl.BlockSpec((N, C, H, W), lambda i: (0, 0, 0, 0)),
                pl.BlockSpec(memory_space=pltpu.MemorySpace.SMEM),  # weights
                pl.BlockSpec(memory_space=pltpu.MemorySpace.SMEM),  # bias
            ],
            out_specs=pl.BlockSpec((H, NW), lambda i: (0, 0)),
            scratch_shapes=[
                pltpu.VMEM((2, Hp, N * Wp), jnp.float32),
                pltpu.VMEM((2 * _K, Hp, NW), jnp.float32),
            ],
        ),
        compiler_params=pltpu.CompilerParams(
            dimension_semantics=("arbitrary",)),
    )(t, w_flat, bias)
    # (H, N*W) lane-dense slab -> (N, 1, H, W)
    return out.reshape(H, N, W).transpose(1, 0, 2)[:, None, :, :]


def spatial_att_bridge_forward(t_list, conv_w, conv_b):
    """conv_w: (1, 2, 7, 7) OIHW, conv_b: (1,). Returns 5 attention maps."""
    w_flat = conv_w.astype(jnp.float32).reshape(-1)   # (98,) [c][ky][kx]
    bias = conv_b.astype(jnp.float32).reshape(1)

    # Batch-stack inputs that share (C, H, W) so they go through one call.
    groups = {}
    for idx, t in enumerate(t_list):
        groups.setdefault(tuple(t.shape[1:]), []).append(idx)

    outs = [None] * len(t_list)
    for idxs in groups.values():
        if len(idxs) == 1:
            stacked = t_list[idxs[0]]
        else:
            stacked = jnp.concatenate([t_list[i] for i in idxs], axis=0)
        att = _spatial_att_group(stacked, w_flat, bias)   # (sum_N, 1, H, W)
        off = 0
        for i in idxs:
            n_i = t_list[i].shape[0]
            outs[i] = att[off:off + n_i]
            off += n_i
    return tuple(outs)


def spatial_att_bridge_reference(t_list, conv_w, conv_b):
    """Pure-JAX reference mirroring the PyTorch forward."""
    outs = []
    for t in t_list:
        avg = jnp.mean(t, axis=1, keepdims=True)
        mx = jnp.max(t, axis=1, keepdims=True)
        att = jnp.concatenate([avg, mx], axis=1)            # (N, 2, H, W)
        conv = jax.lax.conv_general_dilated(
            att, conv_w,
            window_strides=(1, 1),
            padding=((_PAD, _PAD), (_PAD, _PAD)),
            rhs_dilation=(_DIL, _DIL),
            dimension_numbers=("NCHW", "OIHW", "NCHW"),
            precision=jax.lax.Precision.HIGHEST)
        outs.append(jax.nn.sigmoid(conv + conv_b.reshape(1, 1, 1, 1)))
    return tuple(outs)


if __name__ == "__main__":
    key = jax.random.PRNGKey(0)
    kw, kb, k1, k2, k3, k4, k5 = jax.random.split(key, 7)

    # Small encoder-pyramid-like shapes (N, C, H, W) for t1..t5.
    shapes = [(2, 8, 32, 32), (2, 16, 16, 16), (2, 24, 16, 16),
              (2, 32, 8, 8), (2, 32, 8, 8)]
    t_list = [jax.random.normal(k, s, dtype=jnp.float32)
              for k, s in zip((k1, k2, k3, k4, k5), shapes)]

    conv_w = jax.random.normal(kw, (1, 2, _K, _K), dtype=jnp.float32) * 0.1
    conv_b = jax.random.normal(kb, (1,), dtype=jnp.float32) * 0.1

    outs = spatial_att_bridge_forward(t_list, conv_w, conv_b)
    outs = jax.block_until_ready(outs)

    refs = spatial_att_bridge_reference(t_list, conv_w, conv_b)
    for o, r, s in zip(outs, refs, shapes):
        assert o.shape == (s[0], 1, s[2], s[3])
        assert jnp.allclose(o, r, atol=1e-4, rtol=1e-4), "mismatch vs reference"

    print("KERNEL_OK")
</pallas_src>

<mosaic_0001>
module attributes {stable_mosaic.version = 11 : i64} {
  func.func @_spatial_att_kernel(%arg0: i32, %arg1: memref<2x8x32x32xf32, #tpu.memory_space<vmem>>, %arg2: memref<98xf32, #tpu.memory_space<smem>>, %arg3: memref<1xf32, #tpu.memory_space<smem>>, %arg4: memref<32x64xf32, #tpu.memory_space<vmem>>, %arg5: memref<2x57x100xf32, #tpu.memory_space<vmem>>, %arg6: memref<14x57x64xf32, #tpu.memory_space<vmem>>) attributes {dimension_semantics = [#tpu.dimension_semantics<arbitrary>], iteration_bounds = array<i64: 1>, scalar_prefetch = 0 : i64, scratch_operands = 2 : i64, tpu.core_type = #tpu.core_type<tc>, window_params = [{pipeline_mode = #tpu.pipeline_mode<synchronous>, transform_indices = @transform_0, window_bounds = array<i64: 2, 8, 32, 32>}, {transform_indices = @transform_1, window_bounds = array<i64: 98>}, {transform_indices = @transform_2, window_bounds = array<i64: 1>}, {pipeline_mode = #tpu.pipeline_mode<synchronous>, transform_indices = @transform_3, window_bounds = array<i64: 32, 64>}]} {
    %cst = arith.constant 0.000000e+00 : f32
    %0 = vector.broadcast %cst : f32 to vector<2x57x100xf32>
    %c0 = arith.constant 0 : index
    %c0_0 = arith.constant 0 : index
    %c0_1 = arith.constant 0 : index
    %1 = vector.load %arg5[%c0, %c0_0, %c0_1] : memref<2x57x100xf32, #tpu.memory_space<vmem>>, vector<2x57x100xf32>
    tpu.vector_store %arg5[%c0, %c0_0, %c0_1], %0 {strides = array<i32>} : memref<2x57x100xf32, #tpu.memory_space<vmem>>, vector<2x57x100xf32>,
    %c0_2 = arith.constant 0 : index
    %c0_3 = arith.constant 0 : index
    %c0_4 = arith.constant 0 : index
    %c0_5 = arith.constant 0 : index
    %2 = vector.load %arg1[%c0_2, %c0_3, %c0_4, %c0_5] : memref<2x8x32x32xf32, #tpu.memory_space<vmem>>, vector<1x1x32x32xf32>
    %3 = vector.shape_cast %2 : vector<1x1x32x32xf32> to vector<32x32xf32>
    %c0_6 = arith.constant 0 : index
    %c1 = arith.constant 1 : index
    %c0_7 = arith.constant 0 : index
    %c0_8 = arith.constant 0 : index
    %4 = vector.load %arg1[%c0_6, %c1, %c0_7, %c0_8] : memref<2x8x32x32xf32, #tpu.memory_space<vmem>>, vector<1x1x32x32xf32>
    %5 = vector.shape_cast %4 : vector<1x1x32x32xf32> to vector<32x32xf32>
    %6 = arith.addf %3, %5 : vector<32x32xf32>
    %7 = arith.maximumf %3, %5 : vector<32x32xf32>
    %c0_9 = arith.constant 0 : index
    %c2 = arith.constant 2 : index
    %c0_10 = arith.constant 0 : index
    %c0_11 = arith.constant 0 : index
    %8 = vector.load %arg1[%c0_9, %c2, %c0_10, %c0_11] : memref<2x8x32x32xf32, #tpu.memory_space<vmem>>, vector<1x1x32x32xf32>
    %9 = vector.shape_cast %8 : vector<1x1x32x32xf32> to vector<32x32xf32>
    %10 = arith.addf %6, %9 : vector<32x32xf32>
    %11 = arith.maximumf %7, %9 : vector<32x32xf32>
    %c0_12 = arith.constant 0 : index
    %c3 = arith.constant 3 : index
    %c0_13 = arith.constant 0 : index
    %c0_14 = arith.constant 0 : index
    %12 = vector.load %arg1[%c0_12, %c3, %c0_13, %c0_14] : memref<2x8x32x32xf32, #tpu.memory_space<vmem>>, vector<1x1x32x32xf32>
    %13 = vector.shape_cast %12 : vector<1x1x32x32xf32> to vector<32x32xf32>
    %14 = arith.addf %10, %13 : vector<32x32xf32>
    %15 = arith.maximumf %11, %13 : vector<32x32xf32>
    %c0_15 = arith.constant 0 : index
    %c4 = arith.constant 4 : index
    %c0_16 = arith.constant 0 : index
    %c0_17 = arith.constant 0 : index
    %16 = vector.load %arg1[%c0_15, %c4, %c0_16, %c0_17] : memref<2x8x32x32xf32, #tpu.memory_space<vmem>>, vector<1x1x32x32xf32>
    %17 = vector.shape_cast %16 : vector<1x1x32x32xf32> to vector<32x32xf32>
    %18 = arith.addf %14, %17 : vector<32x32xf32>
    %19 = arith.maximumf %15, %17 : vector<32x32xf32>
    %c0_18 = arith.constant 0 : index
    %c5 = arith.constant 5 : index
    %c0_19 = arith.constant 0 : index
    %c0_20 = arith.constant 0 : index
    %20 = vector.load %arg1[%c0_18, %c5, %c0_19, %c0_20] : memref<2x8x32x32xf32, #tpu.memory_space<vmem>>, vector<1x1x32x32xf32>
    %21 = vector.shape_cast %20 : vector<1x1x32x32xf32> to vector<32x32xf32>
    %22 = arith.addf %18, %21 : vector<32x32xf32>
    %23 = arith.maximumf %19, %21 : vector<32x32xf32>
    %c0_21 = arith.constant 0 : index
    %c6 = arith.constant 6 : index
    %c0_22 = arith.constant 0 : index
    %c0_23 = arith.constant 0 : index
    %24 = vector.load %arg1[%c0_21, %c6, %c0_22, %c0_23] : memref<2x8x32x32xf32, #tpu.memory_space<vmem>>, vector<1x1x32x32xf32>
    %25 = vector.shape_cast %24 : vector<1x1x32x32xf32> to vector<32x32xf32>
    %26 = arith.addf %22, %25 : vector<32x32xf32>
    %27 = arith.maximumf %23, %25 : vector<32x32xf32>
    %c0_24 = arith.constant 0 : index
    %c7 = arith.constant 7 : index
    %c0_25 = arith.constant 0 : index
    %c0_26 = arith.constant 0 : index
    %28 = vector.load %arg1[%c0_24, %c7, %c0_25, %c0_26] : memref<2x8x32x32xf32, #tpu.memory_space<vmem>>, vector<1x1x32x32xf32>
    %29 = vector.shape_cast %28 : vector<1x1x32x32xf32> to vector<32x32xf32>
    %30 = arith.addf %26, %29 : vector<32x32xf32>
    %31 = arith.maximumf %27, %29 : vector<32x32xf32>
    %cst_27 = arith.constant 1.250000e-01 : f32
    %32 = vector.broadcast %cst_27 : f32 to vector<32x32xf32>
    %33 = arith.mulf %30, %32 : vector<32x32xf32>
    %c0_28 = arith.constant 0 : index
    %c16 = arith.constant 16 : index
    %c9 = arith.constant 9 : index
    %34 = vector.load %arg5[%c0_28, %c16, %c9] : memref<2x57x100xf32, #tpu.memory_space<vmem>>, vector<1x32x32xf32>
    %35 = vector.shape_cast %34 : vector<1x32x32xf32> to vector<32x32xf32>
    %36 = vector.shape_cast %33 : vector<32x32xf32> to vector<1x32x32xf32>
    tpu.vector_store %arg5[%c0_28, %c16, %c9], %36 {strides = array<i32>} : memref<2x57x100xf32, #tpu.memory_space<vmem>>, vector<1x32x32xf32>,
    %c1_29 = arith.constant 1 : index
    %c16_30 = arith.constant 16 : index
    %c9_31 = arith.constant 9 : index
    %37 = vector.load %arg5[%c1_29, %c16_30, %c9_31] : memref<2x57x100xf32, #tpu.memory_space<vmem>>, vector<1x32x32xf32>
    %38 = vector.shape_cast %37 : vector<1x32x32xf32> to vector<32x32xf32>
    %39 = vector.shape_cast %31 : vector<32x32xf32> to vector<1x32x32xf32>
    tpu.vector_store %arg5[%c1_29, %c16_30, %c9_31], %39 {strides = array<i32>} : memref<2x57x100xf32, #tpu.memory_space<vmem>>, vector<1x32x32xf32>,
    %c1_32 = arith.constant 1 : index
    %c0_33 = arith.constant 0 : index
    %c0_34 = arith.constant 0 : index
    %c0_35 = arith.constant 0 : index
    %40 = vector.load %arg1[%c1_32, %c0_33, %c0_34, %c0_35] : memref<2x8x32x32xf32, #tpu.memory_space<vmem>>, vector<1x1x32x32xf32>
    %41 = vector.shape_cast %40 : vector<1x1x32x32xf32> to vector<32x32xf32>
    %c1_36 = arith.constant 1 : index
    %c1_37 = arith.constant 1 : index
    %c0_38 = arith.constant 0 : index
    %c0_39 = arith.constant 0 : index
    %42 = vector.load %arg1[%c1_36, %c1_37, %c0_38, %c0_39] : memref<2x8x32x32xf32, #tpu.memory_space<vmem>>, vector<1x1x32x32xf32>
    %43 = vector.shape_cast %42 : vector<1x1x32x32xf32> to vector<32x32xf32>
    %44 = arith.addf %41, %43 : vector<32x32xf32>
    %45 = arith.maximumf %41, %43 : vector<32x32xf32>
    %c1_40 = arith.constant 1 : index
    %c2_41 = arith.constant 2 : index
    %c0_42 = arith.constant 0 : index
    %c0_43 = arith.constant 0 : index
    %46 = vector.load %arg1[%c1_40, %c2_41, %c0_42, %c0_43] : memref<2x8x32x32xf32, #tpu.memory_space<vmem>>, vector<1x1x32x32xf32>
    %47 = vector.shape_cast %46 : vector<1x1x32x32xf32> to vector<32x32xf32>
    %48 = arith.addf %44, %47 : vector<32x32xf32>
    %49 = arith.maximumf %45, %47 : vector<32x32xf32>
    %c1_44 = arith.constant 1 : index
    %c3_45 = arith.constant 3 : index
    %c0_46 = arith.constant 0 : index
    %c0_47 = arith.constant 0 : index
    %50 = vector.load %arg1[%c1_44, %c3_45, %c0_46, %c0_47] : memref<2x8x32x32xf32, #tpu.memory_space<vmem>>, vector<1x1x32x32xf32>
    %51 = vector.shape_cast %50 : vector<1x1x32x32xf32> to vector<32x32xf32>
    %52 = arith.addf %48, %51 : vector<32x32xf32>
    %53 = arith.maximumf %49, %51 : vector<32x32xf32>
    %c1_48 = arith.constant 1 : index
    %c4_49 = arith.constant 4 : index
    %c0_50 = arith.constant 0 : index
    %c0_51 = arith.constant 0 : index
    %54 = vector.load %arg1[%c1_48, %c4_49, %c0_50, %c0_51] : memref<2x8x32x32xf32, #tpu.memory_space<vmem>>, vector<1x1x32x32xf32>
    %55 = vector.shape_cast %54 : vector<1x1x32x32xf32> to vector<32x32xf32>
    %56 = arith.addf %52, %55 : vector<32x32xf32>
    %57 = arith.maximumf %53, %55 : vector<32x32xf32>
    %c1_52 = arith.constant 1 : index
    %c5_53 = arith.constant 5 : index
    %c0_54 = arith.constant 0 : index
    %c0_55 = arith.constant 0 : index
    %58 = vector.load %arg1[%c1_52, %c5_53, %c0_54, %c0_55] : memref<2x8x32x32xf32, #tpu.memory_space<vmem>>, vector<1x1x32x32xf32>
    %59 = vector.shape_cast %58 : vector<1x1x32x32xf32> to vector<32x32xf32>
    %60 = arith.addf %56, %59 : vector<32x32xf32>
    %61 = arith.maximumf %57, %59 : vector<32x32xf32>
    %c1_56 = arith.constant 1 : index
    %c6_57 = arith.constant 6 : index
    %c0_58 = arith.constant 0 : index
    %c0_59 = arith.constant 0 : index
    %62 = vector.load %arg1[%c1_56, %c6_57, %c0_58, %c0_59] : memref<2x8x32x32xf32, #tpu.memory_space<vmem>>, vector<1x1x32x32xf32>
    %63 = vector.shape_cast %62 : vector<1x1x32x32xf32> to vector<32x32xf32>
    %64 = arith.addf %60, %63 : vector<32x32xf32>
    %65 = arith.maximumf %61, %63 : vector<32x32xf32>
    %c1_60 = arith.constant 1 : index
    %c7_61 = arith.constant 7 : index
    %c0_62 = arith.constant 0 : index
    %c0_63 = arith.constant 0 : index
    %66 = vector.load %arg1[%c1_60, %c7_61, %c0_62, %c0_63] : memref<2x8x32x32xf32, #tpu.memory_space<vmem>>, vector<1x1x32x32xf32>
    %67 = vector.shape_cast %66 : vector<1x1x32x32xf32> to vector<32x32xf32>
    %68 = arith.addf %64, %67 : vector<32x32xf32>
    %69 = arith.maximumf %65, %67 : vector<32x32xf32>
    %cst_64 = arith.constant 1.250000e-01 : f32
    %70 = vector.broadcast %cst_64 : f32 to vector<32x32xf32>
    %71 = arith.mulf %68, %70 : vector<32x32xf32>
    %c0_65 = arith.constant 0 : index
    %c16_66 = arith.constant 16 : index
    %c59 = arith.constant 59 : index
    %72 = vector.load %arg5[%c0_65, %c16_66, %c59] : memref<2x57x100xf32, #tpu.memory_space<vmem>>, vector<1x32x32xf32>
    %73 = vector.shape_cast %72 : vector<1x32x32xf32> to vector<32x32xf32>
    %74 = vector.shape_cast %71 : vector<32x32xf32> to vector<1x32x32xf32>
    tpu.vector_store %arg5[%c0_65, %c16_66, %c59], %74 {strides = array<i32>} : memref<2x57x100xf32, #tpu.memory_space<vmem>>, vector<1x32x32xf32>,
    %c1_67 = arith.constant 1 : index
    %c16_68 = arith.constant 16 : index
    %c59_69 = arith.constant 59 : index
    %75 = vector.load %arg5[%c1_67, %c16_68, %c59_69] : memref<2x57x100xf32, #tpu.memory_space<vmem>>, vector<1x32x32xf32>
    %76 = vector.shape_cast %75 : vector<1x32x32xf32> to vector<32x32xf32>
    %77 = vector.shape_cast %69 : vector<32x32xf32> to vector<1x32x32xf32>
    tpu.vector_store %arg5[%c1_67, %c16_68, %c59_69], %77 {strides = array<i32>} : memref<2x57x100xf32, #tpu.memory_space<vmem>>, vector<1x32x32xf32>,
    %c0_70 = arith.constant 0 : index
    %c0_71 = arith.constant 0 : index
    %c0_72 = arith.constant 0 : index
    %78 = vector.load %arg5[%c0_70, %c0_71, %c0_72] : memref<2x57x100xf32, #tpu.memory_space<vmem>>, vector<1x57x32xf32>
    %79 = vector.shape_cast %78 : vector<1x57x32xf32> to vector<57x32xf32>
    %c0_73 = arith.constant 0 : index
    %c0_74 = arith.constant 0 : index
    %c0_75 = arith.constant 0 : index
    %80 = vector.load %arg6[%c0_73, %c0_74, %c0_75] : memref<14x57x64xf32, #tpu.memory_space<vmem>>, vector<1x57x32xf32>
    %81 = vector.shape_cast %80 : vector<1x57x32xf32> to vector<57x32xf32>
    %82 = vector.shape_cast %79 : vector<57x32xf32> to vector<1x57x32xf32>
    tpu.vector_store %arg6[%c0_73, %c0_74, %c0_75], %82 {strides = array<i32>} : memref<14x57x64xf32, #tpu.memory_space<vmem>>, vector<1x57x32xf32>,
    %c0_76 = arith.constant 0 : index
    %c0_77 = arith.constant 0 : index
    %c50 = arith.constant 50 : index
    %83 = vector.load %arg5[%c0_76, %c0_77, %c50] : memref<2x57x100xf32, #tpu.memory_space<vmem>>, vector<1x57x32xf32>
    %84 = vector.shape_cast %83 : vector<1x57x32xf32> to vector<57x32xf32>
    %c0_78 = arith.constant 0 : index
    %c0_79 = arith.constant 0 : index
    %c32 = arith.constant 32 : index
    %85 = vector.load %arg6[%c0_78, %c0_79, %c32] : memref<14x57x64xf32, #tpu.memory_space<vmem>>, vector<1x57x32xf32>
    %86 = vector.shape_cast %85 : vector<1x57x32xf32> to vector<57x32xf32>
    %87 = vector.shape_cast %84 : vector<57x32xf32> to vector<1x57x32xf32>
    tpu.vector_store %arg6[%c0_78, %c0_79, %c32], %87 {strides = array<i32>} : memref<14x57x64xf32, #tpu.memory_space<vmem>>, vector<1x57x32xf32>,
    %c0_80 = arith.constant 0 : index
    %c0_81 = arith.constant 0 : index
    %c3_82 = arith.constant 3 : index
    %88 = vector.load %arg5[%c0_80, %c0_81, %c3_82] : memref<2x57x100xf32, #tpu.memory_space<vmem>>, vector<1x57x32xf32>
    %89 = vector.shape_cast %88 : vector<1x57x32xf32> to vector<57x32xf32>
    %c1_83 = arith.constant 1 : index
    %c0_84 = arith.constant 0 : index
    %c0_85 = arith.constant 0 : index
    %90 = vector.load %arg6[%c1_83, %c0_84, %c0_85] : memref<14x57x64xf32, #tpu.memory_space<vmem>>, vector<1x57x32xf32>
    %91 = vector.shape_cast %90 : vector<1x57x32xf32> to vector<57x32xf32>
    %92 = vector.shape_cast %89 : vector<57x32xf32> to vector<1x57x32xf32>
    tpu.vector_store %arg6[%c1_83, %c0_84, %c0_85], %92 {strides = array<i32>} : memref<14x57x64xf32, #tpu.memory_space<vmem>>, vector<1x57x32xf32>,
    %c0_86 = arith.constant 0 : index
    %c0_87 = arith.constant 0 : index
    %c53 = arith.constant 53 : index
    %93 = vector.load %arg5[%c0_86, %c0_87, %c53] : memref<2x57x100xf32, #tpu.memory_space<vmem>>, vector<1x57x32xf32>
    %94 = vector.shape_cast %93 : vector<1x57x32xf32> to vector<57x32xf32>
    %c1_88 = arith.constant 1 : index
    %c0_89 = arith.constant 0 : index
    %c32_90 = arith.constant 32 : index
    %95 = vector.load %arg6[%c1_88, %c0_89, %c32_90] : memref<14x57x64xf32, #tpu.memory_space<vmem>>, vector<1x57x32xf32>
    %96 = vector.shape_cast %95 : vector<1x57x32xf32> to vector<57x32xf32>
    %97 = vector.shape_cast %94 : vector<57x32xf32> to vector<1x57x32xf32>
    tpu.vector_store %arg6[%c1_88, %c0_89, %c32_90], %97 {strides = array<i32>} : memref<14x57x64xf32, #tpu.memory_space<vmem>>, vector<1x57x32xf32>,
    %c0_91 = arith.constant 0 : index
    %c0_92 = arith.constant 0 : index
    %c6_93 = arith.constant 6 : index
    %98 = vector.load %arg5[%c0_91, %c0_92, %c6_93] : memref<2x57x100xf32, #tpu.memory_space<vmem>>, vector<1x57x32xf32>
    %99 = vector.shape_cast %98 : vector<1x57x32xf32> to vector<57x32xf32>
    %c2_94 = arith.constant 2 : index
    %c0_95 = arith.constant 0 : index
    %c0_96 = arith.constant 0 : index
    %100 = vector.load %arg6[%c2_94, %c0_95, %c0_96] : memref<14x57x64xf32, #tpu.memory_space<vmem>>, vector<1x57x32xf32>
    %101 = vector.shape_cast %100 : vector<1x57x32xf32> to vector<57x32xf32>
    %102 = vector.shape_cast %99 : vector<57x32xf32> to vector<1x57x32xf32>
    tpu.vector_store %arg6[%c2_94, %c0_95, %c0_96], %102 {strides = array<i32>} : memref<14x57x64xf32, #tpu.memory_space<vmem>>, vector<1x57x32xf32>,
    %c0_97 = arith.constant 0 : index
    %c0_98 = arith.constant 0 : index
    %c56 = arith.constant 56 : index
    %103 = vector.load %arg5[%c0_97, %c0_98, %c56] : memref<2x57x100xf32, #tpu.memory_space<vmem>>, vector<1x57x32xf32>
    %104 = vector.shape_cast %103 : vector<1x57x32xf32> to vector<57x32xf32>
    %c2_99 = arith.constant 2 : index
    %c0_100 = arith.constant 0 : index
    %c32_101 = arith.constant 32 : index
    %105 = vector.load %arg6[%c2_99, %c0_100, %c32_101] : memref<14x57x64xf32, #tpu.memory_space<vmem>>, vector<1x57x32xf32>
    %106 = vector.shape_cast %105 : vector<1x57x32xf32> to vector<57x32xf32>
    %107 = vector.shape_cast %104 : vector<57x32xf32> to vector<1x57x32xf32>
    tpu.vector_store %arg6[%c2_99, %c0_100, %c32_101], %107 {strides = array<i32>} : memref<14x57x64xf32, #tpu.memory_space<vmem>>, vector<1x57x32xf32>,
    %c0_102 = arith.constant 0 : index
    %c0_103 = arith.constant 0 : index
    %c9_104 = arith.constant 9 : index
    %108 = vector.load %arg5[%c0_102, %c0_103, %c9_104] : memref<2x57x100xf32, #tpu.memory_space<vmem>>, vector<1x57x32xf32>
    %109 = vector.shape_cast %108 : vector<1x57x32xf32> to vector<57x32xf32>
    %c3_105 = arith.constant 3 : index
    %c0_106 = arith.constant 0 : index
    %c0_107 = arith.constant 0 : index
    %110 = vector.load %arg6[%c3_105, %c0_106, %c0_107] : memref<14x57x64xf32, #tpu.memory_space<vmem>>, vector<1x57x32xf32>
    %111 = vector.shape_cast %110 : vector<1x57x32xf32> to vector<57x32xf32>
    %112 = vector.shape_cast %109 : vector<57x32xf32> to vector<1x57x32xf32>
    tpu.vector_store %arg6[%c3_105, %c0_106, %c0_107], %112 {strides = array<i32>} : memref<14x57x64xf32, #tpu.memory_space<vmem>>, vector<1x57x32xf32>,
    %c0_108 = arith.constant 0 : index
    %c0_109 = arith.constant 0 : index
    %c59_110 = arith.constant 59 : index
    %113 = vector.load %arg5[%c0_108, %c0_109, %c59_110] : memref<2x57x100xf32, #tpu.memory_space<vmem>>, vector<1x57x32xf32>
    %114 = vector.shape_cast %113 : vector<1x57x32xf32> to vector<57x32xf32>
    %c3_111 = arith.constant 3 : index
    %c0_112 = arith.constant 0 : index
    %c32_113 = arith.constant 32 : index
    %115 = vector.load %arg6[%c3_111, %c0_112, %c32_113] : memref<14x57x64xf32, #tpu.memory_space<vmem>>, vector<1x57x32xf32>
    %116 = vector.shape_cast %115 : vector<1x57x32xf32> to vector<57x32xf32>
    %117 = vector.shape_cast %114 : vector<57x32xf32> to vector<1x57x32xf32>
    tpu.vector_store %arg6[%c3_111, %c0_112, %c32_113], %117 {strides = array<i32>} : memref<14x57x64xf32, #tpu.memory_space<vmem>>, vector<1x57x32xf32>,
    %c0_114 = arith.constant 0 : index
    %c0_115 = arith.constant 0 : index
    %c12 = arith.constant 12 : index
    %118 = vector.load %arg5[%c0_114, %c0_115, %c12] : memref<2x57x100xf32, #tpu.memory_space<vmem>>, vector<1x57x32xf32>
    %119 = vector.shape_cast %118 : vector<1x57x32xf32> to vector<57x32xf32>
    %c4_116 = arith.constant 4 : index
    %c0_117 = arith.constant 0 : index
    %c0_118 = arith.constant 0 : index
    %120 = vector.load %arg6[%c4_116, %c0_117, %c0_118] : memref<14x57x64xf32, #tpu.memory_space<vmem>>, vector<1x57x32xf32>
    %121 = vector.shape_cast %120 : vector<1x57x32xf32> to vector<57x32xf32>
    %122 = vector.shape_cast %119 : vector<57x32xf32> to vector<1x57x32xf32>
    tpu.vector_store %arg6[%c4_116, %c0_117, %c0_118], %122 {strides = array<i32>} : memref<14x57x64xf32, #tpu.memory_space<vmem>>, vector<1x57x32xf32>,
    %c0_119 = arith.constant 0 : index
    %c0_120 = arith.constant 0 : index
    %c62 = arith.constant 62 : index
    %123 = vector.load %arg5[%c0_119, %c0_120, %c62] : memref<2x57x100xf32, #tpu.memory_space<vmem>>, vector<1x57x32xf32>
    %124 = vector.shape_cast %123 : vector<1x57x32xf32> to vector<57x32xf32>
    %c4_121 = arith.constant 4 : index
    %c0_122 = arith.constant 0 : index
    %c32_123 = arith.constant 32 : index
    %125 = vector.load %arg6[%c4_121, %c0_122, %c32_123] : memref<14x57x64xf32, #tpu.memory_space<vmem>>, vector<1x57x32xf32>
    %126 = vector.shape_cast %125 : vector<1x57x32xf32> to vector<57x32xf32>
    %127 = vector.shape_cast %124 : vector<57x32xf32> to vector<1x57x32xf32>
    tpu.vector_store %arg6[%c4_121, %c0_122, %c32_123], %127 {strides = array<i32>} : memref<14x57x64xf32, #tpu.memory_space<vmem>>, vector<1x57x32xf32>,
    %c0_124 = arith.constant 0 : index
    %c0_125 = arith.constant 0 : index
    %c15 = arith.constant 15 : index
    %128 = vector.load %arg5[%c0_124, %c0_125, %c15] : memref<2x57x100xf32, #tpu.memory_space<vmem>>, vector<1x57x32xf32>
    %129 = vector.shape_cast %128 : vector<1x57x32xf32> to vector<57x32xf32>
    %c5_126 = arith.constant 5 : index
    %c0_127 = arith.constant 0 : index
    %c0_128 = arith.constant 0 : index
    %130 = vector.load %arg6[%c5_126, %c0_127, %c0_128] : memref<14x57x64xf32, #tpu.memory_space<vmem>>, vector<1x57x32xf32>
    %131 = vector.shape_cast %130 : vector<1x57x32xf32> to vector<57x32xf32>
    %132 = vector.shape_cast %129 : vector<57x32xf32> to vector<1x57x32xf32>
    tpu.vector_store %arg6[%c5_126, %c0_127, %c0_128], %132 {strides = array<i32>} : memref<14x57x64xf32, #tpu.memory_space<vmem>>, vector<1x57x32xf32>,
    %c0_129 = arith.constant 0 : index
    %c0_130 = arith.constant 0 : index
    %c65 = arith.constant 65 : index
    %133 = vector.load %arg5[%c0_129, %c0_130, %c65] : memref<2x57x100xf32, #tpu.memory_space<vmem>>, vector<1x57x32xf32>
    %134 = vector.shape_cast %133 : vector<1x57x32xf32> to vector<57x32xf32>
    %c5_131 = arith.constant 5 : index
    %c0_132 = arith.constant 0 : index
    %c32_133 = arith.constant 32 : index
    %135 = vector.load %arg6[%c5_131, %c0_132, %c32_133] : memref<14x57x64xf32, #tpu.memory_space<vmem>>, vector<1x57x32xf32>
    %136 = vector.shape_cast %135 : vector<1x57x32xf32> to vector<57x32xf32>
    %137 = vector.shape_cast %134 : vector<57x32xf32> to vector<1x57x32xf32>
    tpu.vector_store %arg6[%c5_131, %c0_132, %c32_133], %137 {strides = array<i32>} : memref<14x57x64xf32, #tpu.memory_space<vmem>>, vector<1x57x32xf32>,
    %c0_134 = arith.constant 0 : index
    %c0_135 = arith.constant 0 : index
    %c18 = arith.constant 18 : index
    %138 = vector.load %arg5[%c0_134, %c0_135, %c18] : memref<2x57x100xf32, #tpu.memory_space<vmem>>, vector<1x57x32xf32>
    %139 = vector.shape_cast %138 : vector<1x57x32xf32> to vector<57x32xf32>
    %c6_136 = arith.constant 6 : index
    %c0_137 = arith.constant 0 : index
    %c0_138 = arith.constant 0 : index
    %140 = vector.load %arg6[%c6_136, %c0_137, %c0_138] : memref<14x57x64xf32, #tpu.memory_space<vmem>>, vector<1x57x32xf32>
    %141 = vector.shape_cast %140 : vector<1x57x32xf32> to vector<57x32xf32>
    %142 = vector.shape_cast %139 : vector<57x32xf32> to vector<1x57x32xf32>
    tpu.vector_store %arg6[%c6_136, %c0_137, %c0_138], %142 {strides = array<i32>} : memref<14x57x64xf32, #tpu.memory_space<vmem>>, vector<1x57x32xf32>,
    %c0_139 = arith.constant 0 : index
    %c0_140 = arith.constant 0 : index
    %c68 = arith.constant 68 : index
    %143 = vector.load %arg5[%c0_139, %c0_140, %c68] : memref<2x57x100xf32, #tpu.memory_space<vmem>>, vector<1x57x32xf32>
    %144 = vector.shape_cast %143 : vector<1x57x32xf32> to vector<57x32xf32>
    %c6_141 = arith.constant 6 : index
    %c0_142 = arith.constant 0 : index
    %c32_143 = arith.constant 32 : index
    %145 = vector.load %arg6[%c6_141, %c0_142, %c32_143] : memref<14x57x64xf32, #tpu.memory_space<vmem>>, vector<1x57x32xf32>
    %146 = vector.shape_cast %145 : vector<1x57x32xf32> to vector<57x32xf32>
    %147 = vector.shape_cast %144 : vector<57x32xf32> to vector<1x57x32xf32>
    tpu.vector_store %arg6[%c6_141, %c0_142, %c32_143], %147 {strides = array<i32>} : memref<14x57x64xf32, #tpu.memory_space<vmem>>, vector<1x57x32xf32>,
    %c1_144 = arith.constant 1 : index
    %c0_145 = arith.constant 0 : index
    %c0_146 = arith.constant 0 : index
    %148 = vector.load %arg5[%c1_144, %c0_145, %c0_146] : memref<2x57x100xf32, #tpu.memory_space<vmem>>, vector<1x57x32xf32>
    %149 = vector.shape_cast %148 : vector<1x57x32xf32> to vector<57x32xf32>
    %c7_147 = arith.constant 7 : index
    %c0_148 = arith.constant 0 : index
    %c0_149 = arith.constant 0 : index
    %150 = vector.load %arg6[%c7_147, %c0_148, %c0_149] : memref<14x57x64xf32, #tpu.memory_space<vmem>>, vector<1x57x32xf32>
    %151 = vector.shape_cast %150 : vector<1x57x32xf32> to vector<57x32xf32>
    %152 = vector.shape_cast %149 : vector<57x32xf32> to vector<1x57x32xf32>
    tpu.vector_store %arg6[%c7_147, %c0_148, %c0_149], %152 {strides = array<i32>} : memref<14x57x64xf32, #tpu.memory_space<vmem>>, vector<1x57x32xf32>,
    %c1_150 = arith.constant 1 : index
    %c0_151 = arith.constant 0 : index
    %c50_152 = arith.constant 50 : index
    %153 = vector.load %arg5[%c1_150, %c0_151, %c50_152] : memref<2x57x100xf32, #tpu.memory_space<vmem>>, vector<1x57x32xf32>
    %154 = vector.shape_cast %153 : vector<1x57x32xf32> to vector<57x32xf32>
    %c7_153 = arith.constant 7 : index
    %c0_154 = arith.constant 0 : index
    %c32_155 = arith.constant 32 : index
    %155 = vector.load %arg6[%c7_153, %c0_154, %c32_155] : memref<14x57x64xf32, #tpu.memory_space<vmem>>, vector<1x57x32xf32>
    %156 = vector.shape_cast %155 : vector<1x57x32xf32> to vector<57x32xf32>
    %157 = vector.shape_cast %154 : vector<57x32xf32> to vector<1x57x32xf32>
    tpu.vector_store %arg6[%c7_153, %c0_154, %c32_155], %157 {strides = array<i32>} : memref<14x57x64xf32, #tpu.memory_space<vmem>>, vector<1x57x32xf32>,
    %c1_156 = arith.constant 1 : index
    %c0_157 = arith.constant 0 : index
    %c3_158 = arith.constant 3 : index
    %158 = vector.load %arg5[%c1_156, %c0_157, %c3_158] : memref<2x57x100xf32, #tpu.memory_space<vmem>>, vector<1x57x32xf32>
    %159 = vector.shape_cast %158 : vector<1x57x32xf32> to vector<57x32xf32>
    %c8 = arith.constant 8 : index
    %c0_159 = arith.constant 0 : index
    %c0_160 = arith.constant 0 : index
    %160 = vector.load %arg6[%c8, %c0_159, %c0_160] : memref<14x57x64xf32, #tpu.memory_space<vmem>>, vector<1x57x32xf32>
    %161 = vector.shape_cast %160 : vector<1x57x32xf32> to vector<57x32xf32>
    %162 = vector.shape_cast %159 : vector<57x32xf32> to vector<1x57x32xf32>
    tpu.vector_store %arg6[%c8, %c0_159, %c0_160], %162 {strides = array<i32>} : memref<14x57x64xf32, #tpu.memory_space<vmem>>, vector<1x57x32xf32>,
    %c1_161 = arith.constant 1 : index
    %c0_162 = arith.constant 0 : index
    %c53_163 = arith.constant 53 : index
    %163 = vector.load %arg5[%c1_161, %c0_162, %c53_163] : memref<2x57x100xf32, #tpu.memory_space<vmem>>, vector<1x57x32xf32>
    %164 = vector.shape_cast %163 : vector<1x57x32xf32> to vector<57x32xf32>
    %c8_164 = arith.constant 8 : index
    %c0_165 = arith.constant 0 : index
    %c32_166 = arith.constant 32 : index
    %165 = vector.load %arg6[%c8_164, %c0_165, %c32_166] : memref<14x57x64xf32, #tpu.memory_space<vmem>>, vector<1x57x32xf32>
    %166 = vector.shape_cast %165 : vector<1x57x32xf32> to vector<57x32xf32>
    %167 = vector.shape_cast %164 : vector<57x32xf32> to vector<1x57x32xf32>
    tpu.vector_store %arg6[%c8_164, %c0_165, %c32_166], %167 {strides = array<i32>} : memref<14x57x64xf32, #tpu.memory_space<vmem>>, vector<1x57x32xf32>,
    %c1_167 = arith.constant 1 : index
    %c0_168 = arith.constant 0 : index
    %c6_169 = arith.constant 6 : index
    %168 = vector.load %arg5[%c1_167, %c0_168, %c6_169] : memref<2x57x100xf32, #tpu.memory_space<vmem>>, vector<1x57x32xf32>
    %169 = vector.shape_cast %168 : vector<1x57x32xf32> to vector<57x32xf32>
    %c9_170 = arith.constant 9 : index
    %c0_171 = arith.constant 0 : index
    %c0_172 = arith.constant 0 : index
    %170 = vector.load %arg6[%c9_170, %c0_171, %c0_172] : memref<14x57x64xf32, #tpu.memory_space<vmem>>, vector<1x57x32xf32>
    %171 = vector.shape_cast %170 : vector<1x57x32xf32> to vector<57x32xf32>
    %172 = vector.shape_cast %169 : vector<57x32xf32> to vector<1x57x32xf32>
    tpu.vector_store %arg6[%c9_170, %c0_171, %c0_172], %172 {strides = array<i32>} : memref<14x57x64xf32, #tpu.memory_space<vmem>>, vector<1x57x32xf32>,
    %c1_173 = arith.constant 1 : index
    %c0_174 = arith.constant 0 : index
    %c56_175 = arith.constant 56 : index
    %173 = vector.load %arg5[%c1_173, %c0_174, %c56_175] : memref<2x57x100xf32, #tpu.memory_space<vmem>>, vector<1x57x32xf32>
    %174 = vector.shape_cast %173 : vector<1x57x32xf32> to vector<57x32xf32>
    %c9_176 = arith.constant 9 : index
    %c0_177 = arith.constant 0 : index
    %c32_178 = arith.constant 32 : index
    %175 = vector.load %arg6[%c9_176, %c0_177, %c32_178] : memref<14x57x64xf32, #tpu.memory_space<vmem>>, vector<1x57x32xf32>
    %176 = vector.shape_cast %175 : vector<1x57x32xf32> to vector<57x32xf32>
    %177 = vector.shape_cast %174 : vector<57x32xf32> to vector<1x57x32xf32>
    tpu.vector_store %arg6[%c9_176, %c0_177, %c32_178], %177 {strides = array<i32>} : memref<14x57x64xf32, #tpu.memory_space<vmem>>, vector<1x57x32xf32>,
    %c1_179 = arith.constant 1 : index
    %c0_180 = arith.constant 0 : index
    %c9_181 = arith.constant 9 : index
    %178 = vector.load %arg5[%c1_179, %c0_180, %c9_181] : memref<2x57x100xf32, #tpu.memory_space<vmem>>, vector<1x57x32xf32>
    %179 = vector.shape_cast %178 : vector<1x57x32xf32> to vector<57x32xf32>
    %c10 = arith.constant 10 : index
    %c0_182 = arith.constant 0 : index
    %c0_183 = arith.constant 0 : index
    %180 = vector.load %arg6[%c10, %c0_182, %c0_183] : memref<14x57x64xf32, #tpu.memory_space<vmem>>, vector<1x57x32xf32>
    %181 = vector.shape_cast %180 : vector<1x57x32xf32> to vector<57x32xf32>
    %182 = vector.shape_cast %179 : vector<57x32xf32> to vector<1x57x32xf32>
    tpu.vector_store %arg6[%c10, %c0_182, %c0_183], %182 {strides = array<i32>} : memref<14x57x64xf32, #tpu.memory_space<vmem>>, vector<1x57x32xf32>,
    %c1_184 = arith.constant 1 : index
    %c0_185 = arith.constant 0 : index
    %c59_186 = arith.constant 59 : index
    %183 = vector.load %arg5[%c1_184, %c0_185, %c59_186] : memref<2x57x100xf32, #tpu.memory_space<vmem>>, vector<1x57x32xf32>
    %184 = vector.shape_cast %183 : vector<1x57x32xf32> to vector<57x32xf32>
    %c10_187 = arith.constant 10 : index
    %c0_188 = arith.constant 0 : index
    %c32_189 = arith.constant 32 : index
    %185 = vector.load %arg6[%c10_187, %c0_188, %c32_189] : memref<14x57x64xf32, #tpu.memory_space<vmem>>, vector<1x57x32xf32>
    %186 = vector.shape_cast %185 : vector<1x57x32xf32> to vector<57x32xf32>
    %187 = vector.shape_cast %184 : vector<57x32xf32> to vector<1x57x32xf32>
    tpu.vector_store %arg6[%c10_187, %c0_188, %c32_189], %187 {strides = array<i32>} : memref<14x57x64xf32, #tpu.memory_space<vmem>>, vector<1x57x32xf32>,
    %c1_190 = arith.constant 1 : index
    %c0_191 = arith.constant 0 : index
    %c12_192 = arith.constant 12 : index
    %188 = vector.load %arg5[%c1_190, %c0_191, %c12_192] : memref<2x57x100xf32, #tpu.memory_space<vmem>>, vector<1x57x32xf32>
    %189 = vector.shape_cast %188 : vector<1x57x32xf32> to vector<57x32xf32>
    %c11 = arith.constant 11 : index
    %c0_193 = arith.constant 0 : index
    %c0_194 = arith.constant 0 : index
    %190 = vector.load %arg6[%c11, %c0_193, %c0_194] : memref<14x57x64xf32, #tpu.memory_space<vmem>>, vector<1x57x32xf32>
    %191 = vector.shape_cast %190 : vector<1x57x32xf32> to vector<57x32xf32>
    %192 = vector.shape_cast %189 : vector<57x32xf32> to vector<1x57x32xf32>
    tpu.vector_store %arg6[%c11, %c0_193, %c0_194], %192 {strides = array<i32>} : memref<14x57x64xf32, #tpu.memory_space<vmem>>, vector<1x57x32xf32>,
    %c1_195 = arith.constant 1 : index
    %c0_196 = arith.constant 0 : index
    %c62_197 = arith.constant 62 : index
    %193 = vector.load %arg5[%c1_195, %c0_196, %c62_197] : memref<2x57x100xf32, #tpu.memory_space<vmem>>, vector<1x57x32xf32>
    %194 = vector.shape_cast %193 : vector<1x57x32xf32> to vector<57x32xf32>
    %c11_198 = arith.constant 11 : index
    %c0_199 = arith.constant 0 : index
    %c32_200 = arith.constant 32 : index
    %195 = vector.load %arg6[%c11_198, %c0_199, %c32_200] : memref<14x57x64xf32, #tpu.memory_space<vmem>>, vector<1x57x32xf32>
    %196 = vector.shape_cast %195 : vector<1x57x32xf32> to vector<57x32xf32>
    %197 = vector.shape_cast %194 : vector<57x32xf32> to vector<1x57x32xf32>
    tpu.vector_store %arg6[%c11_198, %c0_199, %c32_200], %197 {strides = array<i32>} : memref<14x57x64xf32, #tpu.memory_space<vmem>>, vector<1x57x32xf32>,
    %c1_201 = arith.constant 1 : index
    %c0_202 = arith.constant 0 : index
    %c15_203 = arith.constant 15 : index
    %198 = vector.load %arg5[%c1_201, %c0_202, %c15_203] : memref<2x57x100xf32, #tpu.memory_space<vmem>>, vector<1x57x32xf32>
    %199 = vector.shape_cast %198 : vector<1x57x32xf32> to vector<57x32xf32>
    %c12_204 = arith.constant 12 : index
    %c0_205 = arith.constant 0 : index
    %c0_206 = arith.constant 0 : index
    %200 = vector.load %arg6[%c12_204, %c0_205, %c0_206] : memref<14x57x64xf32, #tpu.memory_space<vmem>>, vector<1x57x32xf32>
    %201 = vector.shape_cast %200 : vector<1x57x32xf32> to vector<57x32xf32>
    %202 = vector.shape_cast %199 : vector<57x32xf32> to vector<1x57x32xf32>
    tpu.vector_store %arg6[%c12_204, %c0_205, %c0_206], %202 {strides = array<i32>} : memref<14x57x64xf32, #tpu.memory_space<vmem>>, vector<1x57x32xf32>,
    %c1_207 = arith.constant 1 : index
    %c0_208 = arith.constant 0 : index
    %c65_209 = arith.constant 65 : index
    %203 = vector.load %arg5[%c1_207, %c0_208, %c65_209] : memref<2x57x100xf32, #tpu.memory_space<vmem>>, vector<1x57x32xf32>
    %204 = vector.shape_cast %203 : vector<1x57x32xf32> to vector<57x32xf32>
    %c12_210 = arith.constant 12 : index
    %c0_211 = arith.constant 0 : index
    %c32_212 = arith.constant 32 : index
    %205 = vector.load %arg6[%c12_210, %c0_211, %c32_212] : memref<14x57x64xf32, #tpu.memory_space<vmem>>, vector<1x57x32xf32>
    %206 = vector.shape_cast %205 : vector<1x57x32xf32> to vector<57x32xf32>
    %207 = vector.shape_cast %204 : vector<57x32xf32> to vector<1x57x32xf32>
    tpu.vector_store %arg6[%c12_210, %c0_211, %c32_212], %207 {strides = array<i32>} : memref<14x57x64xf32, #tpu.memory_space<vmem>>, vector<1x57x32xf32>,
    %c1_213 = arith.constant 1 : index
    %c0_214 = arith.constant 0 : index
    %c18_215 = arith.constant 18 : index
    %208 = vector.load %arg5[%c1_213, %c0_214, %c18_215] : memref<2x57x100xf32, #tpu.memory_space<vmem>>, vector<1x57x32xf32>
    %209 = vector.shape_cast %208 : vector<1x57x32xf32> to vector<57x32xf32>
    %c13 = arith.constant 13 : index
    %c0_216 = arith.constant 0 : index
    %c0_217 = arith.constant 0 : index
    %210 = vector.load %arg6[%c13, %c0_216, %c0_217] : memref<14x57x64xf32, #tpu.memory_space<vmem>>, vector<1x57x32xf32>
    %211 = vector.shape_cast %210 : vector<1x57x32xf32> to vector<57x32xf32>
    %212 = vector.shape_cast %209 : vector<57x32xf32> to vector<1x57x32xf32>
    tpu.vector_store %arg6[%c13, %c0_216, %c0_217], %212 {strides = array<i32>} : memref<14x57x64xf32, #tpu.memory_space<vmem>>, vector<1x57x32xf32>,
    %c1_218 = arith.constant 1 : index
    %c0_219 = arith.constant 0 : index
    %c68_220 = arith.constant 68 : index
    %213 = vector.load %arg5[%c1_218, %c0_219, %c68_220] : memref<2x57x100xf32, #tpu.memory_space<vmem>>, vector<1x57x32xf32>
    %214 = vector.shape_cast %213 : vector<1x57x32xf32> to vector<57x32xf32>
    %c13_221 = arith.constant 13 : index
    %c0_222 = arith.constant 0 : index
    %c32_223 = arith.constant 32 : index
    %215 = vector.load %arg6[%c13_221, %c0_222, %c32_223] : memref<14x57x64xf32, #tpu.memory_space<vmem>>, vector<1x57x32xf32>
    %216 = vector.shape_cast %215 : vector<1x57x32xf32> to vector<57x32xf32>
    %217 = vector.shape_cast %214 : vector<57x32xf32> to vector<1x57x32xf32>
    tpu.vector_store %arg6[%c13_221, %c0_222, %c32_223], %217 {strides = array<i32>} : memref<14x57x64xf32, #tpu.memory_space<vmem>>, vector<1x57x32xf32>,
    %c0_224 = arith.constant 0 : index
    %218 = memref.load %arg2[%c0_224] : memref<98xf32, #tpu.memory_space<smem>>
    %c0_225 = arith.constant 0 : index
    %c7_226 = arith.constant 7 : index
    %c0_227 = arith.constant 0 : index
    %219 = vector.load %arg6[%c0_225, %c7_226, %c0_227] : memref<14x57x64xf32, #tpu.memory_space<vmem>>, vector<1x32x64xf32>
    %220 = vector.shape_cast %219 : vector<1x32x64xf32> to vector<32x64xf32>
    %221 = vector.broadcast %218 : f32 to vector<32x64xf32>
    %222 = arith.mulf %221, %220 : vector<32x64xf32>
    %c7_228 = arith.constant 7 : index
    %223 = memref.load %arg2[%c7_228] : memref<98xf32, #tpu.memory_space<smem>>
    %c0_229 = arith.constant 0 : index
    %c10_230 = arith.constant 10 : index
    %c0_231 = arith.constant 0 : index
    %224 = vector.load %arg6[%c0_229, %c10_230, %c0_231] : memref<14x57x64xf32, #tpu.memory_space<vmem>>, vector<1x32x64xf32>
    %225 = vector.shape_cast %224 : vector<1x32x64xf32> to vector<32x64xf32>
    %226 = vector.broadcast %223 : f32 to vector<32x64xf32>
    %227 = arith.mulf %226, %225 : vector<32x64xf32>
    %c14 = arith.constant 14 : index
    %228 = memref.load %arg2[%c14] : memref<98xf32, #tpu.memory_space<smem>>
    %c0_232 = arith.constant 0 : index
    %c13_233 = arith.constant 13 : index
    %c0_234 = arith.constant 0 : index
    %229 = vector.load %arg6[%c0_232, %c13_233, %c0_234] : memref<14x57x64xf32, #tpu.memory_space<vmem>>, vector<1x32x64xf32>
    %230 = vector.shape_cast %229 : vector<1x32x64xf32> to vector<32x64xf32>
    %231 = vector.broadcast %228 : f32 to vector<32x64xf32>
    %232 = arith.mulf %231, %230 : vector<32x64xf32>
    %c21 = arith.constant 21 : index
    %233 = memref.load %arg2[%c21] : memref<98xf32, #tpu.memory_space<smem>>
    %c0_235 = arith.constant 0 : index
    %c16_236 = arith.constant 16 : index
    %c0_237 = arith.constant 0 : index
    %234 = vector.load %arg6[%c0_235, %c16_236, %c0_237] : memref<14x57x64xf32, #tpu.memory_space<vmem>>, vector<1x32x64xf32>
    %235 = vector.shape_cast %234 : vector<1x32x64xf32> to vector<32x64xf32>
    %236 = vector.broadcast %233 : f32 to vector<32x64xf32>
    %237 = arith.mulf %236, %235 : vector<32x64xf32>
    %c28 = arith.constant 28 : index
    %238 = memref.load %arg2[%c28] : memref<98xf32, #tpu.memory_space<smem>>
    %c0_238 = arith.constant 0 : index
    %c19 = arith.constant 19 : index
    %c0_239 = arith.constant 0 : index
    %239 = vector.load %arg6[%c0_238, %c19, %c0_239] : memref<14x57x64xf32, #tpu.memory_space<vmem>>, vector<1x32x64xf32>
    %240 = vector.shape_cast %239 : vector<1x32x64xf32> to vector<32x64xf32>
    %241 = vector.broadcast %238 : f32 to vector<32x64xf32>
    %242 = arith.mulf %241, %240 : vector<32x64xf32>
    %243 = arith.addf %222, %242 : vector<32x64xf32>
    %c35 = arith.constant 35 : index
    %244 = memref.load %arg2[%c35] : memref<98xf32, #tpu.memory_space<smem>>
    %c0_240 = arith.constant 0 : index
    %c22 = arith.constant 22 : index
    %c0_241 = arith.constant 0 : index
    %245 = vector.load %arg6[%c0_240, %c22, %c0_241] : memref<14x57x64xf32, #tpu.memory_space<vmem>>, vector<1x32x64xf32>
    %246 = vector.shape_cast %245 : vector<1x32x64xf32> to vector<32x64xf32>
    %247 = vector.broadcast %244 : f32 to vector<32x64xf32>
    %248 = arith.mulf %247, %246 : vector<32x64xf32>
    %249 = arith.addf %227, %248 : vector<32x64xf32>
    %c42 = arith.constant 42 : index
    %250 = memref.load %arg2[%c42] : memref<98xf32, #tpu.memory_space<smem>>
    %c0_242 = arith.constant 0 : index
    %c25 = arith.constant 25 : index
    %c0_243 = arith.constant 0 : index
    %251 = vector.load %arg6[%c0_242, %c25, %c0_243] : memref<14x57x64xf32, #tpu.memory_space<vmem>>, vector<1x32x64xf32>
    %252 = vector.shape_cast %251 : vector<1x32x64xf32> to vector<32x64xf32>
    %253 = vector.broadcast %250 : f32 to vector<32x64xf32>
    %254 = arith.mulf %253, %252 : vector<32x64xf32>
    %255 = arith.addf %232, %254 : vector<32x64xf32>
    %c1_244 = arith.constant 1 : index
    %256 = memref.load %arg2[%c1_244] : memref<98xf32, #tpu.memory_space<smem>>
    %c1_245 = arith.constant 1 : index
    %c7_246 = arith.constant 7 : index
    %c0_247 = arith.constant 0 : index
    %257 = vector.load %arg6[%c1_245, %c7_246, %c0_247] : memref<14x57x64xf32, #tpu.memory_space<vmem>>, vector<1x32x64xf32>
    %258 = vector.shape_cast %257 : vector<1x32x64xf32> to vector<32x64xf32>
    %259 = vector.broadcast %256 : f32 to vector<32x64xf32>
    %260 = arith.mulf %259, %258 : vector<32x64xf32>
    %261 = arith.addf %237, %260 : vector<32x64xf32>
    %c8_248 = arith.constant 8 : index
    %262 = memref.load %arg2[%c8_248] : memref<98xf32, #tpu.memory_space<smem>>
    %c1_249 = arith.constant 1 : index
    %c10_250 = arith.constant 10 : index
    %c0_251 = arith.constant 0 : index
    %263 = vector.load %arg6[%c1_249, %c10_250, %c0_251] : memref<14x57x64xf32, #tpu.memory_space<vmem>>, vector<1x32x64xf32>
    %264 = vector.shape_cast %263 : vector<1x32x64xf32> to vector<32x64xf32>
    %265 = vector.broadcast %262 : f32 to vector<32x64xf32>
    %266 = arith.mulf %265, %264 : vector<32x64xf32>
    %267 = arith.addf %243, %266 : vector<32x64xf32>
    %c15_252 = arith.constant 15 : index
    %268 = memref.load %arg2[%c15_252] : memref<98xf32, #tpu.memory_space<smem>>
    %c1_253 = arith.constant 1 : index
    %c13_254 = arith.constant 13 : index
    %c0_255 = arith.constant 0 : index
    %269 = vector.load %arg6[%c1_253, %c13_254, %c0_255] : memref<14x57x64xf32, #tpu.memory_space<vmem>>, vector<1x32x64xf32>
    %270 = vector.shape_cast %269 : vector<1x32x64xf32> to vector<32x64xf32>
    %271 = vector.broadcast %268 : f32 to vector<32x64xf32>
    %272 = arith.mulf %271, %270 : vector<32x64xf32>
    %273 = arith.addf %249, %272 : vector<32x64xf32>
    %c22_256 = arith.constant 22 : index
    %274 = memref.load %arg2[%c22_256] : memref<98xf32, #tpu.memory_space<smem>>
    %c1_257 = arith.constant 1 : index
    %c16_258 = arith.constant 16 : index
    %c0_259 = arith.constant 0 : index
    %275 = vector.load %arg6[%c1_257, %c16_258, %c0_259] : memref<14x57x64xf32, #tpu.memory_space<vmem>>, vector<1x32x64xf32>
    %276 = vector.shape_cast %275 : vector<1x32x64xf32> to vector<32x64xf32>
    %277 = vector.broadcast %274 : f32 to vector<32x64xf32>
    %278 = arith.mulf %277, %276 : vector<32x64xf32>
    %279 = arith.addf %255, %278 : vector<32x64xf32>
    %c29 = arith.constant 29 : index
    %280 = memref.load %arg2[%c29] : memref<98xf32, #tpu.memory_space<smem>>
    %c1_260 = arith.constant 1 : index
    %c19_261 = arith.constant 19 : index
    %c0_262 = arith.constant 0 : index
    %281 = vector.load %arg6[%c1_260, %c19_261, %c0_262] : memref<14x57x64xf32, #tpu.memory_space<vmem>>, vector<1x32x64xf32>
    %282 = vector.shape_cast %281 : vector<1x32x64xf32> to vector<32x64xf32>
    %283 = vector.broadcast %280 : f32 to vector<32x64xf32>
    %284 = arith.mulf %283, %282 : vector<32x64xf32>
    %285 = arith.addf %261, %284 : vector<32x64xf32>
    %c36 = arith.constant 36 : index
    %286 = memref.load %arg2[%c36] : memref<98xf32, #tpu.memory_space<smem>>
    %c1_263 = arith.constant 1 : index
    %c22_264 = arith.constant 22 : index
    %c0_265 = arith.constant 0 : index
    %287 = vector.load %arg6[%c1_263, %c22_264, %c0_265] : memref<14x57x64xf32, #tpu.memory_space<vmem>>, vector<1x32x64xf32>
    %288 = vector.shape_cast %287 : vector<1x32x64xf32> to vector<32x64xf32>
    %289 = vector.broadcast %286 : f32 to vector<32x64xf32>
    %290 = arith.mulf %289, %288 : vector<32x64xf32>
    %291 = arith.addf %267, %290 : vector<32x64xf32>
    %c43 = arith.constant 43 : index
    %292 = memref.load %arg2[%c43] : memref<98xf32, #tpu.memory_space<smem>>
    %c1_266 = arith.constant 1 : index
    %c25_267 = arith.constant 25 : index
    %c0_268 = arith.constant 0 : index
    %293 = vector.load %arg6[%c1_266, %c25_267, %c0_268] : memref<14x57x64xf32, #tpu.memory_space<vmem>>, vector<1x32x64xf32>
    %294 = vector.shape_cast %293 : vector<1x32x64xf32> to vector<32x64xf32>
    %295 = vector.broadcast %292 : f32 to vector<32x64xf32>
    %296 = arith.mulf %295, %294 : vector<32x64xf32>
    %297 = arith.addf %273, %296 : vector<32x64xf32>
    %c2_269 = arith.constant 2 : index
    %298 = memref.load %arg2[%c2_269] : memref<98xf32, #tpu.memory_space<smem>>
    %c2_270 = arith.constant 2 : index
    %c7_271 = arith.constant 7 : index
    %c0_272 = arith.constant 0 : index
    %299 = vector.load %arg6[%c2_270, %c7_271, %c0_272] : memref<14x57x64xf32, #tpu.memory_space<vmem>>, vector<1x32x64xf32>
    %300 = vector.shape_cast %299 : vector<1x32x64xf32> to vector<32x64xf32>
    %301 = vector.broadcast %298 : f32 to vector<32x64xf32>
    %302 = arith.mulf %301, %300 : vector<32x64xf32>
    %303 = arith.addf %279, %302 : vector<32x64xf32>
    %c9_273 = arith.constant 9 : index
    %304 = memref.load %arg2[%c9_273] : memref<98xf32, #tpu.memory_space<smem>>
    %c2_274 = arith.constant 2 : index
    %c10_275 = arith.constant 10 : index
    %c0_276 = arith.constant 0 : index
    %305 = vector.load %arg6[%c2_274, %c10_275, %c0_276] : memref<14x57x64xf32, #tpu.memory_space<vmem>>, vector<1x32x64xf32>
    %306 = vector.shape_cast %305 : vector<1x32x64xf32> to vector<32x64xf32>
    %307 = vector.broadcast %304 : f32 to vector<32x64xf32>
    %308 = arith.mulf %307, %306 : vector<32x64xf32>
    %309 = arith.addf %285, %308 : vector<32x64xf32>
    %c16_277 = arith.constant 16 : index
    %310 = memref.load %arg2[%c16_277] : memref<98xf32, #tpu.memory_space<smem>>
    %c2_278 = arith.constant 2 : index
    %c13_279 = arith.constant 13 : index
    %c0_280 = arith.constant 0 : index
    %311 = vector.load %arg6[%c2_278, %c13_279, %c0_280] : memref<14x57x64xf32, #tpu.memory_space<vmem>>, vector<1x32x64xf32>
    %312 = vector.shape_cast %311 : vector<1x32x64xf32> to vector<32x64xf32>
    %313 = vector.broadcast %310 : f32 to vector<32x64xf32>
    %314 = arith.mulf %313, %312 : vector<32x64xf32>
    %315 = arith.addf %291, %314 : vector<32x64xf32>
    %c23 = arith.constant 23 : index
    %316 = memref.load %arg2[%c23] : memref<98xf32, #tpu.memory_space<smem>>
    %c2_281 = arith.constant 2 : index
    %c16_282 = arith.constant 16 : index
    %c0_283 = arith.constant 0 : index
    %317 = vector.load %arg6[%c2_281, %c16_282, %c0_283] : memref<14x57x64xf32, #tpu.memory_space<vmem>>, vector<1x32x64xf32>
    %318 = vector.shape_cast %317 : vector<1x32x64xf32> to vector<32x64xf32>
    %319 = vector.broadcast %316 : f32 to vector<32x64xf32>
    %320 = arith.mulf %319, %318 : vector<32x64xf32>
    %321 = arith.addf %297, %320 : vector<32x64xf32>
    %c30 = arith.constant 30 : index
    %322 = memref.load %arg2[%c30] : memref<98xf32, #tpu.memory_space<smem>>
    %c2_284 = arith.constant 2 : index
    %c19_285 = arith.constant 19 : index
    %c0_286 = arith.constant 0 : index
    %323 = vector.load %arg6[%c2_284, %c19_285, %c0_286] : memref<14x57x64xf32, #tpu.memory_space<vmem>>, vector<1x32x64xf32>
    %324 = vector.shape_cast %323 : vector<1x32x64xf32> to vector<32x64xf32>
    %325 = vector.broadcast %322 : f32 to vector<32x64xf32>
    %326 = arith.mulf %325, %324 : vector<32x64xf32>
    %327 = arith.addf %303, %326 : vector<32x64xf32>
    %c37 = arith.constant 37 : index
    %328 = memref.load %arg2[%c37] : memref<98xf32, #tpu.memory_space<smem>>
    %c2_287 = arith.constant 2 : index
    %c22_288 = arith.constant 22 : index
    %c0_289 = arith.constant 0 : index
    %329 = vector.load %arg6[%c2_287, %c22_288, %c0_289] : memref<14x57x64xf32, #tpu.memory_space<vmem>>, vector<1x32x64xf32>
    %330 = vector.shape_cast %329 : vector<1x32x64xf32> to vector<32x64xf32>
    %331 = vector.broadcast %328 : f32 to vector<32x64xf32>
    %332 = arith.mulf %331, %330 : vector<32x64xf32>
    %333 = arith.addf %309, %332 : vector<32x64xf32>
    %c44 = arith.constant 44 : index
    %334 = memref.load %arg2[%c44] : memref<98xf32, #tpu.memory_space<smem>>
    %c2_290 = arith.constant 2 : index
    %c25_291 = arith.constant 25 : index
    %c0_292 = arith.constant 0 : index
    %335 = vector.load %arg6[%c2_290, %c25_291, %c0_292] : memref<14x57x64xf32, #tpu.memory_space<vmem>>, vector<1x32x64xf32>
    %336 = vector.shape_cast %335 : vector<1x32x64xf32> to vector<32x64xf32>
    %337 = vector.broadcast %334 : f32 to vector<32x64xf32>
    %338 = arith.mulf %337, %336 : vector<32x64xf32>
    %339 = arith.addf %315, %338 : vector<32x64xf32>
    %c3_293 = arith.constant 3 : index
    %340 = memref.load %arg2[%c3_293] : memref<98xf32, #tpu.memory_space<smem>>
    %c3_294 = arith.constant 3 : index
    %c7_295 = arith.constant 7 : index
    %c0_296 = arith.constant 0 : index
    %341 = vector.load %arg6[%c3_294, %c7_295, %c0_296] : memref<14x57x64xf32, #tpu.memory_space<vmem>>, vector<1x32x64xf32>
    %342 = vector.shape_cast %341 : vector<1x32x64xf32> to vector<32x64xf32>
    %343 = vector.broadcast %340 : f32 to vector<32x64xf32>
    %344 = arith.mulf %343, %342 : vector<32x64xf32>
    %345 = arith.addf %321, %344 : vector<32x64xf32>
    %c10_297 = arith.constant 10 : index
    %346 = memref.load %arg2[%c10_297] : memref<98xf32, #tpu.memory_space<smem>>
    %c3_298 = arith.constant 3 : index
    %c10_299 = arith.constant 10 : index
    %c0_300 = arith.constant 0 : index
    %347 = vector.load %arg6[%c3_298, %c10_299, %c0_300] : memref<14x57x64xf32, #tpu.memory_space<vmem>>, vector<1x32x64xf32>
    %348 = vector.shape_cast %347 : vector<1x32x64xf32> to vector<32x64xf32>
    %349 = vector.broadcast %346 : f32 to vector<32x64xf32>
    %350 = arith.mulf %349, %348 : vector<32x64xf32>
    %351 = arith.addf %327, %350 : vector<32x64xf32>
    %c17 = arith.constant 17 : index
    %352 = memref.load %arg2[%c17] : memref<98xf32, #tpu.memory_space<smem>>
    %c3_301 = arith.constant 3 : index
    %c13_302 = arith.constant 13 : index
    %c0_303 = arith.constant 0 : index
    %353 = vector.load %arg6[%c3_301, %c13_302, %c0_303] : memref<14x57x64xf32, #tpu.memory_space<vmem>>, vector<1x32x64xf32>
    %354 = vector.shape_cast %353 : vector<1x32x64xf32> to vector<32x64xf32>
    %355 = vector.broadcast %352 : f32 to vector<32x64xf32>
    %356 = arith.mulf %355, %354 : vector<32x64xf32>
    %357 = arith.addf %333, %356 : vector<32x64xf32>
    %c24 = arith.constant 24 : index
    %358 = memref.load %arg2[%c24] : memref<98xf32, #tpu.memory_space<smem>>
    %c3_304 = arith.constant 3 : index
    %c16_305 = arith.constant 16 : index
    %c0_306 = arith.constant 0 : index
    %359 = vector.load %arg6[%c3_304, %c16_305, %c0_306] : memref<14x57x64xf32, #tpu.memory_space<vmem>>, vector<1x32x64xf32>
    %360 = vector.shape_cast %359 : vector<1x32x64xf32> to vector<32x64xf32>
    %361 = vector.broadcast %358 : f32 to vector<32x64xf32>
    %362 = arith.mulf %361, %360 : vector<32x64xf32>
    %363 = arith.addf %339, %362 : vector<32x64xf32>
    %c31 = arith.constant 31 : index
    %364 = memref.load %arg2[%c31] : memref<98xf32, #tpu.memory_space<smem>>
    %c3_307 = arith.constant 3 : index
    %c19_308 = arith.constant 19 : index
    %c0_309 = arith.constant 0 : index
    %365 = vector.load %arg6[%c3_307, %c19_308, %c0_309] : memref<14x57x64xf32, #tpu.memory_space<vmem>>, vector<1x32x64xf32>
    %366 = vector.shape_cast %365 : vector<1x32x64xf32> to vector<32x64xf32>
    %367 = vector.broadcast %364 : f32 to vector<32x64xf32>
    %368 = arith.mulf %367, %366 : vector<32x64xf32>
    %369 = arith.addf %345, %368 : vector<32x64xf32>
    %c38 = arith.constant 38 : index
    %370 = memref.load %arg2[%c38] : memref<98xf32, #tpu.memory_space<smem>>
    %c3_310 = arith.constant 3 : index
    %c22_311 = arith.constant 22 : index
    %c0_312 = arith.constant 0 : index
    %371 = vector.load %arg6[%c3_310, %c22_311, %c0_312] : memref<14x57x64xf32, #tpu.memory_space<vmem>>, vector<1x32x64xf32>
    %372 = vector.shape_cast %371 : vector<1x32x64xf32> to vector<32x64xf32>
    %373 = vector.broadcast %370 : f32 to vector<32x64xf32>
    %374 = arith.mulf %373, %372 : vector<32x64xf32>
    %375 = arith.addf %351, %374 : vector<32x64xf32>
    %c45 = arith.constant 45 : index
    %376 = memref.load %arg2[%c45] : memref<98xf32, #tpu.memory_space<smem>>
    %c3_313 = arith.constant 3 : index
    %c25_314 = arith.constant 25 : index
    %c0_315 = arith.constant 0 : index
    %377 = vector.load %arg6[%c3_313, %c25_314, %c0_315] : memref<14x57x64xf32, #tpu.memory_space<vmem>>, vector<1x32x64xf32>
    %378 = vector.shape_cast %377 : vector<1x32x64xf32> to vector<32x64xf32>
    %379 = vector.broadcast %376 : f32 to vector<32x64xf32>
    %380 = arith.mulf %379, %378 : vector<32x64xf32>
    %381 = arith.addf %357, %380 : vector<32x64xf32>
    %c4_316 = arith.constant 4 : index
    %382 = memref.load %arg2[%c4_316] : memref<98xf32, #tpu.memory_space<smem>>
    %c4_317 = arith.constant 4 : index
    %c7_318 = arith.constant 7 : index
    %c0_319 = arith.constant 0 : index
    %383 = vector.load %arg6[%c4_317, %c7_318, %c0_319] : memref<14x57x64xf32, #tpu.memory_space<vmem>>, vector<1x32x64xf32>
    %384 = vector.shape_cast %383 : vector<1x32x64xf32> to vector<32x64xf32>
    %385 = vector.broadcast %382 : f32 to vector<32x64xf32>
    %386 = arith.mulf %385, %384 : vector<32x64xf32>
    %387 = arith.addf %363, %386 : vector<32x64xf32>
    %c11_320 = arith.constant 11 : index
    %388 = memref.load %arg2[%c11_320] : memref<98xf32, #tpu.memory_space<smem>>
    %c4_321 = arith.constant 4 : index
    %c10_322 = arith.constant 10 : index
    %c0_323 = arith.constant 0 : index
    %389 = vector.load %arg6[%c4_321, %c10_322, %c0_323] : memref<14x57x64xf32, #tpu.memory_space<vmem>>, vector<1x32x64xf32>
    %390 = vector.shape_cast %389 : vector<1x32x64xf32> to vector<32x64xf32>
    %391 = vector.broadcast %388 : f32 to vector<32x64xf32>
    %392 = arith.mulf %391, %390 : vector<32x64xf32>
    %393 = arith.addf %369, %392 : vector<32x64xf32>
    %c18_324 = arith.constant 18 : index
    %394 = memref.load %arg2[%c18_324] : memref<98xf32, #tpu.memory_space<smem>>
    %c4_325 = arith.constant 4 : index
    %c13_326 = arith.constant 13 : index
    %c0_327 = arith.constant 0 : index
    %395 = vector.load %arg6[%c4_325, %c13_326, %c0_327] : memref<14x57x64xf32, #tpu.memory_space<vmem>>, vector<1x32x64xf32>
    %396 = vector.shape_cast %395 : vector<1x32x64xf32> to vector<32x64xf32>
    %397 = vector.broadcast %394 : f32 to vector<32x64xf32>
    %398 = arith.mulf %397, %396 : vector<32x64xf32>
    %399 = arith.addf %375, %398 : vector<32x64xf32>
    %c25_328 = arith.constant 25 : index
    %400 = memref.load %arg2[%c25_328] : memref<98xf32, #tpu.memory_space<smem>>
    %c4_329 = arith.constant 4 : index
    %c16_330 = arith.constant 16 : index
    %c0_331 = arith.constant 0 : index
    %401 = vector.load %arg6[%c4_329, %c16_330, %c0_331] : memref<14x57x64xf32, #tpu.memory_space<vmem>>, vector<1x32x64xf32>
    %402 = vector.shape_cast %401 : vector<1x32x64xf32> to vector<32x64xf32>
    %403 = vector.broadcast %400 : f32 to vector<32x64xf32>
    %404 = arith.mulf %403, %402 : vector<32x64xf32>
    %405 = arith.addf %381, %404 : vector<32x64xf32>
    %c32_332 = arith.constant 32 : index
    %406 = memref.load %arg2[%c32_332] : memref<98xf32, #tpu.memory_space<smem>>
    %c4_333 = arith.constant 4 : index
    %c19_334 = arith.constant 19 : index
    %c0_335 = arith.constant 0 : index
    %407 = vector.load %arg6[%c4_333, %c19_334, %c0_335] : memref<14x57x64xf32, #tpu.memory_space<vmem>>, vector<1x32x64xf32>
    %408 = vector.shape_cast %407 : vector<1x32x64xf32> to vector<32x64xf32>
    %409 = vector.broadcast %406 : f32 to vector<32x64xf32>
    %410 = arith.mulf %409, %408 : vector<32x64xf32>
    %411 = arith.addf %387, %410 : vector<32x64xf32>
    %c39 = arith.constant 39 : index
    %412 = memref.load %arg2[%c39] : memref<98xf32, #tpu.memory_space<smem>>
    %c4_336 = arith.constant 4 : index
    %c22_337 = arith.constant 22 : index
    %c0_338 = arith.constant 0 : index
    %413 = vector.load %arg6[%c4_336, %c22_337, %c0_338] : memref<14x57x64xf32, #tpu.memory_space<vmem>>, vector<1x32x64xf32>
    %414 = vector.shape_cast %413 : vector<1x32x64xf32> to vector<32x64xf32>
    %415 = vector.broadcast %412 : f32 to vector<32x64xf32>
    %416 = arith.mulf %415, %414 : vector<32x64xf32>
    %417 = arith.addf %393, %416 : vector<32x64xf32>
    %c46 = arith.constant 46 : index
    %418 = memref.load %arg2[%c46] : memref<98xf32, #tpu.memory_space<smem>>
    %c4_339 = arith.constant 4 : index
    %c25_340 = arith.constant 25 : index
    %c0_341 = arith.constant 0 : index
    %419 = vector.load %arg6[%c4_339, %c25_340, %c0_341] : memref<14x57x64xf32, #tpu.memory_space<vmem>>, vector<1x32x64xf32>
    %420 = vector.shape_cast %419 : vector<1x32x64xf32> to vector<32x64xf32>
    %421 = vector.broadcast %418 : f32 to vector<32x64xf32>
    %422 = arith.mulf %421, %420 : vector<32x64xf32>
    %423 = arith.addf %399, %422 : vector<32x64xf32>
    %c5_342 = arith.constant 5 : index
    %424 = memref.load %arg2[%c5_342] : memref<98xf32, #tpu.memory_space<smem>>
    %c5_343 = arith.constant 5 : index
    %c7_344 = arith.constant 7 : index
    %c0_345 = arith.constant 0 : index
    %425 = vector.load %arg6[%c5_343, %c7_344, %c0_345] : memref<14x57x64xf32, #tpu.memory_space<vmem>>, vector<1x32x64xf32>
    %426 = vector.shape_cast %425 : vector<1x32x64xf32> to vector<32x64xf32>
    %427 = vector.broadcast %424 : f32 to vector<32x64xf32>
    %428 = arith.mulf %427, %426 : vector<32x64xf32>
    %429 = arith.addf %405, %428 : vector<32x64xf32>
    %c12_346 = arith.constant 12 : index
    %430 = memref.load %arg2[%c12_346] : memref<98xf32, #tpu.memory_space<smem>>
    %c5_347 = arith.constant 5 : index
    %c10_348 = arith.constant 10 : index
    %c0_349 = arith.constant 0 : index
    %431 = vector.load %arg6[%c5_347, %c10_348, %c0_349] : memref<14x57x64xf32, #tpu.memory_space<vmem>>, vector<1x32x64xf32>
    %432 = vector.shape_cast %431 : vector<1x32x64xf32> to vector<32x64xf32>
    %433 = vector.broadcast %430 : f32 to vector<32x64xf32>
    %434 = arith.mulf %433, %432 : vector<32x64xf32>
    %435 = arith.addf %411, %434 : vector<32x64xf32>
    %c19_350 = arith.constant 19 : index
    %436 = memref.load %arg2[%c19_350] : memref<98xf32, #tpu.memory_space<smem>>
    %c5_351 = arith.constant 5 : index
    %c13_352 = arith.constant 13 : index
    %c0_353 = arith.constant 0 : index
    %437 = vector.load %arg6[%c5_351, %c13_352, %c0_353] : memref<14x57x64xf32, #tpu.memory_space<vmem>>, vector<1x32x64xf32>
    %438 = vector.shape_cast %437 : vector<1x32x64xf32> to vector<32x64xf32>
    %439 = vector.broadcast %436 : f32 to vector<32x64xf32>
    %440 = arith.mulf %439, %438 : vector<32x64xf32>
    %441 = arith.addf %417, %440 : vector<32x64xf32>
    %c26 = arith.constant 26 : index
    %442 = memref.load %arg2[%c26] : memref<98xf32, #tpu.memory_space<smem>>
    %c5_354 = arith.constant 5 : index
    %c16_355 = arith.constant 16 : index
    %c0_356 = arith.constant 0 : index
    %443 = vector.load %arg6[%c5_354, %c16_355, %c0_356] : memref<14x57x64xf32, #tpu.memory_space<vmem>>, vector<1x32x64xf32>
    %444 = vector.shape_cast %443 : vector<1x32x64xf32> to vector<32x64xf32>
    %445 = vector.broadcast %442 : f32 to vector<32x64xf32>
    %446 = arith.mulf %445, %444 : vector<32x64xf32>
    %447 = arith.addf %423, %446 : vector<32x64xf32>
    %c33 = arith.constant 33 : index
    %448 = memref.load %arg2[%c33] : memref<98xf32, #tpu.memory_space<smem>>
    %c5_357 = arith.constant 5 : index
    %c19_358 = arith.constant 19 : index
    %c0_359 = arith.constant 0 : index
    %449 = vector.load %arg6[%c5_357, %c19_358, %c0_359] : memref<14x57x64xf32, #tpu.memory_space<vmem>>, vector<1x32x64xf32>
    %450 = vector.shape_cast %449 : vector<1x32x64xf32> to vector<32x64xf32>
    %451 = vector.broadcast %448 : f32 to vector<32x64xf32>
    %452 = arith.mulf %451, %450 : vector<32x64xf32>
    %453 = arith.addf %429, %452 : vector<32x64xf32>
    %c40 = arith.constant 40 : index
    %454 = memref.load %arg2[%c40] : memref<98xf32, #tpu.memory_space<smem>>
    %c5_360 = arith.constant 5 : index
    %c22_361 = arith.constant 22 : index
    %c0_362 = arith.constant 0 : index
    %455 = vector.load %arg6[%c5_360, %c22_361, %c0_362] : memref<14x57x64xf32, #tpu.memory_space<vmem>>, vector<1x32x64xf32>
    %456 = vector.shape_cast %455 : vector<1x32x64xf32> to vector<32x64xf32>
    %457 = vector.broadcast %454 : f32 to vector<32x64xf32>
    %458 = arith.mulf %457, %456 : vector<32x64xf32>
    %459 = arith.addf %435, %458 : vector<32x64xf32>
    %c47 = arith.constant 47 : index
    %460 = memref.load %arg2[%c47] : memref<98xf32, #tpu.memory_space<smem>>
    %c5_363 = arith.constant 5 : index
    %c25_364 = arith.constant 25 : index
    %c0_365 = arith.constant 0 : index
    %461 = vector.load %arg6[%c5_363, %c25_364, %c0_365] : memref<14x57x64xf32, #tpu.memory_space<vmem>>, vector<1x32x64xf32>
    %462 = vector.shape_cast %461 : vector<1x32x64xf32> to vector<32x64xf32>
    %463 = vector.broadcast %460 : f32 to vector<32x64xf32>
    %464 = arith.mulf %463, %462 : vector<32x64xf32>
    %465 = arith.addf %441, %464 : vector<32x64xf32>
    %c6_366 = arith.constant 6 : index
    %466 = memref.load %arg2[%c6_366] : memref<98xf32, #tpu.memory_space<smem>>
    %c6_367 = arith.constant 6 : index
    %c7_368 = arith.constant 7 : index
    %c0_369 = arith.constant 0 : index
    %467 = vector.load %arg6[%c6_367, %c7_368, %c0_369] : memref<14x57x64xf32, #tpu.memory_space<vmem>>, vector<1x32x64xf32>
    %468 = vector.shape_cast %467 : vector<1x32x64xf32> to vector<32x64xf32>
    %469 = vector.broadcast %466 : f32 to vector<32x64xf32>
    %470 = arith.mulf %469, %468 : vector<32x64xf32>
    %471 = arith.addf %447, %470 : vector<32x64xf32>
    %c13_370 = arith.constant 13 : index
    %472 = memref.load %arg2[%c13_370] : memref<98xf32, #tpu.memory_space<smem>>
    %c6_371 = arith.constant 6 : index
    %c10_372 = arith.constant 10 : index
    %c0_373 = arith.constant 0 : index
    %473 = vector.load %arg6[%c6_371, %c10_372, %c0_373] : memref<14x57x64xf32, #tpu.memory_space<vmem>>, vector<1x32x64xf32>
    %474 = vector.shape_cast %473 : vector<1x32x64xf32> to vector<32x64xf32>
    %475 = vector.broadcast %472 : f32 to vector<32x64xf32>
    %476 = arith.mulf %475, %474 : vector<32x64xf32>
    %477 = arith.addf %453, %476 : vector<32x64xf32>
    %c20 = arith.constant 20 : index
    %478 = memref.load %arg2[%c20] : memref<98xf32, #tpu.memory_space<smem>>
    %c6_374 = arith.constant 6 : index
    %c13_375 = arith.constant 13 : index
    %c0_376 = arith.constant 0 : index
    %479 = vector.load %arg6[%c6_374, %c13_375, %c0_376] : memref<14x57x64xf32, #tpu.memory_space<vmem>>, vector<1x32x64xf32>
    %480 = vector.shape_cast %479 : vector<1x32x64xf32> to vector<32x64xf32>
    %481 = vector.broadcast %478 : f32 to vector<32x64xf32>
    %482 = arith.mulf %481, %480 : vector<32x64xf32>
    %483 = arith.addf %459, %482 : vector<32x64xf32>
    %c27 = arith.constant 27 : index
    %484 = memref.load %arg2[%c27] : memref<98xf32, #tpu.memory_space<smem>>
    %c6_377 = arith.constant 6 : index
    %c16_378 = arith.constant 16 : index
    %c0_379 = arith.constant 0 : index
    %485 = vector.load %arg6[%c6_377, %c16_378, %c0_379] : memref<14x57x64xf32, #tpu.memory_space<vmem>>, vector<1x32x64xf32>
    %486 = vector.shape_cast %485 : vector<1x32x64xf32> to vector<32x64xf32>
    %487 = vector.broadcast %484 : f32 to vector<32x64xf32>
    %488 = arith.mulf %487, %486 : vector<32x64xf32>
    %489 = arith.addf %465, %488 : vector<32x64xf32>
    %c34 = arith.constant 34 : index
    %490 = memref.load %arg2[%c34] : memref<98xf32, #tpu.memory_space<smem>>
    %c6_380 = arith.constant 6 : index
    %c19_381 = arith.constant 19 : index
    %c0_382 = arith.constant 0 : index
    %491 = vector.load %arg6[%c6_380, %c19_381, %c0_382] : memref<14x57x64xf32, #tpu.memory_space<vmem>>, vector<1x32x64xf32>
    %492 = vector.shape_cast %491 : vector<1x32x64xf32> to vector<32x64xf32>
    %493 = vector.broadcast %490 : f32 to vector<32x64xf32>
    %494 = arith.mulf %493, %492 : vector<32x64xf32>
    %495 = arith.addf %471, %494 : vector<32x64xf32>
    %c41 = arith.constant 41 : index
    %496 = memref.load %arg2[%c41] : memref<98xf32, #tpu.memory_space<smem>>
    %c6_383 = arith.constant 6 : index
    %c22_384 = arith.constant 22 : index
    %c0_385 = arith.constant 0 : index
    %497 = vector.load %arg6[%c6_383, %c22_384, %c0_385] : memref<14x57x64xf32, #tpu.memory_space<vmem>>, vector<1x32x64xf32>
    %498 = vector.shape_cast %497 : vector<1x32x64xf32> to vector<32x64xf32>
    %499 = vector.broadcast %496 : f32 to vector<32x64xf32>
    %500 = arith.mulf %499, %498 : vector<32x64xf32>
    %501 = arith.addf %477, %500 : vector<32x64xf32>
    %c48 = arith.constant 48 : index
    %502 = memref.load %arg2[%c48] : memref<98xf32, #tpu.memory_space<smem>>
    %c6_386 = arith.constant 6 : index
    %c25_387 = arith.constant 25 : index
    %c0_388 = arith.constant 0 : index
    %503 = vector.load %arg6[%c6_386, %c25_387, %c0_388] : memref<14x57x64xf32, #tpu.memory_space<vmem>>, vector<1x32x64xf32>
    %504 = vector.shape_cast %503 : vector<1x32x64xf32> to vector<32x64xf32>
    %505 = vector.broadcast %502 : f32 to vector<32x64xf32>
    %506 = arith.mulf %505, %504 : vector<32x64xf32>
    %507 = arith.addf %483, %506 : vector<32x64xf32>
    %c49 = arith.constant 49 : index
    %508 = memref.load %arg2[%c49] : memref<98xf32, #tpu.memory_space<smem>>
    %c7_389 = arith.constant 7 : index
    %c7_390 = arith.constant 7 : index
    %c0_391 = arith.constant 0 : index
    %509 = vector.load %arg6[%c7_389, %c7_390, %c0_391] : memref<14x57x64xf32, #tpu.memory_space<vmem>>, vector<1x32x64xf32>
    %510 = vector.shape_cast %509 : vector<1x32x64xf32> to vector<32x64xf32>
    %511 = vector.broadcast %508 : f32 to vector<32x64xf32>
    %512 = arith.mulf %511, %510 : vector<32x64xf32>
    %513 = arith.addf %489, %512 : vector<32x64xf32>
    %c56_392 = arith.constant 56 : index
    %514 = memref.load %arg2[%c56_392] : memref<98xf32, #tpu.memory_space<smem>>
    %c7_393 = arith.constant 7 : index
    %c10_394 = arith.constant 10 : index
    %c0_395 = arith.constant 0 : index
    %515 = vector.load %arg6[%c7_393, %c10_394, %c0_395] : memref<14x57x64xf32, #tpu.memory_space<vmem>>, vector<1x32x64xf32>
    %516 = vector.shape_cast %515 : vector<1x32x64xf32> to vector<32x64xf32>
    %517 = vector.broadcast %514 : f32 to vector<32x64xf32>
    %518 = arith.mulf %517, %516 : vector<32x64xf32>
    %519 = arith.addf %495, %518 : vector<32x64xf32>
    %c63 = arith.constant 63 : index
    %520 = memref.load %arg2[%c63] : memref<98xf32, #tpu.memory_space<smem>>
    %c7_396 = arith.constant 7 : index
    %c13_397 = arith.constant 13 : index
    %c0_398 = arith.constant 0 : index
    %521 = vector.load %arg6[%c7_396, %c13_397, %c0_398] : memref<14x57x64xf32, #tpu.memory_space<vmem>>, vector<1x32x64xf32>
    %522 = vector.shape_cast %521 : vector<1x32x64xf32> to vector<32x64xf32>
    %523 = vector.broadcast %520 : f32 to vector<32x64xf32>
    %524 = arith.mulf %523, %522 : vector<32x64xf32>
    %525 = arith.addf %501, %524 : vector<32x64xf32>
    %c70 = arith.constant 70 : index
    %526 = memref.load %arg2[%c70] : memref<98xf32, #tpu.memory_space<smem>>
    %c7_399 = arith.constant 7 : index
    %c16_400 = arith.constant 16 : index
    %c0_401 = arith.constant 0 : index
    %527 = vector.load %arg6[%c7_399, %c16_400, %c0_401] : memref<14x57x64xf32, #tpu.memory_space<vmem>>, vector<1x32x64xf32>
    %528 = vector.shape_cast %527 : vector<1x32x64xf32> to vector<32x64xf32>
    %529 = vector.broadcast %526 : f32 to vector<32x64xf32>
    %530 = arith.mulf %529, %528 : vector<32x64xf32>
    %531 = arith.addf %507, %530 : vector<32x64xf32>
    %c77 = arith.constant 77 : index
    %532 = memref.load %arg2[%c77] : memref<98xf32, #tpu.memory_space<smem>>
    %c7_402 = arith.constant 7 : index
    %c19_403 = arith.constant 19 : index
    %c0_404 = arith.constant 0 : index
    %533 = vector.load %arg6[%c7_402, %c19_403, %c0_404] : memref<14x57x64xf32, #tpu.memory_space<vmem>>, vector<1x32x64xf32>
    %534 = vector.shape_cast %533 : vector<1x32x64xf32> to vector<32x64xf32>
    %535 = vector.broadcast %532 : f32 to vector<32x64xf32>
    %536 = arith.mulf %535, %534 : vector<32x64xf32>
    %537 = arith.addf %513, %536 : vector<32x64xf32>
    %c84 = arith.constant 84 : index
    %538 = memref.load %arg2[%c84] : memref<98xf32, #tpu.memory_space<smem>>
    %c7_405 = arith.constant 7 : index
    %c22_406 = arith.constant 22 : index
    %c0_407 = arith.constant 0 : index
    %539 = vector.load %arg6[%c7_405, %c22_406, %c0_407] : memref<14x57x64xf32, #tpu.memory_space<vmem>>, vector<1x32x64xf32>
    %540 = vector.shape_cast %539 : vector<1x32x64xf32> to vector<32x64xf32>
    %541 = vector.broadcast %538 : f32 to vector<32x64xf32>
    %542 = arith.mulf %541, %540 : vector<32x64xf32>
    %543 = arith.addf %519, %542 : vector<32x64xf32>
    %c91 = arith.constant 91 : index
    %544 = memref.load %arg2[%c91] : memref<98xf32, #tpu.memory_space<smem>>
    %c7_408 = arith.constant 7 : index
    %c25_409 = arith.constant 25 : index
    %c0_410 = arith.constant 0 : index
    %545 = vector.load %arg6[%c7_408, %c25_409, %c0_410] : memref<14x57x64xf32, #tpu.memory_space<vmem>>, vector<1x32x64xf32>
    %546 = vector.shape_cast %545 : vector<1x32x64xf32> to vector<32x64xf32>
    %547 = vector.broadcast %544 : f32 to vector<32x64xf32>
    %548 = arith.mulf %547, %546 : vector<32x64xf32>
    %549 = arith.addf %525, %548 : vector<32x64xf32>
    %c50_411 = arith.constant 50 : index
    %550 = memref.load %arg2[%c50_411] : memref<98xf32, #tpu.memory_space<smem>>
    %c8_412 = arith.constant 8 : index
    %c7_413 = arith.constant 7 : index
    %c0_414 = arith.constant 0 : index
    %551 = vector.load %arg6[%c8_412, %c7_413, %c0_414] : memref<14x57x64xf32, #tpu.memory_space<vmem>>, vector<1x32x64xf32>
    %552 = vector.shape_cast %551 : vector<1x32x64xf32> to vector<32x64xf32>
    %553 = vector.broadcast %550 : f32 to vector<32x64xf32>
    %554 = arith.mulf %553, %552 : vector<32x64xf32>
    %555 = arith.addf %531, %554 : vector<32x64xf32>
    %c57 = arith.constant 57 : index
    %556 = memref.load %arg2[%c57] : memref<98xf32, #tpu.memory_space<smem>>
    %c8_415 = arith.constant 8 : index
    %c10_416 = arith.constant 10 : index
    %c0_417 = arith.constant 0 : index
    %557 = vector.load %arg6[%c8_415, %c10_416, %c0_417] : memref<14x57x64xf32, #tpu.memory_space<vmem>>, vector<1x32x64xf32>
    %558 = vector.shape_cast %557 : vector<1x32x64xf32> to vector<32x64xf32>
    %559 = vector.broadcast %556 : f32 to vector<32x64xf32>
    %560 = arith.mulf %559, %558 : vector<32x64xf32>
    %561 = arith.addf %537, %560 : vector<32x64xf32>
    %c64 = arith.constant 64 : index
    %562 = memref.load %arg2[%c64] : memref<98xf32, #tpu.memory_space<smem>>
    %c8_418 = arith.constant 8 : index
    %c13_419 = arith.constant 13 : index
    %c0_420 = arith.constant 0 : index
    %563 = vector.load %arg6[%c8_418, %c13_419, %c0_420] : memref<14x57x64xf32, #tpu.memory_space<vmem>>, vector<1x32x64xf32>
    %564 = vector.shape_cast %563 : vector<1x32x64xf32> to vector<32x64xf32>
    %565 = vector.broadcast %562 : f32 to vector<32x64xf32>
    %566 = arith.mulf %565, %564 : vector<32x64xf32>
    %567 = arith.addf %543, %566 : vector<32x64xf32>
    %c71 = arith.constant 71 : index
    %568 = memref.load %arg2[%c71] : memref<98xf32, #tpu.memory_space<smem>>
    %c8_421 = arith.constant 8 : index
    %c16_422 = arith.constant 16 : index
    %c0_423 = arith.constant 0 : index
    %569 = vector.load %arg6[%c8_421, %c16_422, %c0_423] : memref<14x57x64xf32, #tpu.memory_space<vmem>>, vector<1x32x64xf32>
    %570 = vector.shape_cast %569 : vector<1x32x64xf32> to vector<32x64xf32>
    %571 = vector.broadcast %568 : f32 to vector<32x64xf32>
    %572 = arith.mulf %571, %570 : vector<32x64xf32>
    %573 = arith.addf %549, %572 : vector<32x64xf32>
    %c78 = arith.constant 78 : index
    %574 = memref.load %arg2[%c78] : memref<98xf32, #tpu.memory_space<smem>>
    %c8_424 = arith.constant 8 : index
    %c19_425 = arith.constant 19 : index
    %c0_426 = arith.constant 0 : index
    %575 = vector.load %arg6[%c8_424, %c19_425, %c0_426] : memref<14x57x64xf32, #tpu.memory_space<vmem>>, vector<1x32x64xf32>
    %576 = vector.shape_cast %575 : vector<1x32x64xf32> to vector<32x64xf32>
    %577 = vector.broadcast %574 : f32 to vector<32x64xf32>
    %578 = arith.mulf %577, %576 : vector<32x64xf32>
    %579 = arith.addf %555, %578 : vector<32x64xf32>
    %c85 = arith.constant 85 : index
    %580 = memref.load %arg2[%c85] : memref<98xf32, #tpu.memory_space<smem>>
    %c8_427 = arith.constant 8 : index
    %c22_428 = arith.constant 22 : index
    %c0_429 = arith.constant 0 : index
    %581 = vector.load %arg6[%c8_427, %c22_428, %c0_429] : memref<14x57x64xf32, #tpu.memory_space<vmem>>, vector<1x32x64xf32>
    %582 = vector.shape_cast %581 : vector<1x32x64xf32> to vector<32x64xf32>
    %583 = vector.broadcast %580 : f32 to vector<32x64xf32>
    %584 = arith.mulf %583, %582 : vector<32x64xf32>
    %585 = arith.addf %561, %584 : vector<32x64xf32>
    %c92 = arith.constant 92 : index
    %586 = memref.load %arg2[%c92] : memref<98xf32, #tpu.memory_space<smem>>
    %c8_430 = arith.constant 8 : index
    %c25_431 = arith.constant 25 : index
    %c0_432 = arith.constant 0 : index
    %587 = vector.load %arg6[%c8_430, %c25_431, %c0_432] : memref<14x57x64xf32, #tpu.memory_space<vmem>>, vector<1x32x64xf32>
    %588 = vector.shape_cast %587 : vector<1x32x64xf32> to vector<32x64xf32>
    %589 = vector.broadcast %586 : f32 to vector<32x64xf32>
    %590 = arith.mulf %589, %588 : vector<32x64xf32>
    %591 = arith.addf %567, %590 : vector<32x64xf32>
    %c51 = arith.constant 51 : index
    %592 = memref.load %arg2[%c51] : memref<98xf32, #tpu.memory_space<smem>>
    %c9_433 = arith.constant 9 : index
    %c7_434 = arith.constant 7 : index
    %c0_435 = arith.constant 0 : index
    %593 = vector.load %arg6[%c9_433, %c7_434, %c0_435] : memref<14x57x64xf32, #tpu.memory_space<vmem>>, vector<1x32x64xf32>
    %594 = vector.shape_cast %593 : vector<1x32x64xf32> to vector<32x64xf32>
    %595 = vector.broadcast %592 : f32 to vector<32x64xf32>
    %596 = arith.mulf %595, %594 : vector<32x64xf32>
    %597 = arith.addf %573, %596 : vector<32x64xf32>
    %c58 = arith.constant 58 : index
    %598 = memref.load %arg2[%c58] : memref<98xf32, #tpu.memory_space<smem>>
    %c9_436 = arith.constant 9 : index
    %c10_437 = arith.constant 10 : index
    %c0_438 = arith.constant 0 : index
    %599 = vector.load %arg6[%c9_436, %c10_437, %c0_438] : memref<14x57x64xf32, #tpu.memory_space<vmem>>, vector<1x32x64xf32>
    %600 = vector.shape_cast %599 : vector<1x32x64xf32> to vector<32x64xf32>
    %601 = vector.broadcast %598 : f32 to vector<32x64xf32>
    %602 = arith.mulf %601, %600 : vector<32x64xf32>
    %603 = arith.addf %579, %602 : vector<32x64xf32>
    %c65_439 = arith.constant 65 : index
    %604 = memref.load %arg2[%c65_439] : memref<98xf32, #tpu.memory_space<smem>>
    %c9_440 = arith.constant 9 : index
    %c13_441 = arith.constant 13 : index
    %c0_442 = arith.constant 0 : index
    %605 = vector.load %arg6[%c9_440, %c13_441, %c0_442] : memref<14x57x64xf32, #tpu.memory_space<vmem>>, vector<1x32x64xf32>
    %606 = vector.shape_cast %605 : vector<1x32x64xf32> to vector<32x64xf32>
    %607 = vector.broadcast %604 : f32 to vector<32x64xf32>
    %608 = arith.mulf %607, %606 : vector<32x64xf32>
    %609 = arith.addf %585, %608 : vector<32x64xf32>
    %c72 = arith.constant 72 : index
    %610 = memref.load %arg2[%c72] : memref<98xf32, #tpu.memory_space<smem>>
    %c9_443 = arith.constant 9 : index
    %c16_444 = arith.constant 16 : index
    %c0_445 = arith.constant 0 : index
    %611 = vector.load %arg6[%c9_443, %c16_444, %c0_445] : memref<14x57x64xf32, #tpu.memory_space<vmem>>, vector<1x32x64xf32>
    %612 = vector.shape_cast %611 : vector<1x32x64xf32> to vector<32x64xf32>
    %613 = vector.broadcast %610 : f32 to vector<32x64xf32>
    %614 = arith.mulf %613, %612 : vector<32x64xf32>
    %615 = arith.addf %591, %614 : vector<32x64xf32>
    %c79 = arith.constant 79 : index
    %616 = memref.load %arg2[%c79] : memref<98xf32, #tpu.memory_space<smem>>
    %c9_446 = arith.constant 9 : index
    %c19_447 = arith.constant 19 : index
    %c0_448 = arith.constant 0 : index
    %617 = vector.load %arg6[%c9_446, %c19_447, %c0_448] : memref<14x57x64xf32, #tpu.memory_space<vmem>>, vector<1x32x64xf32>
    %618 = vector.shape_cast %617 : vector<1x32x64xf32> to vector<32x64xf32>
    %619 = vector.broadcast %616 : f32 to vector<32x64xf32>
    %620 = arith.mulf %619, %618 : vector<32x64xf32>
    %621 = arith.addf %597, %620 : vector<32x64xf32>
    %c86 = arith.constant 86 : index
    %622 = memref.load %arg2[%c86] : memref<98xf32, #tpu.memory_space<smem>>
    %c9_449 = arith.constant 9 : index
    %c22_450 = arith.constant 22 : index
    %c0_451 = arith.constant 0 : index
    %623 = vector.load %arg6[%c9_449, %c22_450, %c0_451] : memref<14x57x64xf32, #tpu.memory_space<vmem>>, vector<1x32x64xf32>
    %624 = vector.shape_cast %623 : vector<1x32x64xf32> to vector<32x64xf32>
    %625 = vector.broadcast %622 : f32 to vector<32x64xf32>
    %626 = arith.mulf %625, %624 : vector<32x64xf32>
    %627 = arith.addf %603, %626 : vector<32x64xf32>
    %c93 = arith.constant 93 : index
    %628 = memref.load %arg2[%c93] : memref<98xf32, #tpu.memory_space<smem>>
    %c9_452 = arith.constant 9 : index
    %c25_453 = arith.constant 25 : index
    %c0_454 = arith.constant 0 : index
    %629 = vector.load %arg6[%c9_452, %c25_453, %c0_454] : memref<14x57x64xf32, #tpu.memory_space<vmem>>, vector<1x32x64xf32>
    %630 = vector.shape_cast %629 : vector<1x32x64xf32> to vector<32x64xf32>
    %631 = vector.broadcast %628 : f32 to vector<32x64xf32>
    %632 = arith.mulf %631, %630 : vector<32x64xf32>
    %633 = arith.addf %609, %632 : vector<32x64xf32>
    %c52 = arith.constant 52 : index
    %634 = memref.load %arg2[%c52] : memref<98xf32, #tpu.memory_space<smem>>
    %c10_455 = arith.constant 10 : index
    %c7_456 = arith.constant 7 : index
    %c0_457 = arith.constant 0 : index
    %635 = vector.load %arg6[%c10_455, %c7_456, %c0_457] : memref<14x57x64xf32, #tpu.memory_space<vmem>>, vector<1x32x64xf32>
    %636 = vector.shape_cast %635 : vector<1x32x64xf32> to vector<32x64xf32>
    %637 = vector.broadcast %634 : f32 to vector<32x64xf32>
    %638 = arith.mulf %637, %636 : vector<32x64xf32>
    %639 = arith.addf %615, %638 : vector<32x64xf32>
    %c59_458 = arith.constant 59 : index
    %640 = memref.load %arg2[%c59_458] : memref<98xf32, #tpu.memory_space<smem>>
    %c10_459 = arith.constant 10 : index
    %c10_460 = arith.constant 10 : index
    %c0_461 = arith.constant 0 : index
    %641 = vector.load %arg6[%c10_459, %c10_460, %c0_461] : memref<14x57x64xf32, #tpu.memory_space<vmem>>, vector<1x32x64xf32>
    %642 = vector.shape_cast %641 : vector<1x32x64xf32> to vector<32x64xf32>
    %643 = vector.broadcast %640 : f32 to vector<32x64xf32>
    %644 = arith.mulf %643, %642 : vector<32x64xf32>
    %645 = arith.addf %621, %644 : vector<32x64xf32>
    %c66 = arith.constant 66 : index
    %646 = memref.load %arg2[%c66] : memref<98xf32, #tpu.memory_space<smem>>
    %c10_462 = arith.constant 10 : index
    %c13_463 = arith.constant 13 : index
    %c0_464 = arith.constant 0 : index
    %647 = vector.load %arg6[%c10_462, %c13_463, %c0_464] : memref<14x57x64xf32, #tpu.memory_space<vmem>>, vector<1x32x64xf32>
    %648 = vector.shape_cast %647 : vector<1x32x64xf32> to vector<32x64xf32>
    %649 = vector.broadcast %646 : f32 to vector<32x64xf32>
    %650 = arith.mulf %649, %648 : vector<32x64xf32>
    %651 = arith.addf %627, %650 : vector<32x64xf32>
    %c73 = arith.constant 73 : index
    %652 = memref.load %arg2[%c73] : memref<98xf32, #tpu.memory_space<smem>>
    %c10_465 = arith.constant 10 : index
    %c16_466 = arith.constant 16 : index
    %c0_467 = arith.constant 0 : index
    %653 = vector.load %arg6[%c10_465, %c16_466, %c0_467] : memref<14x57x64xf32, #tpu.memory_space<vmem>>, vector<1x32x64xf32>
    %654 = vector.shape_cast %653 : vector<1x32x64xf32> to vector<32x64xf32>
    %655 = vector.broadcast %652 : f32 to vector<32x64xf32>
    %656 = arith.mulf %655, %654 : vector<32x64xf32>
    %657 = arith.addf %633, %656 : vector<32x64xf32>
    %c80 = arith.constant 80 : index
    %658 = memref.load %arg2[%c80] : memref<98xf32, #tpu.memory_space<smem>>
    %c10_468 = arith.constant 10 : index
    %c19_469 = arith.constant 19 : index
    %c0_470 = arith.constant 0 : index
    %659 = vector.load %arg6[%c10_468, %c19_469, %c0_470] : memref<14x57x64xf32, #tpu.memory_space<vmem>>, vector<1x32x64xf32>
    %660 = vector.shape_cast %659 : vector<1x32x64xf32> to vector<32x64xf32>
    %661 = vector.broadcast %658 : f32 to vector<32x64xf32>
    %662 = arith.mulf %661, %660 : vector<32x64xf32>
    %663 = arith.addf %639, %662 : vector<32x64xf32>
    %c87 = arith.constant 87 : index
    %664 = memref.load %arg2[%c87] : memref<98xf32, #tpu.memory_space<smem>>
    %c10_471 = arith.constant 10 : index
    %c22_472 = arith.constant 22 : index
    %c0_473 = arith.constant 0 : index
    %665 = vector.load %arg6[%c10_471, %c22_472, %c0_473] : memref<14x57x64xf32, #tpu.memory_space<vmem>>, vector<1x32x64xf32>
    %666 = vector.shape_cast %665 : vector<1x32x64xf32> to vector<32x64xf32>
    %667 = vector.broadcast %664 : f32 to vector<32x64xf32>
    %668 = arith.mulf %667, %666 : vector<32x64xf32>
    %669 = arith.addf %645, %668 : vector<32x64xf32>
    %c94 = arith.constant 94 : index
    %670 = memref.load %arg2[%c94] : memref<98xf32, #tpu.memory_space<smem>>
    %c10_474 = arith.constant 10 : index
    %c25_475 = arith.constant 25 : index
    %c0_476 = arith.constant 0 : index
    %671 = vector.load %arg6[%c10_474, %c25_475, %c0_476] : memref<14x57x64xf32, #tpu.memory_space<vmem>>, vector<1x32x64xf32>
    %672 = vector.shape_cast %671 : vector<1x32x64xf32> to vector<32x64xf32>
    %673 = vector.broadcast %670 : f32 to vector<32x64xf32>
    %674 = arith.mulf %673, %672 : vector<32x64xf32>
    %675 = arith.addf %651, %674 : vector<32x64xf32>
    %c53_477 = arith.constant 53 : index
    %676 = memref.load %arg2[%c53_477] : memref<98xf32, #tpu.memory_space<smem>>
    %c11_478 = arith.constant 11 : index
    %c7_479 = arith.constant 7 : index
    %c0_480 = arith.constant 0 : index
    %677 = vector.load %arg6[%c11_478, %c7_479, %c0_480] : memref<14x57x64xf32, #tpu.memory_space<vmem>>, vector<1x32x64xf32>
    %678 = vector.shape_cast %677 : vector<1x32x64xf32> to vector<32x64xf32>
    %679 = vector.broadcast %676 : f32 to vector<32x64xf32>
    %680 = arith.mulf %679, %678 : vector<32x64xf32>
    %681 = arith.addf %657, %680 : vector<32x64xf32>
    %c60 = arith.constant 60 : index
    %682 = memref.load %arg2[%c60] : memref<98xf32, #tpu.memory_space<smem>>
    %c11_481 = arith.constant 11 : index
    %c10_482 = arith.constant 10 : index
    %c0_483 = arith.constant 0 : index
    %683 = vector.load %arg6[%c11_481, %c10_482, %c0_483] : memref<14x57x64xf32, #tpu.memory_space<vmem>>, vector<1x32x64xf32>
    %684 = vector.shape_cast %683 : vector<1x32x64xf32> to vector<32x64xf32>
    %685 = vector.broadcast %682 : f32 to vector<32x64xf32>
    %686 = arith.mulf %685, %684 : vector<32x64xf32>
    %687 = arith.addf %663, %686 : vector<32x64xf32>
    %c67 = arith.constant 67 : index
    %688 = memref.load %arg2[%c67] : memref<98xf32, #tpu.memory_space<smem>>
    %c11_484 = arith.constant 11 : index
    %c13_485 = arith.constant 13 : index
    %c0_486 = arith.constant 0 : index
    %689 = vector.load %arg6[%c11_484, %c13_485, %c0_486] : memref<14x57x64xf32, #tpu.memory_space<vmem>>, vector<1x32x64xf32>
    %690 = vector.shape_cast %689 : vector<1x32x64xf32> to vector<32x64xf32>
    %691 = vector.broadcast %688 : f32 to vector<32x64xf32>
    %692 = arith.mulf %691, %690 : vector<32x64xf32>
    %693 = arith.addf %669, %692 : vector<32x64xf32>
    %c74 = arith.constant 74 : index
    %694 = memref.load %arg2[%c74] : memref<98xf32, #tpu.memory_space<smem>>
    %c11_487 = arith.constant 11 : index
    %c16_488 = arith.constant 16 : index
    %c0_489 = arith.constant 0 : index
    %695 = vector.load %arg6[%c11_487, %c16_488, %c0_489] : memref<14x57x64xf32, #tpu.memory_space<vmem>>, vector<1x32x64xf32>
    %696 = vector.shape_cast %695 : vector<1x32x64xf32> to vector<32x64xf32>
    %697 = vector.broadcast %694 : f32 to vector<32x64xf32>
    %698 = arith.mulf %697, %696 : vector<32x64xf32>
    %699 = arith.addf %675, %698 : vector<32x64xf32>
    %c81 = arith.constant 81 : index
    %700 = memref.load %arg2[%c81] : memref<98xf32, #tpu.memory_space<smem>>
    %c11_490 = arith.constant 11 : index
    %c19_491 = arith.constant 19 : index
    %c0_492 = arith.constant 0 : index
    %701 = vector.load %arg6[%c11_490, %c19_491, %c0_492] : memref<14x57x64xf32, #tpu.memory_space<vmem>>, vector<1x32x64xf32>
    %702 = vector.shape_cast %701 : vector<1x32x64xf32> to vector<32x64xf32>
    %703 = vector.broadcast %700 : f32 to vector<32x64xf32>
    %704 = arith.mulf %703, %702 : vector<32x64xf32>
    %705 = arith.addf %681, %704 : vector<32x64xf32>
    %c88 = arith.constant 88 : index
    %706 = memref.load %arg2[%c88] : memref<98xf32, #tpu.memory_space<smem>>
    %c11_493 = arith.constant 11 : index
    %c22_494 = arith.constant 22 : index
    %c0_495 = arith.constant 0 : index
    %707 = vector.load %arg6[%c11_493, %c22_494, %c0_495] : memref<14x57x64xf32, #tpu.memory_space<vmem>>, vector<1x32x64xf32>
    %708 = vector.shape_cast %707 : vector<1x32x64xf32> to vector<32x64xf32>
    %709 = vector.broadcast %706 : f32 to vector<32x64xf32>
    %710 = arith.mulf %709, %708 : vector<32x64xf32>
    %711 = arith.addf %687, %710 : vector<32x64xf32>
    %c95 = arith.constant 95 : index
    %712 = memref.load %arg2[%c95] : memref<98xf32, #tpu.memory_space<smem>>
    %c11_496 = arith.constant 11 : index
    %c25_497 = arith.constant 25 : index
    %c0_498 = arith.constant 0 : index
    %713 = vector.load %arg6[%c11_496, %c25_497, %c0_498] : memref<14x57x64xf32, #tpu.memory_space<vmem>>, vector<1x32x64xf32>
    %714 = vector.shape_cast %713 : vector<1x32x64xf32> to vector<32x64xf32>
    %715 = vector.broadcast %712 : f32 to vector<32x64xf32>
    %716 = arith.mulf %715, %714 : vector<32x64xf32>
    %717 = arith.addf %693, %716 : vector<32x64xf32>
    %c54 = arith.constant 54 : index
    %718 = memref.load %arg2[%c54] : memref<98xf32, #tpu.memory_space<smem>>
    %c12_499 = arith.constant 12 : index
    %c7_500 = arith.constant 7 : index
    %c0_501 = arith.constant 0 : index
    %719 = vector.load %arg6[%c12_499, %c7_500, %c0_501] : memref<14x57x64xf32, #tpu.memory_space<vmem>>, vector<1x32x64xf32>
    %720 = vector.shape_cast %719 : vector<1x32x64xf32> to vector<32x64xf32>
    %721 = vector.broadcast %718 : f32 to vector<32x64xf32>
    %722 = arith.mulf %721, %720 : vector<32x64xf32>
    %723 = arith.addf %699, %722 : vector<32x64xf32>
    %c61 = arith.constant 61 : index
    %724 = memref.load %arg2[%c61] : memref<98xf32, #tpu.memory_space<smem>>
    %c12_502 = arith.constant 12 : index
    %c10_503 = arith.constant 10 : index
    %c0_504 = arith.constant 0 : index
    %725 = vector.load %arg6[%c12_502, %c10_503, %c0_504] : memref<14x57x64xf32, #tpu.memory_space<vmem>>, vector<1x32x64xf32>
    %726 = vector.shape_cast %725 : vector<1x32x64xf32> to vector<32x64xf32>
    %727 = vector.broadcast %724 : f32 to vector<32x64xf32>
    %728 = arith.mulf %727, %726 : vector<32x64xf32>
    %729 = arith.addf %705, %728 : vector<32x64xf32>
    %c68_505 = arith.constant 68 : index
    %730 = memref.load %arg2[%c68_505] : memref<98xf32, #tpu.memory_space<smem>>
    %c12_506 = arith.constant 12 : index
    %c13_507 = arith.constant 13 : index
    %c0_508 = arith.constant 0 : index
    %731 = vector.load %arg6[%c12_506, %c13_507, %c0_508] : memref<14x57x64xf32, #tpu.memory_space<vmem>>, vector<1x32x64xf32>
    %732 = vector.shape_cast %731 : vector<1x32x64xf32> to vector<32x64xf32>
    %733 = vector.broadcast %730 : f32 to vector<32x64xf32>
    %734 = arith.mulf %733, %732 : vector<32x64xf32>
    %735 = arith.addf %711, %734 : vector<32x64xf32>
    %c75 = arith.constant 75 : index
    %736 = memref.load %arg2[%c75] : memref<98xf32, #tpu.memory_space<smem>>
    %c12_509 = arith.constant 12 : index
    %c16_510 = arith.constant 16 : index
    %c0_511 = arith.constant 0 : index
    %737 = vector.load %arg6[%c12_509, %c16_510, %c0_511] : memref<14x57x64xf32, #tpu.memory_space<vmem>>, vector<1x32x64xf32>
    %738 = vector.shape_cast %737 : vector<1x32x64xf32> to vector<32x64xf32>
    %739 = vector.broadcast %736 : f32 to vector<32x64xf32>
    %740 = arith.mulf %739, %738 : vector<32x64xf32>
    %741 = arith.addf %717, %740 : vector<32x64xf32>
    %c82 = arith.constant 82 : index
    %742 = memref.load %arg2[%c82] : memref<98xf32, #tpu.memory_space<smem>>
    %c12_512 = arith.constant 12 : index
    %c19_513 = arith.constant 19 : index
    %c0_514 = arith.constant 0 : index
    %743 = vector.load %arg6[%c12_512, %c19_513, %c0_514] : memref<14x57x64xf32, #tpu.memory_space<vmem>>, vector<1x32x64xf32>
    %744 = vector.shape_cast %743 : vector<1x32x64xf32> to vector<32x64xf32>
    %745 = vector.broadcast %742 : f32 to vector<32x64xf32>
    %746 = arith.mulf %745, %744 : vector<32x64xf32>
    %747 = arith.addf %723, %746 : vector<32x64xf32>
    %c89 = arith.constant 89 : index
    %748 = memref.load %arg2[%c89] : memref<98xf32, #tpu.memory_space<smem>>
    %c12_515 = arith.constant 12 : index
    %c22_516 = arith.constant 22 : index
    %c0_517 = arith.constant 0 : index
    %749 = vector.load %arg6[%c12_515, %c22_516, %c0_517] : memref<14x57x64xf32, #tpu.memory_space<vmem>>, vector<1x32x64xf32>
    %750 = vector.shape_cast %749 : vector<1x32x64xf32> to vector<32x64xf32>
    %751 = vector.broadcast %748 : f32 to vector<32x64xf32>
    %752 = arith.mulf %751, %750 : vector<32x64xf32>
    %753 = arith.addf %729, %752 : vector<32x64xf32>
    %c96 = arith.constant 96 : index
    %754 = memref.load %arg2[%c96] : memref<98xf32, #tpu.memory_space<smem>>
    %c12_518 = arith.constant 12 : index
    %c25_519 = arith.constant 25 : index
    %c0_520 = arith.constant 0 : index
    %755 = vector.load %arg6[%c12_518, %c25_519, %c0_520] : memref<14x57x64xf32, #tpu.memory_space<vmem>>, vector<1x32x64xf32>
    %756 = vector.shape_cast %755 : vector<1x32x64xf32> to vector<32x64xf32>
    %757 = vector.broadcast %754 : f32 to vector<32x64xf32>
    %758 = arith.mulf %757, %756 : vector<32x64xf32>
    %759 = arith.addf %735, %758 : vector<32x64xf32>
    %c55 = arith.constant 55 : index
    %760 = memref.load %arg2[%c55] : memref<98xf32, #tpu.memory_space<smem>>
    %c13_521 = arith.constant 13 : index
    %c7_522 = arith.constant 7 : index
    %c0_523 = arith.constant 0 : index
    %761 = vector.load %arg6[%c13_521, %c7_522, %c0_523] : memref<14x57x64xf32, #tpu.memory_space<vmem>>, vector<1x32x64xf32>
    %762 = vector.shape_cast %761 : vector<1x32x64xf32> to vector<32x64xf32>
    %763 = vector.broadcast %760 : f32 to vector<32x64xf32>
    %764 = arith.mulf %763, %762 : vector<32x64xf32>
    %765 = arith.addf %741, %764 : vector<32x64xf32>
    %c62_524 = arith.constant 62 : index
    %766 = memref.load %arg2[%c62_524] : memref<98xf32, #tpu.memory_space<smem>>
    %c13_525 = arith.constant 13 : index
    %c10_526 = arith.constant 10 : index
    %c0_527 = arith.constant 0 : index
    %767 = vector.load %arg6[%c13_525, %c10_526, %c0_527] : memref<14x57x64xf32, #tpu.memory_space<vmem>>, vector<1x32x64xf32>
    %768 = vector.shape_cast %767 : vector<1x32x64xf32> to vector<32x64xf32>
    %769 = vector.broadcast %766 : f32 to vector<32x64xf32>
    %770 = arith.mulf %769, %768 : vector<32x64xf32>
    %771 = arith.addf %747, %770 : vector<32x64xf32>
    %c69 = arith.constant 69 : index
    %772 = memref.load %arg2[%c69] : memref<98xf32, #tpu.memory_space<smem>>
    %c13_528 = arith.constant 13 : index
    %c13_529 = arith.constant 13 : index
    %c0_530 = arith.constant 0 : index
    %773 = vector.load %arg6[%c13_528, %c13_529, %c0_530] : memref<14x57x64xf32, #tpu.memory_space<vmem>>, vector<1x32x64xf32>
    %774 = vector.shape_cast %773 : vector<1x32x64xf32> to vector<32x64xf32>
    %775 = vector.broadcast %772 : f32 to vector<32x64xf32>
    %776 = arith.mulf %775, %774 : vector<32x64xf32>
    %777 = arith.addf %753, %776 : vector<32x64xf32>
    %c76 = arith.constant 76 : index
    %778 = memref.load %arg2[%c76] : memref<98xf32, #tpu.memory_space<smem>>
    %c13_531 = arith.constant 13 : index
    %c16_532 = arith.constant 16 : index
    %c0_533 = arith.constant 0 : index
    %779 = vector.load %arg6[%c13_531, %c16_532, %c0_533] : memref<14x57x64xf32, #tpu.memory_space<vmem>>, vector<1x32x64xf32>
    %780 = vector.shape_cast %779 : vector<1x32x64xf32> to vector<32x64xf32>
    %781 = vector.broadcast %778 : f32 to vector<32x64xf32>
    %782 = arith.mulf %781, %780 : vector<32x64xf32>
    %783 = arith.addf %759, %782 : vector<32x64xf32>
    %c83 = arith.constant 83 : index
    %784 = memref.load %arg2[%c83] : memref<98xf32, #tpu.memory_space<smem>>
    %c13_534 = arith.constant 13 : index
    %c19_535 = arith.constant 19 : index
    %c0_536 = arith.constant 0 : index
    %785 = vector.load %arg6[%c13_534, %c19_535, %c0_536] : memref<14x57x64xf32, #tpu.memory_space<vmem>>, vector<1x32x64xf32>
    %786 = vector.shape_cast %785 : vector<1x32x64xf32> to vector<32x64xf32>
    %787 = vector.broadcast %784 : f32 to vector<32x64xf32>
    %788 = arith.mulf %787, %786 : vector<32x64xf32>
    %789 = arith.addf %765, %788 : vector<32x64xf32>
    %c90 = arith.constant 90 : index
    %790 = memref.load %arg2[%c90] : memref<98xf32, #tpu.memory_space<smem>>
    %c13_537 = arith.constant 13 : index
    %c22_538 = arith.constant 22 : index
    %c0_539 = arith.constant 0 : index
    %791 = vector.load %arg6[%c13_537, %c22_538, %c0_539] : memref<14x57x64xf32, #tpu.memory_space<vmem>>, vector<1x32x64xf32>
    %792 = vector.shape_cast %791 : vector<1x32x64xf32> to vector<32x64xf32>
    %793 = vector.broadcast %790 : f32 to vector<32x64xf32>
    %794 = arith.mulf %793, %792 : vector<32x64xf32>
    %795 = arith.addf %771, %794 : vector<32x64xf32>
    %c97 = arith.constant 97 : index
    %796 = memref.load %arg2[%c97] : memref<98xf32, #tpu.memory_space<smem>>
    %c13_540 = arith.constant 13 : index
    %c25_541 = arith.constant 25 : index
    %c0_542 = arith.constant 0 : index
    %797 = vector.load %arg6[%c13_540, %c25_541, %c0_542] : memref<14x57x64xf32, #tpu.memory_space<vmem>>, vector<1x32x64xf32>
    %798 = vector.shape_cast %797 : vector<1x32x64xf32> to vector<32x64xf32>
    %799 = vector.broadcast %796 : f32 to vector<32x64xf32>
    %800 = arith.mulf %799, %798 : vector<32x64xf32>
    %801 = arith.addf %777, %800 : vector<32x64xf32>
    %802 = arith.addf %795, %801 : vector<32x64xf32>
    %803 = arith.addf %783, %789 : vector<32x64xf32>
    %804 = arith.addf %802, %803 : vector<32x64xf32>
    %c0_543 = arith.constant 0 : index
    %805 = memref.load %arg3[%c0_543] : memref<1xf32, #tpu.memory_space<smem>>
    %806 = vector.broadcast %805 : f32 to vector<32x64xf32>
    %807 = arith.addf %804, %806 : vector<32x64xf32>
    %808 = arith.negf %807 : vector<32x64xf32>
    %809 = math.exp %808 : vector<32x64xf32>
    %cst_544 = arith.constant 1.000000e+00 : f32
    %810 = vector.broadcast %cst_544 : f32 to vector<32x64xf32>
    %811 = arith.addf %810, %809 : vector<32x64xf32>
    %812 = arith.divf %810, %811 : vector<32x64xf32>
    %c0_545 = arith.constant 0 : index
    %c0_546 = arith.constant 0 : index
    %813 = vector.load %arg4[%c0_545, %c0_546] : memref<32x64xf32, #tpu.memory_space<vmem>>, vector<32x64xf32>
    tpu.vector_store %arg4[%c0_545, %c0_546], %812 {strides = array<i32>} : memref<32x64xf32, #tpu.memory_space<vmem>>, vector<32x64xf32>,
    return
  }
  func.func @transform_0(%arg0: i32) -> (i32, i32, i32, i32) {
    %c0_i32 = arith.constant 0 : i32
    %c0_i32_0 = arith.constant 0 : i32
    %c0_i32_1 = arith.constant 0 : i32
    %c0_i32_2 = arith.constant 0 : i32
    %c0_i32_3 = arith.constant 0 : i32
    return %c0_i32, %c0_i32_0, %c0_i32_1, %c0_i32_2 : i32, i32, i32, i32
  }
  func.func @transform_1(%arg0: i32) -> i32 {
    %c0_i32 = arith.constant 0 : i32
    %c0_i32_0 = arith.constant 0 : i32
    return %c0_i32 : i32
  }
  func.func @transform_2(%arg0: i32) -> i32 {
    %c0_i32 = arith.constant 0 : i32
    %c0_i32_0 = arith.constant 0 : i32
    return %c0_i32 : i32
  }
  func.func @transform_3(%arg0: i32) -> (i32, i32) {
    %c0_i32 = arith.constant 0 : i32
    %c0_i32_0 = arith.constant 0 : i32
    %c0_i32_1 = arith.constant 0 : i32
    return %c0_i32, %c0_i32_0 : i32, i32
  }
}

</mosaic_0001>

<llo_original>
// kernel: tpu_custom_call.1
$region0: #{tpu_custom_call.1}
  #allocation0 [shape = 'u32[]', space=smem, size = 0x4, offset = 0x4, fixed_abs, tag = 'smem constant byte address 0x4 - core index']
  #allocation1 [shape = 'u32[144,128]{1,0:T(1,128)}', space=vmem, size = 0x12000, scoped, tag = 'internal scratch']
  #allocation2 [shape = 'f32[2,57,100]{2,1,0:T(8,128)}', space=vmem, size = 0x10000, scoped, tag = 'scratch operand']
  #allocation3 [shape = 'f32[14,57,64]{2,1,0:T(8,128)}', space=vmem, size = 0x70000, scoped, tag = 'scratch operand']
  #allocation4 [shape = 'f32[1]{0:T(128)S(6)}', space=smem, size = 0x200, scoped, tag = 'scoped memory for tpu_custom_call.1']
  %s0 = inlined_call_operand.hbm [shape: f32[2,8,32,32], index: 0, kind: input, shape index: {}]
  %s1 = inlined_call_operand.vmem [shape: f32[98], index: 1, kind: input, shape index: {}]
  %s2 = inlined_call_operand.<no memory space> [shape: f32[1], index: 2, kind: input, shape index: {}]
  %s3 = inlined_call_operand.hbm [shape: f32[32,64], index: 3, kind: output, shape index: {}]
  %s4 = sld [smem:[#allocation0]]
  $region30: #{tpu_custom_call.1} parent=0
    _
  %s6 = ssub.s32 1, %s4
  %s7 = scalar_select 0, %s6, %s4
  %8 = sst [smem:[#allocation4]] %s2
  $region1: #{tpu_custom_call.1} parent=0
    #allocation5 [shape = 'u8[262144]{0}', space=vmem, size = 0x40000, scoped, tag = 'input window, operand 0, single buffered']
    #allocation6 [shape = 's32[1]{0}', space=sflag, size = 0x4, scoped, tag = 'scoped memory for tpu_custom_call.1']
    #allocation7 [shape = 's32[1]{0}', space=sflag, size = 0x4, scoped, tag = 'scoped memory for tpu_custom_call.1']
    #allocation8 [shape = 's32[1]{0}', space=sflag, size = 0x4, scoped, tag = 'scoped memory for tpu_custom_call.1']
    #allocation9 [shape = 'u8[512]{0}', space=smem, size = 0x200, scoped, tag = 'input window, operand 1, single buffered']
    #allocation10 [shape = 'u8[16384]{0}', space=vmem, size = 0x4000, scoped, tag = 'output window, operand 0, single buffered']
    %9 = vsyncpa [#allocation6], 0
    %10 = vsyncpa [#allocation8], 0
    %11 = vsyncpa [#allocation7], 0
    // Predicated region
    $region2: #{tpu_custom_call.1} parent=1 // pred_check
      _
    $region3: #{tpu_custom_call.1} parent=1 // pred_check_branch
      %13 = sbr.rel (0) target = $region5
    $region4: #{tpu_custom_call.1} parent=1 // pred_region
      %s15 = ssub.s32 8192, 8192
      %16 = vsyncadd [#allocation6], %s15
      %s17 = sshll.u32 [#allocation5], 4
      %s18 = int_to_ptr.vmem [resolvable:$true] %s17
      %23 = dma.hbm_to_vmem [thread:$0]  %s0, 8192, %s18, [#allocation6], 128, 128, 8
    $region5: #{tpu_custom_call.1} parent=1 // pred_fallthru
      _
    // Predicated region
    $region6: #{tpu_custom_call.1} parent=1 // pred_check
      _
    $region7: #{tpu_custom_call.1} parent=1 // pred_check_branch
      %25 = sbr.rel (0) target = $region9
    $region8: #{tpu_custom_call.1} parent=1 // pred_region
      %s27 = ssub.s32 16, 16
      %28 = vsyncadd [#allocation8], %s27
      %s30 = sshll.u32 %s1, 4
      %s31 = int_to_ptr.vmem [resolvable:$true] %s30
      %33 = dma.vmem_to_smem %s31, 16, [#allocation9], [#allocation8]
    $region9: #{tpu_custom_call.1} parent=1 // pred_fallthru
      _
    // Predicated region
    $region10: #{tpu_custom_call.1} parent=1 // pred_check
      _
    $region11: #{tpu_custom_call.1} parent=1 // pred_check_branch
      %35 = sbr.rel (0) target = $region13
    $region12: #{tpu_custom_call.1} parent=1 // pred_region
      _
    $region13: #{tpu_custom_call.1} parent=1 // pred_fallthru
      _
    // Predicated region
    $region14: #{tpu_custom_call.1} parent=1 // pred_check
      _
    $region15: #{tpu_custom_call.1} parent=1 // pred_check_branch
      %37 = sbr.rel (0) target = $region17
    $region16: #{tpu_custom_call.1} parent=1 // pred_region
      %38 = dma.done [#allocation6], 8192
    $region17: #{tpu_custom_call.1} parent=1 // pred_fallthru
      _
    // Predicated region
    $region18: #{tpu_custom_call.1} parent=1 // pred_check
      _
    $region19: #{tpu_custom_call.1} parent=1 // pred_check_branch
      %40 = sbr.rel (0) target = $region21
    $region20: #{tpu_custom_call.1} parent=1 // pred_region
      %41 = dma.done [#allocation8], 16
    $region21: #{tpu_custom_call.1} parent=1 // pred_fallthru
      _
    %42 = sfence
    %vm43 = vcmask 818176
    %44 = vst.msk [vmem:[#allocation2] sm:$0xff] %vm43, 0.0
    %45 = vst.msk [vmem:[#allocation2 + $0x8] sm:$0xff] %vm43, 0.0
    %46 = vst.msk [vmem:[#allocation2 + $0x10] sm:$0xff] %vm43, 0.0
    %47 = vst.msk [vmem:[#allocation2 + $0x18] sm:$0xff] %vm43, 0.0
    %48 = vst.msk [vmem:[#allocation2 + $0x20] sm:$0xff] %vm43, 0.0
    %49 = vst.msk [vmem:[#allocation2 + $0x28] sm:$0xff] %vm43, 0.0
    %50 = vst.msk [vmem:[#allocation2 + $0x30] sm:$0xff] %vm43, 0.0
    %vm51 = vcmask 811008
    %52 = vst.msk [vmem:[#allocation2 + $0x38] sm:$0x1] %vm51, 0.0
    %53 = vst.msk [vmem:[#allocation2 + $0x40] sm:$0xff] %vm43, 0.0
    %54 = vst.msk [vmem:[#allocation2 + $0x48] sm:$0xff] %vm43, 0.0
    %55 = vst.msk [vmem:[#allocation2 + $0x50] sm:$0xff] %vm43, 0.0
    %56 = vst.msk [vmem:[#allocation2 + $0x58] sm:$0xff] %vm43, 0.0
    %57 = vst.msk [vmem:[#allocation2 + $0x60] sm:$0xff] %vm43, 0.0
    %58 = vst.msk [vmem:[#allocation2 + $0x68] sm:$0xff] %vm43, 0.0
    %59 = vst.msk [vmem:[#allocation2 + $0x70] sm:$0xff] %vm43, 0.0
    %60 = vst.msk [vmem:[#allocation2 + $0x78] sm:$0x1] %vm51, 0.0
    %v61 = vld [vmem:[#allocation5] sm:$0xff]
    %v62 = vld [vmem:[#allocation5 + $0x8] sm:$0xff]
    %v63 = vld [vmem:[#allocation5 + $0x10] sm:$0xff]
    %v64 = vld [vmem:[#allocation5 + $0x18] sm:$0xff]
    %s65 = scalar_lea.vmem [#allocation5], 32
    %v66 = vld [vmem:[%s65] sm:$0xff]
    %v67 = vld [vmem:[%s65 + $0x8] sm:$0xff]
    %v68 = vld [vmem:[%s65 + $0x10] sm:$0xff]
    %v69 = vld [vmem:[%s65 + $0x18] sm:$0xff]
    %v70 = vadd.f32 %v61, %v66
    %v71 = vadd.f32 %v62, %v67
    %v72 = vadd.f32 %v63, %v68
    %v73 = vadd.f32 %v64, %v69
    %v74 = vmax.f32 %v61, %v66
    %v75 = vmax.f32 %v62, %v67
    %v76 = vmax.f32 %v63, %v68
    %v77 = vmax.f32 %v64, %v69
    %s78 = scalar_lea.vmem [#allocation5], 64
    %v79 = vld [vmem:[%s78] sm:$0xff]
    %v80 = vld [vmem:[%s78 + $0x8] sm:$0xff]
    %v81 = vld [vmem:[%s78 + $0x10] sm:$0xff]
    %v82 = vld [vmem:[%s78 + $0x18] sm:$0xff]
    %v83 = vadd.f32 %v70, %v79
    %v84 = vadd.f32 %v71, %v80
    %v85 = vadd.f32 %v72, %v81
    %v86 = vadd.f32 %v73, %v82
    %v87 = vmax.f32 %v74, %v79
    %v88 = vmax.f32 %v75, %v80
    %v89 = vmax.f32 %v76, %v81
    %v90 = vmax.f32 %v77, %v82
    %s91 = scalar_lea.vmem [#allocation5], 96
    %v92 = vld [vmem:[%s91] sm:$0xff]
    %v93 = vld [vmem:[%s91 + $0x8] sm:$0xff]
    %v94 = vld [vmem:[%s91 + $0x10] sm:$0xff]
    %v95 = vld [vmem:[%s91 + $0x18] sm:$0xff]
    %v96 = vadd.f32 %v83, %v92
    %v97 = vadd.f32 %v84, %v93
    %v98 = vadd.f32 %v85, %v94
    %v99 = vadd.f32 %v86, %v95
    %v100 = vmax.f32 %v87, %v92
    %v101 = vmax.f32 %v88, %v93
    %v102 = vmax.f32 %v89, %v94
    %v103 = vmax.f32 %v90, %v95
    %s104 = scalar_lea.vmem [#allocation5], 128
    %v105 = vld [vmem:[%s104] sm:$0xff]
    %v106 = vld [vmem:[%s104 + $0x8] sm:$0xff]
    %v107 = vld [vmem:[%s104 + $0x10] sm:$0xff]
    %v108 = vld [vmem:[%s104 + $0x18] sm:$0xff]
    %v109 = vadd.f32 %v96, %v105
    %v110 = vadd.f32 %v97, %v106
    %v111 = vadd.f32 %v98, %v107
    %v112 = vadd.f32 %v99, %v108
    %v113 = vmax.f32 %v100, %v105
    %v114 = vmax.f32 %v101, %v106
    %v115 = vmax.f32 %v102, %v107
    %v116 = vmax.f32 %v103, %v108
    %s117 = scalar_lea.vmem [#allocation5], 160
    %v118 = vld [vmem:[%s117] sm:$0xff]
    %v119 = vld [vmem:[%s117 + $0x8] sm:$0xff]
    %v120 = vld [vmem:[%s117 + $0x10] sm:$0xff]
    %v121 = vld [vmem:[%s117 + $0x18] sm:$0xff]
    %v122 = vadd.f32 %v109, %v118
    %v123 = vadd.f32 %v110, %v119
    %v124 = vadd.f32 %v111, %v120
    %v125 = vadd.f32 %v112, %v121
    %v126 = vmax.f32 %v113, %v118
    %v127 = vmax.f32 %v114, %v119
    %v128 = vmax.f32 %v115, %v120
    %v129 = vmax.f32 %v116, %v121
    %s130 = scalar_lea.vmem [#allocation5], 192
    %v131 = vld [vmem:[%s130] sm:$0xff]
    %v132 = vld [vmem:[%s130 + $0x8] sm:$0xff]
    %v133 = vld [vmem:[%s130 + $0x10] sm:$0xff]
    %v134 = vld [vmem:[%s130 + $0x18] sm:$0xff]
    %v135 = vadd.f32 %v122, %v131
    %v136 = vadd.f32 %v123, %v132
    %v137 = vadd.f32 %v124, %v133
    %v138 = vadd.f32 %v125, %v134
    %v139 = vmax.f32 %v126, %v131
    %v140 = vmax.f32 %v127, %v132
    %v141 = vmax.f32 %v128, %v133
    %v142 = vmax.f32 %v129, %v134
    %s143 = scalar_lea.vmem [#allocation5], 224
    %v144 = vld [vmem:[%s143] sm:$0xff]
    %v145 = vld [vmem:[%s143 + $0x8] sm:$0xff]
    %v146 = vld [vmem:[%s143 + $0x10] sm:$0xff]
    %v147 = vld [vmem:[%s143 + $0x18] sm:$0xff]
    %v148 = vadd.f32 %v135, %v144
    %v149 = vadd.f32 %v136, %v145
    %v150 = vadd.f32 %v137, %v146
    %v151 = vadd.f32 %v138, %v147
    %v152 = vmax.f32 %v139, %v144
    %v153 = vmax.f32 %v140, %v145
    %v154 = vmax.f32 %v141, %v146
    %v155 = vmax.f32 %v142, %v147
    %v156 = vmul.f32 %v148, 0.125
    %v157 = vmul.f32 %v149, 0.125
    %v158 = vmul.f32 %v150, 0.125
    %v159 = vmul.f32 %v151, 0.125
    %164 = vrot.lane.b32.xlu0 %v156, 9
    %v165 = vpop.permute.xlu0 %164
    %166 = vrot.lane.b32.xlu0 %v157, 9
    %v167 = vpop.permute.xlu0 %166
    %168 = vrot.lane.b32.xlu0 %v158, 9
    %v169 = vpop.permute.xlu0 %168
    %170 = vrot.lane.b32.xlu0 %v159, 9
    %v171 = vpop.permute.xlu0 %170
    %vm176 = vcmask 334920
    %177 = vst.msk [vmem:[#allocation2 + $0x10] sm:$0xff] %vm176, %v165
    %178 = vst.msk [vmem:[#allocation2 + $0x18] sm:$0xff] %vm176, %v167
    %179 = vst.msk [vmem:[#allocation2 + $0x20] sm:$0xff] %vm176, %v169
    %180 = vst.msk [vmem:[#allocation2 + $0x28] sm:$0xff] %vm176, %v171
    %185 = vrot.lane.b32.xlu0 %v152, 9
    %v186 = vpop.permute.xlu0 %185
    %187 = vrot.lane.b32.xlu0 %v153, 9
    %v188 = vpop.permute.xlu0 %187
    %189 = vrot.lane.b32.xlu0 %v154, 9
    %v190 = vpop.permute.xlu0 %189
    %191 = vrot.lane.b32.xlu0 %v155, 9
    %v192 = vpop.permute.xlu0 %191
    %s197 = scalar_lea.vmem [#allocation2], 64
    %198 = vst.msk [vmem:[%s197 + $0x10] sm:$0xff] %vm176, %v186
    %199 = vst.msk [vmem:[%s197 + $0x18] sm:$0xff] %vm176, %v188
    %200 = vst.msk [vmem:[%s197 + $0x20] sm:$0xff] %vm176, %v190
    %201 = vst.msk [vmem:[%s197 + $0x28] sm:$0xff] %vm176, %v192
    %s202 = scalar_lea.vmem [#allocation5], 256
    %v203 = vld [vmem:[%s202] sm:$0xff]
    %v204 = vld [vmem:[%s202 + $0x8] sm:$0xff]
    %v205 = vld [vmem:[%s202 + $0x10] sm:$0xff]
    %v206 = vld [vmem:[%s202 + $0x18] sm:$0xff]
    %s207 = scalar_lea.vmem [#allocation5], 288
    %v208 = vld [vmem:[%s207] sm:$0xff]
    %v209 = vld [vmem:[%s207 + $0x8] sm:$0xff]
    %v210 = vld [vmem:[%s207 + $0x10] sm:$0xff]
    %v211 = vld [vmem:[%s207 + $0x18] sm:$0xff]
    %v212 = vadd.f32 %v203, %v208
    %v213 = vadd.f32 %v204, %v209
    %v214 = vadd.f32 %v205, %v210
    %v215 = vadd.f32 %v206, %v211
    %v216 = vmax.f32 %v203, %v208
    %v217 = vmax.f32 %v204, %v209
    %v218 = vmax.f32 %v205, %v210
    %v219 = vmax.f32 %v206, %v211
    %s220 = scalar_lea.vmem [#allocation5], 320
    %v221 = vld [vmem:[%s220] sm:$0xff]
    %v222 = vld [vmem:[%s220 + $0x8] sm:$0xff]
    %v223 = vld [vmem:[%s220 + $0x10] sm:$0xff]
    %v224 = vld [vmem:[%s220 + $0x18] sm:$0xff]
    %v225 = vadd.f32 %v212, %v221
    %v226 = vadd.f32 %v213, %v222
    %v227 = vadd.f32 %v214, %v223
    %v228 = vadd.f32 %v215, %v224
    %v229 = vmax.f32 %v216, %v221
    %v230 = vmax.f32 %v217, %v222
    %v231 = vmax.f32 %v218, %v223
    %v232 = vmax.f32 %v219, %v224
    %s233 = scalar_lea.vmem [#allocation5], 352
    %v234 = vld [vmem:[%s233] sm:$0xff]
    %v235 = vld [vmem:[%s233 + $0x8] sm:$0xff]
    %v236 = vld [vmem:[%s233 + $0x10] sm:$0xff]
    %v237 = vld [vmem:[%s233 + $0x18] sm:$0xff]
    %v238 = vadd.f32 %v225, %v234
    %v239 = vadd.f32 %v226, %v235
    %v240 = vadd.f32 %v227, %v236
    %v241 = vadd.f32 %v228, %v237
    %v242 = vmax.f32 %v229, %v234
    %v243 = vmax.f32 %v230, %v235
    %v244 = vmax.f32 %v231, %v236
    %v245 = vmax.f32 %v232, %v237
    %s246 = scalar_lea.vmem [#allocation5], 384
    %v247 = vld [vmem:[%s246] sm:$0xff]
    %v248 = vld [vmem:[%s246 + $0x8] sm:$0xff]
    %v249 = vld [vmem:[%s246 + $0x10] sm:$0xff]
    %v250 = vld [vmem:[%s246 + $0x18] sm:$0xff]
    %v251 = vadd.f32 %v238, %v247
    %v252 = vadd.f32 %v239, %v248
    %v253 = vadd.f32 %v240, %v249
    %v254 = vadd.f32 %v241, %v250
    %v255 = vmax.f32 %v242, %v247
    %v256 = vmax.f32 %v243, %v248
    %v257 = vmax.f32 %v244, %v249
    %v258 = vmax.f32 %v245, %v250
    %s259 = scalar_lea.vmem [#allocation5], 416
    %v260 = vld [vmem:[%s259] sm:$0xff]
    %v261 = vld [vmem:[%s259 + $0x8] sm:$0xff]
    %v262 = vld [vmem:[%s259 + $0x10] sm:$0xff]
    %v263 = vld [vmem:[%s259 + $0x18] sm:$0xff]
    %v264 = vadd.f32 %v251, %v260
    %v265 = vadd.f32 %v252, %v261
    %v266 = vadd.f32 %v253, %v262
    %v267 = vadd.f32 %v254, %v263
    %v268 = vmax.f32 %v255, %v260
    %v269 = vmax.f32 %v256, %v261
    %v270 = vmax.f32 %v257, %v262
    %v271 = vmax.f32 %v258, %v263
    %s272 = scalar_lea.vmem [#allocation5], 448
    %v273 = vld [vmem:[%s272] sm:$0xff]
    %v274 = vld [vmem:[%s272 + $0x8] sm:$0xff]
    %v275 = vld [vmem:[%s272 + $0x10] sm:$0xff]
    %v276 = vld [vmem:[%s272 + $0x18] sm:$0xff]
    %v277 = vadd.f32 %v264, %v273
    %v278 = vadd.f32 %v265, %v274
    %v279 = vadd.f32 %v266, %v275
    %v280 = vadd.f32 %v267, %v276
    %v281 = vmax.f32 %v268, %v273
    %v282 = vmax.f32 %v269, %v274
    %v283 = vmax.f32 %v270, %v275
    %v284 = vmax.f32 %v271, %v276
    %s285 = scalar_lea.vmem [#allocation5], 480
    %v286 = vld [vmem:[%s285] sm:$0xff]
    %v287 = vld [vmem:[%s285 + $0x8] sm:$0xff]
    %v288 = vld [vmem:[%s285 + $0x10] sm:$0xff]
    %v289 = vld [vmem:[%s285 + $0x18] sm:$0xff]
    %v290 = vadd.f32 %v277, %v286
    %v291 = vadd.f32 %v278, %v287
    %v292 = vadd.f32 %v279, %v288
    %v293 = vadd.f32 %v280, %v289
    %v294 = vmax.f32 %v281, %v286
    %v295 = vmax.f32 %v282, %v287
    %v296 = vmax.f32 %v283, %v288
    %v297 = vmax.f32 %v284, %v289
    %v298 = vmul.f32 %v290, 0.125
    %v299 = vmul.f32 %v291, 0.125
    %v300 = vmul.f32 %v292, 0.125
    %v301 = vmul.f32 %v293, 0.125
    %306 = vrot.lane.b32.xlu0 %v298, 59
    %v307 = vpop.permute.xlu0 %306
    %308 = vrot.lane.b32.xlu0 %v299, 59
    %v309 = vpop.permute.xlu0 %308
    %310 = vrot.lane.b32.xlu0 %v300, 59
    %v311 = vpop.permute.xlu0 %310
    %312 = vrot.lane.b32.xlu0 %v301, 59
    %v313 = vpop.permute.xlu0 %312
    %vm318 = vcmask 744920
    %319 = vst.msk [vmem:[#allocation2 + $0x10] sm:$0xff] %vm318, %v307
    %320 = vst.msk [vmem:[#allocation2 + $0x18] sm:$0xff] %vm318, %v309
    %321 = vst.msk [vmem:[#allocation2 + $0x20] sm:$0xff] %vm318, %v311
    %322 = vst.msk [vmem:[#allocation2 + $0x28] sm:$0xff] %vm318, %v313
    %327 = vrot.lane.b32.xlu0 %v294, 59
    %v328 = vpop.permute.xlu0 %327
    %329 = vrot.lane.b32.xlu0 %v295, 59
    %v330 = vpop.permute.xlu0 %329
    %331 = vrot.lane.b32.xlu0 %v296, 59
    %v332 = vpop.permute.xlu0 %331
    %333 = vrot.lane.b32.xlu0 %v297, 59
    %v334 = vpop.permute.xlu0 %333
    %339 = vst.msk [vmem:[%s197 + $0x10] sm:$0xff] %vm318, %v328
    %340 = vst.msk [vmem:[%s197 + $0x18] sm:$0xff] %vm318, %v330
    %341 = vst.msk [vmem:[%s197 + $0x20] sm:$0xff] %vm318, %v332
    %342 = vst.msk [vmem:[%s197 + $0x28] sm:$0xff] %vm318, %v334
    %v343 = vld [vmem:[#allocation2] sm:$0xff]
    %v344 = vld [vmem:[#allocation2 + $0x8] sm:$0xff]
    %v345 = vld [vmem:[#allocation2 + $0x10] sm:$0xff]
    %v346 = vld [vmem:[#allocation2 + $0x18] sm:$0xff]
    %v347 = vld [vmem:[#allocation2 + $0x20] sm:$0xff]
    %v348 = vld [vmem:[#allocation2 + $0x28] sm:$0xff]
    %v349 = vld [vmem:[#allocation2 + $0x30] sm:$0xff]
    %v350 = vld [vmem:[#allocation2 + $0x38] sm:$0x1]
    %vm351 = vcmask 261120
    %352 = vst.msk [vmem:[#allocation3] sm:$0xff] %vm351, %v343
    %353 = vst.msk [vmem:[#allocation3 + $0x8] sm:$0xff] %vm351, %v344
    %354 = vst.msk [vmem:[#allocation3 + $0x10] sm:$0xff] %vm351, %v345
    %355 = vst.msk [vmem:[#allocation3 + $0x18] sm:$0xff] %vm351, %v346
    %356 = vst.msk [vmem:[#allocation3 + $0x20] sm:$0xff] %vm351, %v347
    %357 = vst.msk [vmem:[#allocation3 + $0x28] sm:$0xff] %vm351, %v348
    %358 = vst.msk [vmem:[#allocation3 + $0x30] sm:$0xff] %vm351, %v349
    %vm359 = vcmask 253952
    %360 = vst.msk [vmem:[#allocation3 + $0x38] sm:$0x1] %vm359, %v350
    %v361 = vld [vmem:[#allocation2] sm:$0xff]
    %v362 = vld [vmem:[#allocation2 + $0x8] sm:$0xff]
    %v363 = vld [vmem:[#allocation2 + $0x10] sm:$0xff]
    %v364 = vld [vmem:[#allocation2 + $0x18] sm:$0xff]
    %v365 = vld [vmem:[#allocation2 + $0x20] sm:$0xff]
    %v366 = vld [vmem:[#allocation2 + $0x28] sm:$0xff]
    %v367 = vld [vmem:[#allocation2 + $0x30] sm:$0xff]
    %v368 = vld [vmem:[#allocation2 + $0x38] sm:$0x1]
    %377 = vrot.lane.b32.xlu0 %v361, 110
    %v378 = vpop.permute.xlu0 %377
    %379 = vrot.lane.b32.xlu0 %v362, 110
    %v380 = vpop.permute.xlu0 %379
    %381 = vrot.lane.b32.xlu0 %v363, 110
    %v382 = vpop.permute.xlu0 %381
    %383 = vrot.lane.b32.xlu0 %v364, 110
    %v384 = vpop.permute.xlu0 %383
    %385 = vrot.lane.b32.xlu0 %v365, 110
    %v386 = vpop.permute.xlu0 %385
    %387 = vrot.lane.b32.xlu0 %v366, 110
    %v388 = vpop.permute.xlu0 %387
    %389 = vrot.lane.b32.xlu0 %v367, 110
    %v390 = vpop.permute.xlu0 %389
    %391 = vrot.lane.b32.xlu0 %v368, 110
    %v392 = vpop.permute.xlu0 %391
    %vm401 = vcmask 523520
    %402 = vst.msk [vmem:[#allocation3] sm:$0xff] %vm401, %v378
    %403 = vst.msk [vmem:[#allocation3 + $0x8] sm:$0xff] %vm401, %v380
    %404 = vst.msk [vmem:[#allocation3 + $0x10] sm:$0xff] %vm401, %v382
    %405 = vst.msk [vmem:[#allocation3 + $0x18] sm:$0xff] %vm401, %v384
    %406 = vst.msk [vmem:[#allocation3 + $0x20] sm:$0xff] %vm401, %v386
    %407 = vst.msk [vmem:[#allocation3 + $0x28] sm:$0xff] %vm401, %v388
    %408 = vst.msk [vmem:[#allocation3 + $0x30] sm:$0xff] %vm401, %v390
    %vm409 = vcmask 516352
    %410 = vst.msk [vmem:[#allocation3 + $0x38] sm:$0x1] %vm409, %v392
    %v411 = vld [vmem:[#allocation2] sm:$0xff]
    %v412 = vld [vmem:[#allocation2 + $0x8] sm:$0xff]
    %v413 = vld [vmem:[#allocation2 + $0x10] sm:$0xff]
    %v414 = vld [vmem:[#allocation2 + $0x18] sm:$0xff]
    %v415 = vld [vmem:[#allocation2 + $0x20] sm:$0xff]
    %v416 = vld [vmem:[#allocation2 + $0x28] sm:$0xff]
    %v417 = vld [vmem:[#allocation2 + $0x30] sm:$0xff]
    %v418 = vld [vmem:[#allocation2 + $0x38] sm:$0x1]
    %427 = vrot.lane.b32.xlu0 %v411, 125
    %v428 = vpop.permute.xlu0 %427
    %429 = vrot.lane.b32.xlu0 %v412, 125
    %v430 = vpop.permute.xlu0 %429
    %431 = vrot.lane.b32.xlu0 %v413, 125
    %v432 = vpop.permute.xlu0 %431
    %433 = vrot.lane.b32.xlu0 %v414, 125
    %v434 = vpop.permute.xlu0 %433
    %435 = vrot.lane.b32.xlu0 %v415, 125
    %v436 = vpop.permute.xlu0 %435
    %437 = vrot.lane.b32.xlu0 %v416, 125
    %v438 = vpop.permute.xlu0 %437
    %439 = vrot.lane.b32.xlu0 %v417, 125
    %v440 = vpop.permute.xlu0 %439
    %441 = vrot.lane.b32.xlu0 %v418, 125
    %v442 = vpop.permute.xlu0 %441
    %s451 = scalar_lea.vmem [#allocation3], 64
    %452 = vst.msk [vmem:[%s451] sm:$0xff] %vm351, %v428
    %453 = vst.msk [vmem:[%s451 + $0x8] sm:$0xff] %vm351, %v430
    %454 = vst.msk [vmem:[%s451 + $0x10] sm:$0xff] %vm351, %v432
    %455 = vst.msk [vmem:[%s451 + $0x18] sm:$0xff] %vm351, %v434
    %456 = vst.msk [vmem:[%s451 + $0x20] sm:$0xff] %vm351, %v436
    %457 = vst.msk [vmem:[%s451 + $0x28] sm:$0xff] %vm351, %v438
    %458 = vst.msk [vmem:[%s451 + $0x30] sm:$0xff] %vm351, %v440
    %459 = vst.msk [vmem:[%s451 + $0x38] sm:$0x1] %vm359, %v442
    %v460 = vld [vmem:[#allocation2] sm:$0xff]
    %v461 = vld [vmem:[#allocation2 + $0x8] sm:$0xff]
    %v462 = vld [vmem:[#allocation2 + $0x10] sm:$0xff]
    %v463 = vld [vmem:[#allocation2 + $0x18] sm:$0xff]
    %v464 = vld [vmem:[#allocation2 + $0x20] sm:$0xff]
    %v465 = vld [vmem:[#allocation2 + $0x28] sm:$0xff]
    %v466 = vld [vmem:[#allocation2 + $0x30] sm:$0xff]
    %v467 = vld [vmem:[#allocation2 + $0x38] sm:$0x1]
    %476 = vrot.lane.b32.xlu0 %v460, 107
    %v477 = vpop.permute.xlu0 %476
    %478 = vrot.lane.b32.xlu0 %v461, 107
    %v479 = vpop.permute.xlu0 %478
    %480 = vrot.lane.b32.xlu0 %v462, 107
    %v481 = vpop.permute.xlu0 %480
    %482 = vrot.lane.b32.xlu0 %v463, 107
    %v483 = vpop.permute.xlu0 %482
    %484 = vrot.lane.b32.xlu0 %v464, 107
    %v485 = vpop.permute.xlu0 %484
    %486 = vrot.lane.b32.xlu0 %v465, 107
    %v487 = vpop.permute.xlu0 %486
    %488 = vrot.lane.b32.xlu0 %v466, 107
    %v489 = vpop.permute.xlu0 %488
    %490 = vrot.lane.b32.xlu0 %v467, 107
    %v491 = vpop.permute.xlu0 %490
    %500 = vst.msk [vmem:[%s451] sm:$0xff] %vm401, %v477
    %501 = vst.msk [vmem:[%s451 + $0x8] sm:$0xff] %vm401, %v479
    %502 = vst.msk [vmem:[%s451 + $0x10] sm:$0xff] %vm401, %v481
    %503 = vst.msk [vmem:[%s451 + $0x18] sm:$0xff] %vm401, %v483
    %504 = vst.msk [vmem:[%s451 + $0x20] sm:$0xff] %vm401, %v485
    %505 = vst.msk [vmem:[%s451 + $0x28] sm:$0xff] %vm401, %v487
    %506 = vst.msk [vmem:[%s451 + $0x30] sm:$0xff] %vm401, %v489
    %507 = vst.msk [vmem:[%s451 + $0x38] sm:$0x1] %vm409, %v491
    %v508 = vld [vmem:[#allocation2] sm:$0xff]
    %v509 = vld [vmem:[#allocation2 + $0x8] sm:$0xff]
    %v510 = vld [vmem:[#allocation2 + $0x10] sm:$0xff]
    %v511 = vld [vmem:[#allocation2 + $0x18] sm:$0xff]
    %v512 = vld [vmem:[#allocation2 + $0x20] sm:$0xff]
    %v513 = vld [vmem:[#allocation2 + $0x28] sm:$0xff]
    %v514 = vld [vmem:[#allocation2 + $0x30] sm:$0xff]
    %v515 = vld [vmem:[#allocation2 + $0x38] sm:$0x1]
    %524 = vrot.lane.b32.xlu0 %v508, 122
    %v525 = vpop.permute.xlu0 %524
    %526 = vrot.lane.b32.xlu0 %v509, 122
    %v527 = vpop.permute.xlu0 %526
    %528 = vrot.lane.b32.xlu0 %v510, 122
    %v529 = vpop.permute.xlu0 %528
    %530 = vrot.lane.b32.xlu0 %v511, 122
    %v531 = vpop.permute.xlu0 %530
    %532 = vrot.lane.b32.xlu0 %v512, 122
    %v533 = vpop.permute.xlu0 %532
    %534 = vrot.lane.b32.xlu0 %v513, 122
    %v535 = vpop.permute.xlu0 %534
    %536 = vrot.lane.b32.xlu0 %v514, 122
    %v537 = vpop.permute.xlu0 %536
    %538 = vrot.lane.b32.xlu0 %v515, 122
    %v539 = vpop.permute.xlu0 %538
    %s548 = scalar_lea.vmem [#allocation3], 128
    %549 = vst.msk [vmem:[%s548] sm:$0xff] %vm351, %v525
    %550 = vst.msk [vmem:[%s548 + $0x8] sm:$0xff] %vm351, %v527
    %551 = vst.msk [vmem:[%s548 + $0x10] sm:$0xff] %vm351, %v529
    %552 = vst.msk [vmem:[%s548 + $0x18] sm:$0xff] %vm351, %v531
    %553 = vst.msk [vmem:[%s548 + $0x20] sm:$0xff] %vm351, %v533
    %554 = vst.msk [vmem:[%s548 + $0x28] sm:$0xff] %vm351, %v535
    %555 = vst.msk [vmem:[%s548 + $0x30] sm:$0xff] %vm351, %v537
    %556 = vst.msk [vmem:[%s548 + $0x38] sm:$0x1] %vm359, %v539
    %v557 = vld [vmem:[#allocation2] sm:$0xff]
    %v558 = vld [vmem:[#allocation2 + $0x8] sm:$0xff]
    %v559 = vld [vmem:[#allocation2 + $0x10] sm:$0xff]
    %v560 = vld [vmem:[#allocation2 + $0x18] sm:$0xff]
    %v561 = vld [vmem:[#allocation2 + $0x20] sm:$0xff]
    %v562 = vld [vmem:[#allocation2 + $0x28] sm:$0xff]
    %v563 = vld [vmem:[#allocation2 + $0x30] sm:$0xff]
    %v564 = vld [vmem:[#allocation2 + $0x38] sm:$0x1]
    %573 = vrot.lane.b32.xlu0 %v557, 104
    %v574 = vpop.permute.xlu0 %573
    %575 = vrot.lane.b32.xlu0 %v558, 104
    %v576 = vpop.permute.xlu0 %575
    %577 = vrot.lane.b32.xlu0 %v559, 104
    %v578 = vpop.permute.xlu0 %577
    %579 = vrot.lane.b32.xlu0 %v560, 104
    %v580 = vpop.permute.xlu0 %579
    %581 = vrot.lane.b32.xlu0 %v561, 104
    %v582 = vpop.permute.xlu0 %581
    %583 = vrot.lane.b32.xlu0 %v562, 104
    %v584 = vpop.permute.xlu0 %583
    %585 = vrot.lane.b32.xlu0 %v563, 104
    %v586 = vpop.permute.xlu0 %585
    %587 = vrot.lane.b32.xlu0 %v564, 104
    %v588 = vpop.permute.xlu0 %587
    %597 = vst.msk [vmem:[%s548] sm:$0xff] %vm401, %v574
    %598 = vst.msk [vmem:[%s548 + $0x8] sm:$0xff] %vm401, %v576
    %599 = vst.msk [vmem:[%s548 + $0x10] sm:$0xff] %vm401, %v578
    %600 = vst.msk [vmem:[%s548 + $0x18] sm:$0xff] %vm401, %v580
    %601 = vst.msk [vmem:[%s548 + $0x20] sm:$0xff] %vm401, %v582
    %602 = vst.msk [vmem:[%s548 + $0x28] sm:$0xff] %vm401, %v584
    %603 = vst.msk [vmem:[%s548 + $0x30] sm:$0xff] %vm401, %v586
    %604 = vst.msk [vmem:[%s548 + $0x38] sm:$0x1] %vm409, %v588
    %v605 = vld [vmem:[#allocation2] sm:$0xff]
    %v606 = vld [vmem:[#allocation2 + $0x8] sm:$0xff]
    %v607 = vld [vmem:[#allocation2 + $0x10] sm:$0xff]
    %v608 = vld [vmem:[#allocation2 + $0x18] sm:$0xff]
    %v609 = vld [vmem:[#allocation2 + $0x20] sm:$0xff]
    %v610 = vld [vmem:[#allocation2 + $0x28] sm:$0xff]
    %v611 = vld [vmem:[#allocation2 + $0x30] sm:$0xff]
    %v612 = vld [vmem:[#allocation2 + $0x38] sm:$0x1]
    %621 = vrot.lane.b32.xlu0 %v605, 119
    %v622 = vpop.permute.xlu0 %621
    %623 = vrot.lane.b32.xlu0 %v606, 119
    %v624 = vpop.permute.xlu0 %623
    %625 = vrot.lane.b32.xlu0 %v607, 119
    %v626 = vpop.permute.xlu0 %625
    %627 = vrot.lane.b32.xlu0 %v608, 119
    %v628 = vpop.permute.xlu0 %627
    %629 = vrot.lane.b32.xlu0 %v609, 119
    %v630 = vpop.permute.xlu0 %629
    %631 = vrot.lane.b32.xlu0 %v610, 119
    %v632 = vpop.permute.xlu0 %631
    %633 = vrot.lane.b32.xlu0 %v611, 119
    %v634 = vpop.permute.xlu0 %633
    %635 = vrot.lane.b32.xlu0 %v612, 119
    %v636 = vpop.permute.xlu0 %635
    %s645 = scalar_lea.vmem [#allocation3], 192
    %646 = vst.msk [vmem:[%s645] sm:$0xff] %vm351, %v622
    %647 = vst.msk [vmem:[%s645 + $0x8] sm:$0xff] %vm351, %v624
    %648 = vst.msk [vmem:[%s645 + $0x10] sm:$0xff] %vm351, %v626
    %649 = vst.msk [vmem:[%s645 + $0x18] sm:$0xff] %vm351, %v628
    %650 = vst.msk [vmem:[%s645 + $0x20] sm:$0xff] %vm351, %v630
    %651 = vst.msk [vmem:[%s645 + $0x28] sm:$0xff] %vm351, %v632
    %652 = vst.msk [vmem:[%s645 + $0x30] sm:$0xff] %vm351, %v634
    %653 = vst.msk [vmem:[%s645 + $0x38] sm:$0x1] %vm359, %v636
    %v654 = vld [vmem:[#allocation2] sm:$0xff]
    %v655 = vld [vmem:[#allocation2 + $0x8] sm:$0xff]
    %v656 = vld [vmem:[#allocation2 + $0x10] sm:$0xff]
    %v657 = vld [vmem:[#allocation2 + $0x18] sm:$0xff]
    %v658 = vld [vmem:[#allocation2 + $0x20] sm:$0xff]
    %v659 = vld [vmem:[#allocation2 + $0x28] sm:$0xff]
    %v660 = vld [vmem:[#allocation2 + $0x30] sm:$0xff]
    %v661 = vld [vmem:[#allocation2 + $0x38] sm:$0x1]
    %670 = vrot.lane.b32.xlu0 %v654, 101
    %v671 = vpop.permute.xlu0 %670
    %672 = vrot.lane.b32.xlu0 %v655, 101
    %v673 = vpop.permute.xlu0 %672
    %674 = vrot.lane.b32.xlu0 %v656, 101
    %v675 = vpop.permute.xlu0 %674
    %676 = vrot.lane.b32.xlu0 %v657, 101
    %v677 = vpop.permute.xlu0 %676
    %678 = vrot.lane.b32.xlu0 %v658, 101
    %v679 = vpop.permute.xlu0 %678
    %680 = vrot.lane.b32.xlu0 %v659, 101
    %v681 = vpop.permute.xlu0 %680
    %682 = vrot.lane.b32.xlu0 %v660, 101
    %v683 = vpop.permute.xlu0 %682
    %684 = vrot.lane.b32.xlu0 %v661, 101
    %v685 = vpop.permute.xlu0 %684
    %694 = vst.msk [vmem:[%s645] sm:$0xff] %vm401, %v671
    %695 = vst.msk [vmem:[%s645 + $0x8] sm:$0xff] %vm401, %v673
    %696 = vst.msk [vmem:[%s645 + $0x10] sm:$0xff] %vm401, %v675
    %697 = vst.msk [vmem:[%s645 + $0x18] sm:$0xff] %vm401, %v677
    %698 = vst.msk [vmem:[%s645 + $0x20] sm:$0xff] %vm401, %v679
    %699 = vst.msk [vmem:[%s645 + $0x28] sm:$0xff] %vm401, %v681
    %700 = vst.msk [vmem:[%s645 + $0x30] sm:$0xff] %vm401, %v683
    %701 = vst.msk [vmem:[%s645 + $0x38] sm:$0x1] %vm409, %v685
    %v702 = vld [vmem:[#allocation2] sm:$0xff]
    %v703 = vld [vmem:[#allocation2 + $0x8] sm:$0xff]
    %v704 = vld [vmem:[#allocation2 + $0x10] sm:$0xff]
    %v705 = vld [vmem:[#allocation2 + $0x18] sm:$0xff]
    %v706 = vld [vmem:[#allocation2 + $0x20] sm:$0xff]
    %v707 = vld [vmem:[#allocation2 + $0x28] sm:$0xff]
    %v708 = vld [vmem:[#allocation2 + $0x30] sm:$0xff]
    %v709 = vld [vmem:[#allocation2 + $0x38] sm:$0x1]
    %718 = vrot.lane.b32.xlu0 %v702, 116
    %v719 = vpop.permute.xlu0 %718
    %720 = vrot.lane.b32.xlu0 %v703, 116
    %v721 = vpop.permute.xlu0 %720
    %722 = vrot.lane.b32.xlu0 %v704, 116
    %v723 = vpop.permute.xlu0 %722
    %724 = vrot.lane.b32.xlu0 %v705, 116
    %v725 = vpop.permute.xlu0 %724
    %726 = vrot.lane.b32.xlu0 %v706, 116
    %v727 = vpop.permute.xlu0 %726
    %728 = vrot.lane.b32.xlu0 %v707, 116
    %v729 = vpop.permute.xlu0 %728
    %730 = vrot.lane.b32.xlu0 %v708, 116
    %v731 = vpop.permute.xlu0 %730
    %732 = vrot.lane.b32.xlu0 %v709, 116
    %v733 = vpop.permute.xlu0 %732
    %s742 = scalar_lea.vmem [#allocation3], 256
    %743 = vst.msk [vmem:[%s742] sm:$0xff] %vm351, %v719
    %744 = vst.msk [vmem:[%s742 + $0x8] sm:$0xff] %vm351, %v721
    %745 = vst.msk [vmem:[%s742 + $0x10] sm:$0xff] %vm351, %v723
    %746 = vst.msk [vmem:[%s742 + $0x18] sm:$0xff] %vm351, %v725
    %747 = vst.msk [vmem:[%s742 + $0x20] sm:$0xff] %vm351, %v727
    %748 = vst.msk [vmem:[%s742 + $0x28] sm:$0xff] %vm351, %v729
    %749 = vst.msk [vmem:[%s742 + $0x30] sm:$0xff] %vm351, %v731
    %750 = vst.msk [vmem:[%s742 + $0x38] sm:$0x1] %vm359, %v733
    %v751 = vld [vmem:[#allocation2] sm:$0xff]
    %v752 = vld [vmem:[#allocation2 + $0x8] sm:$0xff]
    %v753 = vld [vmem:[#allocation2 + $0x10] sm:$0xff]
    %v754 = vld [vmem:[#allocation2 + $0x18] sm:$0xff]
    %v755 = vld [vmem:[#allocation2 + $0x20] sm:$0xff]
    %v756 = vld [vmem:[#allocation2 + $0x28] sm:$0xff]
    %v757 = vld [vmem:[#allocation2 + $0x30] sm:$0xff]
    %v758 = vld [vmem:[#allocation2 + $0x38] sm:$0x1]
    %767 = vrot.lane.b32.xlu0 %v751, 98
    %v768 = vpop.permute.xlu0 %767
    %769 = vrot.lane.b32.xlu0 %v752, 98
    %v770 = vpop.permute.xlu0 %769
    %771 = vrot.lane.b32.xlu0 %v753, 98
    %v772 = vpop.permute.xlu0 %771
    %773 = vrot.lane.b32.xlu0 %v754, 98
    %v774 = vpop.permute.xlu0 %773
    %775 = vrot.lane.b32.xlu0 %v755, 98
    %v776 = vpop.permute.xlu0 %775
    %777 = vrot.lane.b32.xlu0 %v756, 98
    %v778 = vpop.permute.xlu0 %777
    %779 = vrot.lane.b32.xlu0 %v757, 98
    %v780 = vpop.permute.xlu0 %779
    %781 = vrot.lane.b32.xlu0 %v758, 98
    %v782 = vpop.permute.xlu0 %781
    %791 = vst.msk [vmem:[%s742] sm:$0xff] %vm401, %v768
    %792 = vst.msk [vmem:[%s742 + $0x8] sm:$0xff] %vm401, %v770
    %793 = vst.msk [vmem:[%s742 + $0x10] sm:$0xff] %vm401, %v772
    %794 = vst.msk [vmem:[%s742 + $0x18] sm:$0xff] %vm401, %v774
    %795 = vst.msk [vmem:[%s742 + $0x20] sm:$0xff] %vm401, %v776
    %796 = vst.msk [vmem:[%s742 + $0x28] sm:$0xff] %vm401, %v778
    %797 = vst.msk [vmem:[%s742 + $0x30] sm:$0xff] %vm401, %v780
    %798 = vst.msk [vmem:[%s742 + $0x38] sm:$0x1] %vm409, %v782
    %v799 = vld [vmem:[#allocation2] sm:$0xff]
    %v800 = vld [vmem:[#allocation2 + $0x8] sm:$0xff]
    %v801 = vld [vmem:[#allocation2 + $0x10] sm:$0xff]
    %v802 = vld [vmem:[#allocation2 + $0x18] sm:$0xff]
    %v803 = vld [vmem:[#allocation2 + $0x20] sm:$0xff]
    %v804 = vld [vmem:[#allocation2 + $0x28] sm:$0xff]
    %v805 = vld [vmem:[#allocation2 + $0x30] sm:$0xff]
    %v806 = vld [vmem:[#allocation2 + $0x38] sm:$0x1]
    %815 = vrot.lane.b32.xlu0 %v799, 113
    %v816 = vpop.permute.xlu0 %815
    %817 = vrot.lane.b32.xlu0 %v800, 113
    %v818 = vpop.permute.xlu0 %817
    %819 = vrot.lane.b32.xlu0 %v801, 113
    %v820 = vpop.permute.xlu0 %819
    %821 = vrot.lane.b32.xlu0 %v802, 113
    %v822 = vpop.permute.xlu0 %821
    %823 = vrot.lane.b32.xlu0 %v803, 113
    %v824 = vpop.permute.xlu0 %823
    %825 = vrot.lane.b32.xlu0 %v804, 113
    %v826 = vpop.permute.xlu0 %825
    %827 = vrot.lane.b32.xlu0 %v805, 113
    %v828 = vpop.permute.xlu0 %827
    %829 = vrot.lane.b32.xlu0 %v806, 113
    %v830 = vpop.permute.xlu0 %829
    %s839 = scalar_lea.vmem [#allocation3], 320
    %840 = vst.msk [vmem:[%s839] sm:$0xff] %vm351, %v816
    %841 = vst.msk [vmem:[%s839 + $0x8] sm:$0xff] %vm351, %v818
    %842 = vst.msk [vmem:[%s839 + $0x10] sm:$0xff] %vm351, %v820
    %843 = vst.msk [vmem:[%s839 + $0x18] sm:$0xff] %vm351, %v822
    %844 = vst.msk [vmem:[%s839 + $0x20] sm:$0xff] %vm351, %v824
    %845 = vst.msk [vmem:[%s839 + $0x28] sm:$0xff] %vm351, %v826
    %846 = vst.msk [vmem:[%s839 + $0x30] sm:$0xff] %vm351, %v828
    %847 = vst.msk [vmem:[%s839 + $0x38] sm:$0x1] %vm359, %v830
    %v848 = vld [vmem:[#allocation2] sm:$0xff]
    %v849 = vld [vmem:[#allocation2 + $0x8] sm:$0xff]
    %v850 = vld [vmem:[#allocation2 + $0x10] sm:$0xff]
    %v851 = vld [vmem:[#allocation2 + $0x18] sm:$0xff]
    %v852 = vld [vmem:[#allocation2 + $0x20] sm:$0xff]
    %v853 = vld [vmem:[#allocation2 + $0x28] sm:$0xff]
    %v854 = vld [vmem:[#allocation2 + $0x30] sm:$0xff]
    %v855 = vld [vmem:[#allocation2 + $0x38] sm:$0x1]
    %864 = vrot.lane.b32.xlu0 %v848, 95
    %v865 = vpop.permute.xlu0 %864
    %866 = vrot.lane.b32.xlu0 %v849, 95
    %v867 = vpop.permute.xlu0 %866
    %868 = vrot.lane.b32.xlu0 %v850, 95
    %v869 = vpop.permute.xlu0 %868
    %870 = vrot.lane.b32.xlu0 %v851, 95
    %v871 = vpop.permute.xlu0 %870
    %872 = vrot.lane.b32.xlu0 %v852, 95
    %v873 = vpop.permute.xlu0 %872
    %874 = vrot.lane.b32.xlu0 %v853, 95
    %v875 = vpop.permute.xlu0 %874
    %876 = vrot.lane.b32.xlu0 %v854, 95
    %v877 = vpop.permute.xlu0 %876
    %878 = vrot.lane.b32.xlu0 %v855, 95
    %v879 = vpop.permute.xlu0 %878
    %888 = vst.msk [vmem:[%s839] sm:$0xff] %vm401, %v865
    %889 = vst.msk [vmem:[%s839 + $0x8] sm:$0xff] %vm401, %v867
    %890 = vst.msk [vmem:[%s839 + $0x10] sm:$0xff] %vm401, %v869
    %891 = vst.msk [vmem:[%s839 + $0x18] sm:$0xff] %vm401, %v871
    %892 = vst.msk [vmem:[%s839 + $0x20] sm:$0xff] %vm401, %v873
    %893 = vst.msk [vmem:[%s839 + $0x28] sm:$0xff] %vm401, %v875
    %894 = vst.msk [vmem:[%s839 + $0x30] sm:$0xff] %vm401, %v877
    %895 = vst.msk [vmem:[%s839 + $0x38] sm:$0x1] %vm409, %v879
    %v896 = vld [vmem:[#allocation2] sm:$0xff]
    %v897 = vld [vmem:[#allocation2 + $0x8] sm:$0xff]
    %v898 = vld [vmem:[#allocation2 + $0x10] sm:$0xff]
    %v899 = vld [vmem:[#allocation2 + $0x18] sm:$0xff]
    %v900 = vld [vmem:[#allocation2 + $0x20] sm:$0xff]
    %v901 = vld [vmem:[#allocation2 + $0x28] sm:$0xff]
    %v902 = vld [vmem:[#allocation2 + $0x30] sm:$0xff]
    %v903 = vld [vmem:[#allocation2 + $0x38] sm:$0x1]
    %912 = vrot.lane.b32.xlu0 %v896, 110
    %v913 = vpop.permute.xlu0 %912
    %914 = vrot.lane.b32.xlu0 %v897, 110
    %v915 = vpop.permute.xlu0 %914
    %916 = vrot.lane.b32.xlu0 %v898, 110
    %v917 = vpop.permute.xlu0 %916
    %918 = vrot.lane.b32.xlu0 %v899, 110
    %v919 = vpop.permute.xlu0 %918
    %920 = vrot.lane.b32.xlu0 %v900, 110
    %v921 = vpop.permute.xlu0 %920
    %922 = vrot.lane.b32.xlu0 %v901, 110
    %v923 = vpop.permute.xlu0 %922
    %924 = vrot.lane.b32.xlu0 %v902, 110
    %v925 = vpop.permute.xlu0 %924
    %926 = vrot.lane.b32.xlu0 %v903, 110
    %v927 = vpop.permute.xlu0 %926
    %s936 = scalar_lea.vmem [#allocation3], 384
    %937 = vst.msk [vmem:[%s936] sm:$0xff] %vm351, %v913
    %938 = vst.msk [vmem:[%s936 + $0x8] sm:$0xff] %vm351, %v915
    %939 = vst.msk [vmem:[%s936 + $0x10] sm:$0xff] %vm351, %v917
    %940 = vst.msk [vmem:[%s936 + $0x18] sm:$0xff] %vm351, %v919
    %941 = vst.msk [vmem:[%s936 + $0x20] sm:$0xff] %vm351, %v921
    %942 = vst.msk [vmem:[%s936 + $0x28] sm:$0xff] %vm351, %v923
    %943 = vst.msk [vmem:[%s936 + $0x30] sm:$0xff] %vm351, %v925
    %944 = vst.msk [vmem:[%s936 + $0x38] sm:$0x1] %vm359, %v927
    %v945 = vld [vmem:[#allocation2] sm:$0xff]
    %v946 = vld [vmem:[#allocation2 + $0x8] sm:$0xff]
    %v947 = vld [vmem:[#allocation2 + $0x10] sm:$0xff]
    %v948 = vld [vmem:[#allocation2 + $0x18] sm:$0xff]
    %v949 = vld [vmem:[#allocation2 + $0x20] sm:$0xff]
    %v950 = vld [vmem:[#allocation2 + $0x28] sm:$0xff]
    %v951 = vld [vmem:[#allocation2 + $0x30] sm:$0xff]
    %v952 = vld [vmem:[#allocation2 + $0x38] sm:$0x1]
    %961 = vrot.lane.b32.xlu0 %v945, 92
    %v962 = vpop.permute.xlu0 %961
    %963 = vrot.lane.b32.xlu0 %v946, 92
    %v964 = vpop.permute.xlu0 %963
    %965 = vrot.lane.b32.xlu0 %v947, 92
    %v966 = vpop.permute.xlu0 %965
    %967 = vrot.lane.b32.xlu0 %v948, 92
    %v968 = vpop.permute.xlu0 %967
    %969 = vrot.lane.b32.xlu0 %v949, 92
    %v970 = vpop.permute.xlu0 %969
    %971 = vrot.lane.b32.xlu0 %v950, 92
    %v972 = vpop.permute.xlu0 %971
    %973 = vrot.lane.b32.xlu0 %v951, 92
    %v974 = vpop.permute.xlu0 %973
    %975 = vrot.lane.b32.xlu0 %v952, 92
    %v976 = vpop.permute.xlu0 %975
    %985 = vst.msk [vmem:[%s936] sm:$0xff] %vm401, %v962
    %986 = vst.msk [vmem:[%s936 + $0x8] sm:$0xff] %vm401, %v964
    %987 = vst.msk [vmem:[%s936 + $0x10] sm:$0xff] %vm401, %v966
    %988 = vst.msk [vmem:[%s936 + $0x18] sm:$0xff] %vm401, %v968
    %989 = vst.msk [vmem:[%s936 + $0x20] sm:$0xff] %vm401, %v970
    %990 = vst.msk [vmem:[%s936 + $0x28] sm:$0xff] %vm401, %v972
    %991 = vst.msk [vmem:[%s936 + $0x30] sm:$0xff] %vm401, %v974
    %992 = vst.msk [vmem:[%s936 + $0x38] sm:$0x1] %vm409, %v976
    %v993 = vld [vmem:[%s197] sm:$0xff]
    %v994 = vld [vmem:[%s197 + $0x8] sm:$0xff]
    %v995 = vld [vmem:[%s197 + $0x10] sm:$0xff]
    %v996 = vld [vmem:[%s197 + $0x18] sm:$0xff]
    %v997 = vld [vmem:[%s197 + $0x20] sm:$0xff]
    %v998 = vld [vmem:[%s197 + $0x28] sm:$0xff]
    %v999 = vld [vmem:[%s197 + $0x30] sm:$0xff]
    %v1000 = vld [vmem:[%s197 + $0x38] sm:$0x1]
    %s1001 = scalar_lea.vmem [#allocation3], 448
    %1002 = vst.msk [vmem:[%s1001] sm:$0xff] %vm351, %v993
    %1003 = vst.msk [vmem:[%s1001 + $0x8] sm:$0xff] %vm351, %v994
    %1004 = vst.msk [vmem:[%s1001 + $0x10] sm:$0xff] %vm351, %v995
    %1005 = vst.msk [vmem:[%s1001 + $0x18] sm:$0xff] %vm351, %v996
    %1006 = vst.msk [vmem:[%s1001 + $0x20] sm:$0xff] %vm351, %v997
    %1007 = vst.msk [vmem:[%s1001 + $0x28] sm:$0xff] %vm351, %v998
    %1008 = vst.msk [vmem:[%s1001 + $0x30] sm:$0xff] %vm351, %v999
    %1009 = vst.msk [vmem:[%s1001 + $0x38] sm:$0x1] %vm359, %v1000
    %v1010 = vld [vmem:[%s197] sm:$0xff]
    %v1011 = vld [vmem:[%s197 + $0x8] sm:$0xff]
    %v1012 = vld [vmem:[%s197 + $0x10] sm:$0xff]
    %v1013 = vld [vmem:[%s197 + $0x18] sm:$0xff]
    %v1014 = vld [vmem:[%s197 + $0x20] sm:$0xff]
    %v1015 = vld [vmem:[%s197 + $0x28] sm:$0xff]
    %v1016 = vld [vmem:[%s197 + $0x30] sm:$0xff]
    %v1017 = vld [vmem:[%s197 + $0x38] sm:$0x1]
    %1026 = vrot.lane.b32.xlu0 %v1010, 110
    %v1027 = vpop.permute.xlu0 %1026
    %1028 = vrot.lane.b32.xlu0 %v1011, 110
    %v1029 = vpop.permute.xlu0 %1028
    %1030 = vrot.lane.b32.xlu0 %v1012, 110
    %v1031 = vpop.permute.xlu0 %1030
    %1032 = vrot.lane.b32.xlu0 %v1013, 110
    %v1033 = vpop.permute.xlu0 %1032
    %1034 = vrot.lane.b32.xlu0 %v1014, 110
    %v1035 = vpop.permute.xlu0 %1034
    %1036 = vrot.lane.b32.xlu0 %v1015, 110
    %v1037 = vpop.permute.xlu0 %1036
    %1038 = vrot.lane.b32.xlu0 %v1016, 110
    %v1039 = vpop.permute.xlu0 %1038
    %1040 = vrot.lane.b32.xlu0 %v1017, 110
    %v1041 = vpop.permute.xlu0 %1040
    %1050 = vst.msk [vmem:[%s1001] sm:$0xff] %vm401, %v1027
    %1051 = vst.msk [vmem:[%s1001 + $0x8] sm:$0xff] %vm401, %v1029
    %1052 = vst.msk [vmem:[%s1001 + $0x10] sm:$0xff] %vm401, %v1031
    %1053 = vst.msk [vmem:[%s1001 + $0x18] sm:$0xff] %vm401, %v1033
    %1054 = vst.msk [vmem:[%s1001 + $0x20] sm:$0xff] %vm401, %v1035
    %1055 = vst.msk [vmem:[%s1001 + $0x28] sm:$0xff] %vm401, %v1037
    %1056 = vst.msk [vmem:[%s1001 + $0x30] sm:$0xff] %vm401, %v1039
    %1057 = vst.msk [vmem:[%s1001 + $0x38] sm:$0x1] %vm409, %v1041
    %v1058 = vld [vmem:[%s197] sm:$0xff]
    %v1059 = vld [vmem:[%s197 + $0x8] sm:$0xff]
    %v1060 = vld [vmem:[%s197 + $0x10] sm:$0xff]
    %v1061 = vld [vmem:[%s197 + $0x18] sm:$0xff]
    %v1062 = vld [vmem:[%s197 + $0x20] sm:$0xff]
    %v1063 = vld [vmem:[%s197 + $0x28] sm:$0xff]
    %v1064 = vld [vmem:[%s197 + $0x30] sm:$0xff]
    %v1065 = vld [vmem:[%s197 + $0x38] sm:$0x1]
    %1074 = vrot.lane.b32.xlu0 %v1058, 125
    %v1075 = vpop.permute.xlu0 %1074
    %1076 = vrot.lane.b32.xlu0 %v1059, 125
    %v1077 = vpop.permute.xlu0 %1076
    %1078 = vrot.lane.b32.xlu0 %v1060, 125
    %v1079 = vpop.permute.xlu0 %1078
    %1080 = vrot.lane.b32.xlu0 %v1061, 125
    %v1081 = vpop.permute.xlu0 %1080
    %1082 = vrot.lane.b32.xlu0 %v1062, 125
    %v1083 = vpop.permute.xlu0 %1082
    %1084 = vrot.lane.b32.xlu0 %v1063, 125
    %v1085 = vpop.permute.xlu0 %1084
    %1086 = vrot.lane.b32.xlu0 %v1064, 125
    %v1087 = vpop.permute.xlu0 %1086
    %1088 = vrot.lane.b32.xlu0 %v1065, 125
    %v1089 = vpop.permute.xlu0 %1088
    %s1098 = scalar_lea.vmem [#allocation3], 512
    %1099 = vst.msk [vmem:[%s1098] sm:$0xff] %vm351, %v1075
    %1100 = vst.msk [vmem:[%s1098 + $0x8] sm:$0xff] %vm351, %v1077
    %1101 = vst.msk [vmem:[%s1098 + $0x10] sm:$0xff] %vm351, %v1079
    %1102 = vst.msk [vmem:[%s1098 + $0x18] sm:$0xff] %vm351, %v1081
    %1103 = vst.msk [vmem:[%s1098 + $0x20] sm:$0xff] %vm351, %v1083
    %1104 = vst.msk [vmem:[%s1098 + $0x28] sm:$0xff] %vm351, %v1085
    %1105 = vst.msk [vmem:[%s1098 + $0x30] sm:$0xff] %vm351, %v1087
    %1106 = vst.msk [vmem:[%s1098 + $0x38] sm:$0x1] %vm359, %v1089
    %v1107 = vld [vmem:[%s197] sm:$0xff]
    %v1108 = vld [vmem:[%s197 + $0x8] sm:$0xff]
    %v1109 = vld [vmem:[%s197 + $0x10] sm:$0xff]
    %v1110 = vld [vmem:[%s197 + $0x18] sm:$0xff]
    %v1111 = vld [vmem:[%s197 + $0x20] sm:$0xff]
    %v1112 = vld [vmem:[%s197 + $0x28] sm:$0xff]
    %v1113 = vld [vmem:[%s197 + $0x30] sm:$0xff]
    %v1114 = vld [vmem:[%s197 + $0x38] sm:$0x1]
    %1123 = vrot.lane.b32.xlu0 %v1107, 107
    %v1124 = vpop.permute.xlu0 %1123
    %1125 = vrot.lane.b32.xlu0 %v1108, 107
    %v1126 = vpop.permute.xlu0 %1125
    %1127 = vrot.lane.b32.xlu0 %v1109, 107
    %v1128 = vpop.permute.xlu0 %1127
    %1129 = vrot.lane.b32.xlu0 %v1110, 107
    %v1130 = vpop.permute.xlu0 %1129
    %1131 = vrot.lane.b32.xlu0 %v1111, 107
    %v1132 = vpop.permute.xlu0 %1131
    %1133 = vrot.lane.b32.xlu0 %v1112, 107
    %v1134 = vpop.permute.xlu0 %1133
    %1135 = vrot.lane.b32.xlu0 %v1113, 107
    %v1136 = vpop.permute.xlu0 %1135
    %1137 = vrot.lane.b32.xlu0 %v1114, 107
    %v1138 = vpop.permute.xlu0 %1137
    %1147 = vst.msk [vmem:[%s1098] sm:$0xff] %vm401, %v1124
    %1148 = vst.msk [vmem:[%s1098 + $0x8] sm:$0xff] %vm401, %v1126
    %1149 = vst.msk [vmem:[%s1098 + $0x10] sm:$0xff] %vm401, %v1128
    %1150 = vst.msk [vmem:[%s1098 + $0x18] sm:$0xff] %vm401, %v1130
    %1151 = vst.msk [vmem:[%s1098 + $0x20] sm:$0xff] %vm401, %v1132
    %1152 = vst.msk [vmem:[%s1098 + $0x28] sm:$0xff] %vm401, %v1134
    %1153 = vst.msk [vmem:[%s1098 + $0x30] sm:$0xff] %vm401, %v1136
    %1154 = vst.msk [vmem:[%s1098 + $0x38] sm:$0x1] %vm409, %v1138
    %v1155 = vld [vmem:[%s197] sm:$0xff]
    %v1156 = vld [vmem:[%s197 + $0x8] sm:$0xff]
    %v1157 = vld [vmem:[%s197 + $0x10] sm:$0xff]
    %v1158 = vld [vmem:[%s197 + $0x18] sm:$0xff]
    %v1159 = vld [vmem:[%s197 + $0x20] sm:$0xff]
    %v1160 = vld [vmem:[%s197 + $0x28] sm:$0xff]
    %v1161 = vld [vmem:[%s197 + $0x30] sm:$0xff]
    %v1162 = vld [vmem:[%s197 + $0x38] sm:$0x1]
    %1171 = vrot.lane.b32.xlu0 %v1155, 122
    %v1172 = vpop.permute.xlu0 %1171
    %1173 = vrot.lane.b32.xlu0 %v1156, 122
    %v1174 = vpop.permute.xlu0 %1173
    %1175 = vrot.lane.b32.xlu0 %v1157, 122
    %v1176 = vpop.permute.xlu0 %1175
    %1177 = vrot.lane.b32.xlu0 %v1158, 122
    %v1178 = vpop.permute.xlu0 %1177
    %1179 = vrot.lane.b32.xlu0 %v1159, 122
    %v1180 = vpop.permute.xlu0 %1179
    %1181 = vrot.lane.b32.xlu0 %v1160, 122
    %v1182 = vpop.permute.xlu0 %1181
    %1183 = vrot.lane.b32.xlu0 %v1161, 122
    %v1184 = vpop.permute.xlu0 %1183
    %1185 = vrot.lane.b32.xlu0 %v1162, 122
    %v1186 = vpop.permute.xlu0 %1185
    %s1195 = scalar_lea.vmem [#allocation3], 576
    %1196 = vst.msk [vmem:[%s1195] sm:$0xff] %vm351, %v1172
    %1197 = vst.msk [vmem:[%s1195 + $0x8] sm:$0xff] %vm351, %v1174
    %1198 = vst.msk [vmem:[%s1195 + $0x10] sm:$0xff] %vm351, %v1176
    %1199 = vst.msk [vmem:[%s1195 + $0x18] sm:$0xff] %vm351, %v1178
    %1200 = vst.msk [vmem:[%s1195 + $0x20] sm:$0xff] %vm351, %v1180
    %1201 = vst.msk [vmem:[%s1195 + $0x28] sm:$0xff] %vm351, %v1182
    %1202 = vst.msk [vmem:[%s1195 + $0x30] sm:$0xff] %vm351, %v1184
    %1203 = vst.msk [vmem:[%s1195 + $0x38] sm:$0x1] %vm359, %v1186
    %v1204 = vld [vmem:[%s197] sm:$0xff]
    %v1205 = vld [vmem:[%s197 + $0x8] sm:$0xff]
    %v1206 = vld [vmem:[%s197 + $0x10] sm:$0xff]
    %v1207 = vld [vmem:[%s197 + $0x18] sm:$0xff]
    %v1208 = vld [vmem:[%s197 + $0x20] sm:$0xff]
    %v1209 = vld [vmem:[%s197 + $0x28] sm:$0xff]
    %v1210 = vld [vmem:[%s197 + $0x30] sm:$0xff]
    %v1211 = vld [vmem:[%s197 + $0x38] sm:$0x1]
    %1220 = vrot.lane.b32.xlu0 %v1204, 104
    %v1221 = vpop.permute.xlu0 %1220
    %1222 = vrot.lane.b32.xlu0 %v1205, 104
    %v1223 = vpop.permute.xlu0 %1222
    %1224 = vrot.lane.b32.xlu0 %v1206, 104
    %v1225 = vpop.permute.xlu0 %1224
    %1226 = vrot.lane.b32.xlu0 %v1207, 104
    %v1227 = vpop.permute.xlu0 %1226
    %1228 = vrot.lane.b32.xlu0 %v1208, 104
    %v1229 = vpop.permute.xlu0 %1228
    %1230 = vrot.lane.b32.xlu0 %v1209, 104
    %v1231 = vpop.permute.xlu0 %1230
    %1232 = vrot.lane.b32.xlu0 %v1210, 104
    %v1233 = vpop.permute.xlu0 %1232
    %1234 = vrot.lane.b32.xlu0 %v1211, 104
    %v1235 = vpop.permute.xlu0 %1234
    %1244 = vst.msk [vmem:[%s1195] sm:$0xff] %vm401, %v1221
    %1245 = vst.msk [vmem:[%s1195 + $0x8] sm:$0xff] %vm401, %v1223
    %1246 = vst.msk [vmem:[%s1195 + $0x10] sm:$0xff] %vm401, %v1225
    %1247 = vst.msk [vmem:[%s1195 + $0x18] sm:$0xff] %vm401, %v1227
    %1248 = vst.msk [vmem:[%s1195 + $0x20] sm:$0xff] %vm401, %v1229
    %1249 = vst.msk [vmem:[%s1195 + $0x28] sm:$0xff] %vm401, %v1231
    %1250 = vst.msk [vmem:[%s1195 + $0x30] sm:$0xff] %vm401, %v1233
    %1251 = vst.msk [vmem:[%s1195 + $0x38] sm:$0x1] %vm409, %v1235
    %v1252 = vld [vmem:[%s197] sm:$0xff]
    %v1253 = vld [vmem:[%s197 + $0x8] sm:$0xff]
    %v1254 = vld [vmem:[%s197 + $0x10] sm:$0xff]
    %v1255 = vld [vmem:[%s197 + $0x18] sm:$0xff]
    %v1256 = vld [vmem:[%s197 + $0x20] sm:$0xff]
    %v1257 = vld [vmem:[%s197 + $0x28] sm:$0xff]
    %v1258 = vld [vmem:[%s197 + $0x30] sm:$0xff]
    %v1259 = vld [vmem:[%s197 + $0x38] sm:$0x1]
    %1268 = vrot.lane.b32.xlu0 %v1252, 119
    %v1269 = vpop.permute.xlu0 %1268
    %1270 = vrot.lane.b32.xlu0 %v1253, 119
    %v1271 = vpop.permute.xlu0 %1270
    %1272 = vrot.lane.b32.xlu0 %v1254, 119
    %v1273 = vpop.permute.xlu0 %1272
    %1274 = vrot.lane.b32.xlu0 %v1255, 119
    %v1275 = vpop.permute.xlu0 %1274
    %1276 = vrot.lane.b32.xlu0 %v1256, 119
    %v1277 = vpop.permute.xlu0 %1276
    %1278 = vrot.lane.b32.xlu0 %v1257, 119
    %v1279 = vpop.permute.xlu0 %1278
    %1280 = vrot.lane.b32.xlu0 %v1258, 119
    %v1281 = vpop.permute.xlu0 %1280
    %1282 = vrot.lane.b32.xlu0 %v1259, 119
    %v1283 = vpop.permute.xlu0 %1282
    %s1292 = scalar_lea.vmem [#allocation3], 640
    %1293 = vst.msk [vmem:[%s1292] sm:$0xff] %vm351, %v1269
    %1294 = vst.msk [vmem:[%s1292 + $0x8] sm:$0xff] %vm351, %v1271
    %1295 = vst.msk [vmem:[%s1292 + $0x10] sm:$0xff] %vm351, %v1273
    %1296 = vst.msk [vmem:[%s1292 + $0x18] sm:$0xff] %vm351, %v1275
    %1297 = vst.msk [vmem:[%s1292 + $0x20] sm:$0xff] %vm351, %v1277
    %1298 = vst.msk [vmem:[%s1292 + $0x28] sm:$0xff] %vm351, %v1279
    %1299 = vst.msk [vmem:[%s1292 + $0x30] sm:$0xff] %vm351, %v1281
    %1300 = vst.msk [vmem:[%s1292 + $0x38] sm:$0x1] %vm359, %v1283
    %v1301 = vld [vmem:[%s197] sm:$0xff]
    %v1302 = vld [vmem:[%s197 + $0x8] sm:$0xff]
    %v1303 = vld [vmem:[%s197 + $0x10] sm:$0xff]
    %v1304 = vld [vmem:[%s197 + $0x18] sm:$0xff]
    %v1305 = vld [vmem:[%s197 + $0x20] sm:$0xff]
    %v1306 = vld [vmem:[%s197 + $0x28] sm:$0xff]
    %v1307 = vld [vmem:[%s197 + $0x30] sm:$0xff]
    %v1308 = vld [vmem:[%s197 + $0x38] sm:$0x1]
    %1317 = vrot.lane.b32.xlu0 %v1301, 101
    %v1318 = vpop.permute.xlu0 %1317
    %1319 = vrot.lane.b32.xlu0 %v1302, 101
    %v1320 = vpop.permute.xlu0 %1319
    %1321 = vrot.lane.b32.xlu0 %v1303, 101
    %v1322 = vpop.permute.xlu0 %1321
    %1323 = vrot.lane.b32.xlu0 %v1304, 101
    %v1324 = vpop.permute.xlu0 %1323
    %1325 = vrot.lane.b32.xlu0 %v1305, 101
    %v1326 = vpop.permute.xlu0 %1325
    %1327 = vrot.lane.b32.xlu0 %v1306, 101
    %v1328 = vpop.permute.xlu0 %1327
    %1329 = vrot.lane.b32.xlu0 %v1307, 101
    %v1330 = vpop.permute.xlu0 %1329
    %1331 = vrot.lane.b32.xlu0 %v1308, 101
    %v1332 = vpop.permute.xlu0 %1331
    %1341 = vst.msk [vmem:[%s1292] sm:$0xff] %vm401, %v1318
    %1342 = vst.msk [vmem:[%s1292 + $0x8] sm:$0xff] %vm401, %v1320
    %1343 = vst.msk [vmem:[%s1292 + $0x10] sm:$0xff] %vm401, %v1322
    %1344 = vst.msk [vmem:[%s1292 + $0x18] sm:$0xff] %vm401, %v1324
    %1345 = vst.msk [vmem:[%s1292 + $0x20] sm:$0xff] %vm401, %v1326
    %1346 = vst.msk [vmem:[%s1292 + $0x28] sm:$0xff] %vm401, %v1328
    %1347 = vst.msk [vmem:[%s1292 + $0x30] sm:$0xff] %vm401, %v1330
    %1348 = vst.msk [vmem:[%s1292 + $0x38] sm:$0x1] %vm409, %v1332
    %v1349 = vld [vmem:[%s197] sm:$0xff]
    %v1350 = vld [vmem:[%s197 + $0x8] sm:$0xff]
    %v1351 = vld [vmem:[%s197 + $0x10] sm:$0xff]
    %v1352 = vld [vmem:[%s197 + $0x18] sm:$0xff]
    %v1353 = vld [vmem:[%s197 + $0x20] sm:$0xff]
    %v1354 = vld [vmem:[%s197 + $0x28] sm:$0xff]
    %v1355 = vld [vmem:[%s197 + $0x30] sm:$0xff]
    %v1356 = vld [vmem:[%s197 + $0x38] sm:$0x1]
    %1365 = vrot.lane.b32.xlu0 %v1349, 116
    %v1366 = vpop.permute.xlu0 %1365
    %1367 = vrot.lane.b32.xlu0 %v1350, 116
    %v1368 = vpop.permute.xlu0 %1367
    %1369 = vrot.lane.b32.xlu0 %v1351, 116
    %v1370 = vpop.permute.xlu0 %1369
    %1371 = vrot.lane.b32.xlu0 %v1352, 116
    %v1372 = vpop.permute.xlu0 %1371
    %1373 = vrot.lane.b32.xlu0 %v1353, 116
    %v1374 = vpop.permute.xlu0 %1373
    %1375 = vrot.lane.b32.xlu0 %v1354, 116
    %v1376 = vpop.permute.xlu0 %1375
    %1377 = vrot.lane.b32.xlu0 %v1355, 116
    %v1378 = vpop.permute.xlu0 %1377
    %1379 = vrot.lane.b32.xlu0 %v1356, 116
    %v1380 = vpop.permute.xlu0 %1379
    %s1389 = scalar_lea.vmem [#allocation3], 704
    %1390 = vst.msk [vmem:[%s1389] sm:$0xff] %vm351, %v1366
    %1391 = vst.msk [vmem:[%s1389 + $0x8] sm:$0xff] %vm351, %v1368
    %1392 = vst.msk [vmem:[%s1389 + $0x10] sm:$0xff] %vm351, %v1370
    %1393 = vst.msk [vmem:[%s1389 + $0x18] sm:$0xff] %vm351, %v1372
    %1394 = vst.msk [vmem:[%s1389 + $0x20] sm:$0xff] %vm351, %v1374
    %1395 = vst.msk [vmem:[%s1389 + $0x28] sm:$0xff] %vm351, %v1376
    %1396 = vst.msk [vmem:[%s1389 + $0x30] sm:$0xff] %vm351, %v1378
    %1397 = vst.msk [vmem:[%s1389 + $0x38] sm:$0x1] %vm359, %v1380
    %v1398 = vld [vmem:[%s197] sm:$0xff]
    %v1399 = vld [vmem:[%s197 + $0x8] sm:$0xff]
    %v1400 = vld [vmem:[%s197 + $0x10] sm:$0xff]
    %v1401 = vld [vmem:[%s197 + $0x18] sm:$0xff]
    %v1402 = vld [vmem:[%s197 + $0x20] sm:$0xff]
    %v1403 = vld [vmem:[%s197 + $0x28] sm:$0xff]
    %v1404 = vld [vmem:[%s197 + $0x30] sm:$0xff]
    %v1405 = vld [vmem:[%s197 + $0x38] sm:$0x1]
    %1414 = vrot.lane.b32.xlu0 %v1398, 98
    %v1415 = vpop.permute.xlu0 %1414
    %1416 = vrot.lane.b32.xlu0 %v1399, 98
    %v1417 = vpop.permute.xlu0 %1416
    %1418 = vrot.lane.b32.xlu0 %v1400, 98
    %v1419 = vpop.permute.xlu0 %1418
    %1420 = vrot.lane.b32.xlu0 %v1401, 98
    %v1421 = vpop.permute.xlu0 %1420
    %1422 = vrot.lane.b32.xlu0 %v1402, 98
    %v1423 = vpop.permute.xlu0 %1422
    %1424 = vrot.lane.b32.xlu0 %v1403, 98
    %v1425 = vpop.permute.xlu0 %1424
    %1426 = vrot.lane.b32.xlu0 %v1404, 98
    %v1427 = vpop.permute.xlu0 %1426
    %1428 = vrot.lane.b32.xlu0 %v1405, 98
    %v1429 = vpop.permute.xlu0 %1428
    %1438 = vst.msk [vmem:[%s1389] sm:$0xff] %vm401, %v1415
    %1439 = vst.msk [vmem:[%s1389 + $0x8] sm:$0xff] %vm401, %v1417
    %1440 = vst.msk [vmem:[%s1389 + $0x10] sm:$0xff] %vm401, %v1419
    %1441 = vst.msk [vmem:[%s1389 + $0x18] sm:$0xff] %vm401, %v1421
    %1442 = vst.msk [vmem:[%s1389 + $0x20] sm:$0xff] %vm401, %v1423
    %1443 = vst.msk [vmem:[%s1389 + $0x28] sm:$0xff] %vm401, %v1425
    %1444 = vst.msk [vmem:[%s1389 + $0x30] sm:$0xff] %vm401, %v1427
    %1445 = vst.msk [vmem:[%s1389 + $0x38] sm:$0x1] %vm409, %v1429
    %v1446 = vld [vmem:[%s197] sm:$0xff]
    %v1447 = vld [vmem:[%s197 + $0x8] sm:$0xff]
    %v1448 = vld [vmem:[%s197 + $0x10] sm:$0xff]
    %v1449 = vld [vmem:[%s197 + $0x18] sm:$0xff]
    %v1450 = vld [vmem:[%s197 + $0x20] sm:$0xff]
    %v1451 = vld [vmem:[%s197 + $0x28] sm:$0xff]
    %v1452 = vld [vmem:[%s197 + $0x30] sm:$0xff]
    %v1453 = vld [vmem:[%s197 + $0x38] sm:$0x1]
    %1462 = vrot.lane.b32.xlu0 %v1446, 113
    %v1463 = vpop.permute.xlu0 %1462
    %1464 = vrot.lane.b32.xlu0 %v1447, 113
    %v1465 = vpop.permute.xlu0 %1464
    %1466 = vrot.lane.b32.xlu0 %v1448, 113
    %v1467 = vpop.permute.xlu0 %1466
    %1468 = vrot.lane.b32.xlu0 %v1449, 113
    %v1469 = vpop.permute.xlu0 %1468
    %1470 = vrot.lane.b32.xlu0 %v1450, 113
    %v1471 = vpop.permute.xlu0 %1470
    %1472 = vrot.lane.b32.xlu0 %v1451, 113
    %v1473 = vpop.permute.xlu0 %1472
    %1474 = vrot.lane.b32.xlu0 %v1452, 113
    %v1475 = vpop.permute.xlu0 %1474
    %1476 = vrot.lane.b32.xlu0 %v1453, 113
    %v1477 = vpop.permute.xlu0 %1476
    %s1486 = scalar_lea.vmem [#allocation3], 768
    %1487 = vst.msk [vmem:[%s1486] sm:$0xff] %vm351, %v1463
    %1488 = vst.msk [vmem:[%s1486 + $0x8] sm:$0xff] %vm351, %v1465
    %1489 = vst.msk [vmem:[%s1486 + $0x10] sm:$0xff] %vm351, %v1467
    %1490 = vst.msk [vmem:[%s1486 + $0x18] sm:$0xff] %vm351, %v1469
    %1491 = vst.msk [vmem:[%s1486 + $0x20] sm:$0xff] %vm351, %v1471
    %1492 = vst.msk [vmem:[%s1486 + $0x28] sm:$0xff] %vm351, %v1473
    %1493 = vst.msk [vmem:[%s1486 + $0x30] sm:$0xff] %vm351, %v1475
    %1494 = vst.msk [vmem:[%s1486 + $0x38] sm:$0x1] %vm359, %v1477
    %v1495 = vld [vmem:[%s197] sm:$0xff]
    %v1496 = vld [vmem:[%s197 + $0x8] sm:$0xff]
    %v1497 = vld [vmem:[%s197 + $0x10] sm:$0xff]
    %v1498 = vld [vmem:[%s197 + $0x18] sm:$0xff]
    %v1499 = vld [vmem:[%s197 + $0x20] sm:$0xff]
    %v1500 = vld [vmem:[%s197 + $0x28] sm:$0xff]
    %v1501 = vld [vmem:[%s197 + $0x30] sm:$0xff]
    %v1502 = vld [vmem:[%s197 + $0x38] sm:$0x1]
    %1511 = vrot.lane.b32.xlu0 %v1495, 95
    %v1512 = vpop.permute.xlu0 %1511
    %1513 = vrot.lane.b32.xlu0 %v1496, 95
    %v1514 = vpop.permute.xlu0 %1513
    %1515 = vrot.lane.b32.xlu0 %v1497, 95
    %v1516 = vpop.permute.xlu0 %1515
    %1517 = vrot.lane.b32.xlu0 %v1498, 95
    %v1518 = vpop.permute.xlu0 %1517
    %1519 = vrot.lane.b32.xlu0 %v1499, 95
    %v1520 = vpop.permute.xlu0 %1519
    %1521 = vrot.lane.b32.xlu0 %v1500, 95
    %v1522 = vpop.permute.xlu0 %1521
    %1523 = vrot.lane.b32.xlu0 %v1501, 95
    %v1524 = vpop.permute.xlu0 %1523
    %1525 = vrot.lane.b32.xlu0 %v1502, 95
    %v1526 = vpop.permute.xlu0 %1525
    %1535 = vst.msk [vmem:[%s1486] sm:$0xff] %vm401, %v1512
    %1536 = vst.msk [vmem:[%s1486 + $0x8] sm:$0xff] %vm401, %v1514
    %1537 = vst.msk [vmem:[%s1486 + $0x10] sm:$0xff] %vm401, %v1516
    %1538 = vst.msk [vmem:[%s1486 + $0x18] sm:$0xff] %vm401, %v1518
    %1539 = vst.msk [vmem:[%s1486 + $0x20] sm:$0xff] %vm401, %v1520
    %1540 = vst.msk [vmem:[%s1486 + $0x28] sm:$0xff] %vm401, %v1522
    %1541 = vst.msk [vmem:[%s1486 + $0x30] sm:$0xff] %vm401, %v1524
    %1542 = vst.msk [vmem:[%s1486 + $0x38] sm:$0x1] %vm409, %v1526
    %v1543 = vld [vmem:[%s197] sm:$0xff]
    %v1544 = vld [vmem:[%s197 + $0x8] sm:$0xff]
    %v1545 = vld [vmem:[%s197 + $0x10] sm:$0xff]
    %v1546 = vld [vmem:[%s197 + $0x18] sm:$0xff]
    %v1547 = vld [vmem:[%s197 + $0x20] sm:$0xff]
    %v1548 = vld [vmem:[%s197 + $0x28] sm:$0xff]
    %v1549 = vld [vmem:[%s197 + $0x30] sm:$0xff]
    %v1550 = vld [vmem:[%s197 + $0x38] sm:$0x1]
    %1559 = vrot.lane.b32.xlu0 %v1543, 110
    %v1560 = vpop.permute.xlu0 %1559
    %1561 = vrot.lane.b32.xlu0 %v1544, 110
    %v1562 = vpop.permute.xlu0 %1561
    %1563 = vrot.lane.b32.xlu0 %v1545, 110
    %v1564 = vpop.permute.xlu0 %1563
    %1565 = vrot.lane.b32.xlu0 %v1546, 110
    %v1566 = vpop.permute.xlu0 %1565
    %1567 = vrot.lane.b32.xlu0 %v1547, 110
    %v1568 = vpop.permute.xlu0 %1567
    %1569 = vrot.lane.b32.xlu0 %v1548, 110
    %v1570 = vpop.permute.xlu0 %1569
    %1571 = vrot.lane.b32.xlu0 %v1549, 110
    %v1572 = vpop.permute.xlu0 %1571
    %1573 = vrot.lane.b32.xlu0 %v1550, 110
    %v1574 = vpop.permute.xlu0 %1573
    %s1583 = scalar_lea.vmem [#allocation3], 832
    %1584 = vst.msk [vmem:[%s1583] sm:$0xff] %vm351, %v1560
    %1585 = vst.msk [vmem:[%s1583 + $0x8] sm:$0xff] %vm351, %v1562
    %1586 = vst.msk [vmem:[%s1583 + $0x10] sm:$0xff] %vm351, %v1564
    %1587 = vst.msk [vmem:[%s1583 + $0x18] sm:$0xff] %vm351, %v1566
    %1588 = vst.msk [vmem:[%s1583 + $0x20] sm:$0xff] %vm351, %v1568
    %1589 = vst.msk [vmem:[%s1583 + $0x28] sm:$0xff] %vm351, %v1570
    %1590 = vst.msk [vmem:[%s1583 + $0x30] sm:$0xff] %vm351, %v1572
    %1591 = vst.msk [vmem:[%s1583 + $0x38] sm:$0x1] %vm359, %v1574
    %v1592 = vld [vmem:[%s197] sm:$0xff]
    %v1593 = vld [vmem:[%s197 + $0x8] sm:$0xff]
    %v1594 = vld [vmem:[%s197 + $0x10] sm:$0xff]
    %v1595 = vld [vmem:[%s197 + $0x18] sm:$0xff]
    %v1596 = vld [vmem:[%s197 + $0x20] sm:$0xff]
    %v1597 = vld [vmem:[%s197 + $0x28] sm:$0xff]
    %v1598 = vld [vmem:[%s197 + $0x30] sm:$0xff]
    %v1599 = vld [vmem:[%s197 + $0x38] sm:$0x1]
    %1608 = vrot.lane.b32.xlu0 %v1592, 92
    %v1609 = vpop.permute.xlu0 %1608
    %1610 = vrot.lane.b32.xlu0 %v1593, 92
    %v1611 = vpop.permute.xlu0 %1610
    %1612 = vrot.lane.b32.xlu0 %v1594, 92
    %v1613 = vpop.permute.xlu0 %1612
    %1614 = vrot.lane.b32.xlu0 %v1595, 92
    %v1615 = vpop.permute.xlu0 %1614
    %1616 = vrot.lane.b32.xlu0 %v1596, 92
    %v1617 = vpop.permute.xlu0 %1616
    %1618 = vrot.lane.b32.xlu0 %v1597, 92
    %v1619 = vpop.permute.xlu0 %1618
    %1620 = vrot.lane.b32.xlu0 %v1598, 92
    %v1621 = vpop.permute.xlu0 %1620
    %1622 = vrot.lane.b32.xlu0 %v1599, 92
    %v1623 = vpop.permute.xlu0 %1622
    %1632 = vst.msk [vmem:[%s1583] sm:$0xff] %vm401, %v1609
    %1633 = vst.msk [vmem:[%s1583 + $0x8] sm:$0xff] %vm401, %v1611
    %1634 = vst.msk [vmem:[%s1583 + $0x10] sm:$0xff] %vm401, %v1613
    %1635 = vst.msk [vmem:[%s1583 + $0x18] sm:$0xff] %vm401, %v1615
    %1636 = vst.msk [vmem:[%s1583 + $0x20] sm:$0xff] %vm401, %v1617
    %1637 = vst.msk [vmem:[%s1583 + $0x28] sm:$0xff] %vm401, %v1619
    %1638 = vst.msk [vmem:[%s1583 + $0x30] sm:$0xff] %vm401, %v1621
    %1639 = vst.msk [vmem:[%s1583 + $0x38] sm:$0x1] %vm409, %v1623
    %s1640 = sld [smem:[#allocation9]]
    %v1641 = vld [vmem:[#allocation3 + $0x7] sm:$0xff]
    %v1642 = vld [vmem:[#allocation3 + $0xf] sm:$0xff]
    %v1643 = vld [vmem:[#allocation3 + $0x17] sm:$0xff]
    %v1644 = vld [vmem:[#allocation3 + $0x1f] sm:$0xff]
    %v1645 = vstv %s1640
    %v1646 = vmul.f32 %v1645, %v1641
    %v1647 = vmul.f32 %v1645, %v1642
    %v1648 = vmul.f32 %v1645, %v1643
    %v1649 = vmul.f32 %v1645, %v1644
    %s1650 = sld [smem:[#allocation9 + $0x7]]
    %v1651 = vld [vmem:[#allocation3 + $0xa] sm:$0xff]
    %v1652 = vld [vmem:[#allocation3 + $0x12] sm:$0xff]
    %v1653 = vld [vmem:[#allocation3 + $0x1a] sm:$0xff]
    %v1654 = vld [vmem:[#allocation3 + $0x22] sm:$0xff]
    %v1655 = vstv %s1650
    %v1656 = vmul.f32 %v1655, %v1651
    %v1657 = vmul.f32 %v1655, %v1652
    %v1658 = vmul.f32 %v1655, %v1653
    %v1659 = vmul.f32 %v1655, %v1654
    %s1660 = sld [smem:[#allocation9 + $0xe]]
    %v1661 = vld [vmem:[#allocation3 + $0xd] sm:$0xff]
    %v1662 = vld [vmem:[#allocation3 + $0x15] sm:$0xff]
    %v1663 = vld [vmem:[#allocation3 + $0x1d] sm:$0xff]
    %v1664 = vld [vmem:[#allocation3 + $0x25] sm:$0xff]
    %v1665 = vstv %s1660
    %v1666 = vmul.f32 %v1665, %v1661
    %v1667 = vmul.f32 %v1665, %v1662
    %v1668 = vmul.f32 %v1665, %v1663
    %v1669 = vmul.f32 %v1665, %v1664
    %s1670 = sld [smem:[#allocation9 + $0x15]]
    %v1671 = vld [vmem:[#allocation3 + $0x10] sm:$0xff]
    %v1672 = vld [vmem:[#allocation3 + $0x18] sm:$0xff]
    %v1673 = vld [vmem:[#allocation3 + $0x20] sm:$0xff]
    %v1674 = vld [vmem:[#allocation3 + $0x28] sm:$0xff]
    %v1675 = vstv %s1670
    %v1676 = vmul.f32 %v1675, %v1671
    %v1677 = vmul.f32 %v1675, %v1672
    %v1678 = vmul.f32 %v1675, %v1673
    %v1679 = vmul.f32 %v1675, %v1674
    %s1680 = sld [smem:[#allocation9 + $0x1c]]
    %v1681 = vld [vmem:[#allocation3 + $0x13] sm:$0xff]
    %v1682 = vld [vmem:[#allocation3 + $0x1b] sm:$0xff]
    %v1683 = vld [vmem:[#allocation3 + $0x23] sm:$0xff]
    %v1684 = vld [vmem:[#allocation3 + $0x2b] sm:$0xff]
    %v1685 = vstv %s1680
    %v1686 = vmul.f32 %v1685, %v1681
    %v1687 = vmul.f32 %v1685, %v1682
    %v1688 = vmul.f32 %v1685, %v1683
    %v1689 = vmul.f32 %v1685, %v1684
    %v1690 = vadd.f32 %v1646, %v1686
    %v1691 = vadd.f32 %v1647, %v1687
    %v1692 = vadd.f32 %v1648, %v1688
    %v1693 = vadd.f32 %v1649, %v1689
    %s1694 = sld [smem:[#allocation9 + $0x23]]
    %v1695 = vld [vmem:[#allocation3 + $0x16] sm:$0xff]
    %v1696 = vld [vmem:[#allocation3 + $0x1e] sm:$0xff]
    %v1697 = vld [vmem:[#allocation3 + $0x26] sm:$0xff]
    %v1698 = vld [vmem:[#allocation3 + $0x2e] sm:$0xff]
    %v1699 = vstv %s1694
    %v1700 = vmul.f32 %v1699, %v1695
    %v1701 = vmul.f32 %v1699, %v1696
    %v1702 = vmul.f32 %v1699, %v1697
    %v1703 = vmul.f32 %v1699, %v1698
    %v1704 = vadd.f32 %v1656, %v1700
    %v1705 = vadd.f32 %v1657, %v1701
    %v1706 = vadd.f32 %v1658, %v1702
    %v1707 = vadd.f32 %v1659, %v1703
    %s1708 = sld [smem:[#allocation9 + $0x2a]]
    %v1709 = vld [vmem:[#allocation3 + $0x19] sm:$0xff]
    %v1710 = vld [vmem:[#allocation3 + $0x21] sm:$0xff]
    %v1711 = vld [vmem:[#allocation3 + $0x29] sm:$0xff]
    %v1712 = vld [vmem:[#allocation3 + $0x31] sm:$0xff]
    %v1713 = vstv %s1708
    %v1714 = vmul.f32 %v1713, %v1709
    %v1715 = vmul.f32 %v1713, %v1710
    %v1716 = vmul.f32 %v1713, %v1711
    %v1717 = vmul.f32 %v1713, %v1712
    %v1718 = vadd.f32 %v1666, %v1714
    %v1719 = vadd.f32 %v1667, %v1715
    %v1720 = vadd.f32 %v1668, %v1716
    %v1721 = vadd.f32 %v1669, %v1717
    %s1722 = sld [smem:[#allocation9 + $0x1]]
    %v1723 = vld [vmem:[%s451 + $0x7] sm:$0xff]
    %v1724 = vld [vmem:[%s451 + $0xf] sm:$0xff]
    %v1725 = vld [vmem:[%s451 + $0x17] sm:$0xff]
    %v1726 = vld [vmem:[%s451 + $0x1f] sm:$0xff]
    %v1727 = vstv %s1722
    %v1728 = vmul.f32 %v1727, %v1723
    %v1729 = vmul.f32 %v1727, %v1724
    %v1730 = vmul.f32 %v1727, %v1725
    %v1731 = vmul.f32 %v1727, %v1726
    %v1732 = vadd.f32 %v1676, %v1728
    %v1733 = vadd.f32 %v1677, %v1729
    %v1734 = vadd.f32 %v1678, %v1730
    %v1735 = vadd.f32 %v1679, %v1731
    %s1736 = sld [smem:[#allocation9 + $0x8]]
    %v1737 = vld [vmem:[%s451 + $0xa] sm:$0xff]
    %v1738 = vld [vmem:[%s451 + $0x12] sm:$0xff]
    %v1739 = vld [vmem:[%s451 + $0x1a] sm:$0xff]
    %v1740 = vld [vmem:[%s451 + $0x22] sm:$0xff]
    %v1741 = vstv %s1736
    %v1742 = vmul.f32 %v1741, %v1737
    %v1743 = vmul.f32 %v1741, %v1738
    %v1744 = vmul.f32 %v1741, %v1739
    %v1745 = vmul.f32 %v1741, %v1740
    %v1746 = vadd.f32 %v1690, %v1742
    %v1747 = vadd.f32 %v1691, %v1743
    %v1748 = vadd.f32 %v1692, %v1744
    %v1749 = vadd.f32 %v1693, %v1745
    %s1750 = sld [smem:[#allocation9 + $0xf]]
    %v1751 = vld [vmem:[%s451 + $0xd] sm:$0xff]
    %v1752 = vld [vmem:[%s451 + $0x15] sm:$0xff]
    %v1753 = vld [vmem:[%s451 + $0x1d] sm:$0xff]
    %v1754 = vld [vmem:[%s451 + $0x25] sm:$0xff]
    %v1755 = vstv %s1750
    %v1756 = vmul.f32 %v1755, %v1751
    %v1757 = vmul.f32 %v1755, %v1752
    %v1758 = vmul.f32 %v1755, %v1753
    %v1759 = vmul.f32 %v1755, %v1754
    %v1760 = vadd.f32 %v1704, %v1756
    %v1761 = vadd.f32 %v1705, %v1757
    %v1762 = vadd.f32 %v1706, %v1758
    %v1763 = vadd.f32 %v1707, %v1759
    %s1764 = sld [smem:[#allocation9 + $0x16]]
    %v1765 = vld [vmem:[%s451 + $0x10] sm:$0xff]
    %v1766 = vld [vmem:[%s451 + $0x18] sm:$0xff]
    %v1767 = vld [vmem:[%s451 + $0x20] sm:$0xff]
    %v1768 = vld [vmem:[%s451 + $0x28] sm:$0xff]
    %v1769 = vstv %s1764
    %v1770 = vmul.f32 %v1769, %v1765
    %v1771 = vmul.f32 %v1769, %v1766
    %v1772 = vmul.f32 %v1769, %v1767
    %v1773 = vmul.f32 %v1769, %v1768
    %v1774 = vadd.f32 %v1718, %v1770
    %v1775 = vadd.f32 %v1719, %v1771
    %v1776 = vadd.f32 %v1720, %v1772
    %v1777 = vadd.f32 %v1721, %v1773
    %s1778 = sld [smem:[#allocation9 + $0x1d]]
    %v1779 = vld [vmem:[%s451 + $0x13] sm:$0xff]
    %v1780 = vld [vmem:[%s451 + $0x1b] sm:$0xff]
    %v1781 = vld [vmem:[%s451 + $0x23] sm:$0xff]
    %v1782 = vld [vmem:[%s451 + $0x2b] sm:$0xff]
    %v1783 = vstv %s1778
    %v1784 = vmul.f32 %v1783, %v1779
    %v1785 = vmul.f32 %v1783, %v1780
    %v1786 = vmul.f32 %v1783, %v1781
    %v1787 = vmul.f32 %v1783, %v1782
    %v1788 = vadd.f32 %v1732, %v1784
    %v1789 = vadd.f32 %v1733, %v1785
    %v1790 = vadd.f32 %v1734, %v1786
    %v1791 = vadd.f32 %v1735, %v1787
    %s1792 = sld [smem:[#allocation9 + $0x24]]
    %v1793 = vld [vmem:[%s451 + $0x16] sm:$0xff]
    %v1794 = vld [vmem:[%s451 + $0x1e] sm:$0xff]
    %v1795 = vld [vmem:[%s451 + $0x26] sm:$0xff]
    %v1796 = vld [vmem:[%s451 + $0x2e] sm:$0xff]
    %v1797 = vstv %s1792
    %v1798 = vmul.f32 %v1797, %v1793
    %v1799 = vmul.f32 %v1797, %v1794
    %v1800 = vmul.f32 %v1797, %v1795
    %v1801 = vmul.f32 %v1797, %v1796
    %v1802 = vadd.f32 %v1746, %v1798
    %v1803 = vadd.f32 %v1747, %v1799
    %v1804 = vadd.f32 %v1748, %v1800
    %v1805 = vadd.f32 %v1749, %v1801
    %s1806 = sld [smem:[#allocation9 + $0x2b]]
    %v1807 = vld [vmem:[%s451 + $0x19] sm:$0xff]
    %v1808 = vld [vmem:[%s451 + $0x21] sm:$0xff]
    %v1809 = vld [vmem:[%s451 + $0x29] sm:$0xff]
    %v1810 = vld [vmem:[%s451 + $0x31] sm:$0xff]
    %v1811 = vstv %s1806
    %v1812 = vmul.f32 %v1811, %v1807
    %v1813 = vmul.f32 %v1811, %v1808
    %v1814 = vmul.f32 %v1811, %v1809
    %v1815 = vmul.f32 %v1811, %v1810
    %v1816 = vadd.f32 %v1760, %v1812
    %v1817 = vadd.f32 %v1761, %v1813
    %v1818 = vadd.f32 %v1762, %v1814
    %v1819 = vadd.f32 %v1763, %v1815
    %s1820 = sld [smem:[#allocation9 + $0x2]]
    %v1821 = vld [vmem:[%s548 + $0x7] sm:$0xff]
    %v1822 = vld [vmem:[%s548 + $0xf] sm:$0xff]
    %v1823 = vld [vmem:[%s548 + $0x17] sm:$0xff]
    %v1824 = vld [vmem:[%s548 + $0x1f] sm:$0xff]
    %v1825 = vstv %s1820
    %v1826 = vmul.f32 %v1825, %v1821
    %v1827 = vmul.f32 %v1825, %v1822
    %v1828 = vmul.f32 %v1825, %v1823
    %v1829 = vmul.f32 %v1825, %v1824
    %v1830 = vadd.f32 %v1774, %v1826
    %v1831 = vadd.f32 %v1775, %v1827
    %v1832 = vadd.f32 %v1776, %v1828
    %v1833 = vadd.f32 %v1777, %v1829
    %s1834 = sld [smem:[#allocation9 + $0x9]]
    %v1835 = vld [vmem:[%s548 + $0xa] sm:$0xff]
    %v1836 = vld [vmem:[%s548 + $0x12] sm:$0xff]
    %v1837 = vld [vmem:[%s548 + $0x1a] sm:$0xff]
    %v1838 = vld [vmem:[%s548 + $0x22] sm:$0xff]
    %v1839 = vstv %s1834
    %v1840 = vmul.f32 %v1839, %v1835
    %v1841 = vmul.f32 %v1839, %v1836
    %v1842 = vmul.f32 %v1839, %v1837
    %v1843 = vmul.f32 %v1839, %v1838
    %v1844 = vadd.f32 %v1788, %v1840
    %v1845 = vadd.f32 %v1789, %v1841
    %v1846 = vadd.f32 %v1790, %v1842
    %v1847 = vadd.f32 %v1791, %v1843
    %s1848 = sld [smem:[#allocation9 + $0x10]]
    %v1849 = vld [vmem:[%s548 + $0xd] sm:$0xff]
    %v1850 = vld [vmem:[%s548 + $0x15] sm:$0xff]
    %v1851 = vld [vmem:[%s548 + $0x1d] sm:$0xff]
    %v1852 = vld [vmem:[%s548 + $0x25] sm:$0xff]
    %v1853 = vstv %s1848
    %v1854 = vmul.f32 %v1853, %v1849
    %v1855 = vmul.f32 %v1853, %v1850
    %v1856 = vmul.f32 %v1853, %v1851
    %v1857 = vmul.f32 %v1853, %v1852
    %v1858 = vadd.f32 %v1802, %v1854
    %v1859 = vadd.f32 %v1803, %v1855
    %v1860 = vadd.f32 %v1804, %v1856
    %v1861 = vadd.f32 %v1805, %v1857
    %s1862 = sld [smem:[#allocation9 + $0x17]]
    %v1863 = vld [vmem:[%s548 + $0x10] sm:$0xff]
    %v1864 = vld [vmem:[%s548 + $0x18] sm:$0xff]
    %v1865 = vld [vmem:[%s548 + $0x20] sm:$0xff]
    %v1866 = vld [vmem:[%s548 + $0x28] sm:$0xff]
    %v1867 = vstv %s1862
    %v1868 = vmul.f32 %v1867, %v1863
    %v1869 = vmul.f32 %v1867, %v1864
    %v1870 = vmul.f32 %v1867, %v1865
    %v1871 = vmul.f32 %v1867, %v1866
    %v1872 = vadd.f32 %v1816, %v1868
    %v1873 = vadd.f32 %v1817, %v1869
    %v1874 = vadd.f32 %v1818, %v1870
    %v1875 = vadd.f32 %v1819, %v1871
    %s1876 = sld [smem:[#allocation9 + $0x1e]]
    %v1877 = vld [vmem:[%s548 + $0x13] sm:$0xff]
    %v1878 = vld [vmem:[%s548 + $0x1b] sm:$0xff]
    %v1879 = vld [vmem:[%s548 + $0x23] sm:$0xff]
    %v1880 = vld [vmem:[%s548 + $0x2b] sm:$0xff]
    %v1881 = vstv %s1876
    %v1882 = vmul.f32 %v1881, %v1877
    %v1883 = vmul.f32 %v1881, %v1878
    %v1884 = vmul.f32 %v1881, %v1879
    %v1885 = vmul.f32 %v1881, %v1880
    %v1886 = vadd.f32 %v1830, %v1882
    %v1887 = vadd.f32 %v1831, %v1883
    %v1888 = vadd.f32 %v1832, %v1884
    %v1889 = vadd.f32 %v1833, %v1885
    %s1890 = sld [smem:[#allocation9 + $0x25]]
    %v1891 = vld [vmem:[%s548 + $0x16] sm:$0xff]
    %v1892 = vld [vmem:[%s548 + $0x1e] sm:$0xff]
    %v1893 = vld [vmem:[%s548 + $0x26] sm:$0xff]
    %v1894 = vld [vmem:[%s548 + $0x2e] sm:$0xff]
    %v1895 = vstv %s1890
    %v1896 = vmul.f32 %v1895, %v1891
    %v1897 = vmul.f32 %v1895, %v1892
    %v1898 = vmul.f32 %v1895, %v1893
    %v1899 = vmul.f32 %v1895, %v1894
    %v1900 = vadd.f32 %v1844, %v1896
    %v1901 = vadd.f32 %v1845, %v1897
    %v1902 = vadd.f32 %v1846, %v1898
    %v1903 = vadd.f32 %v1847, %v1899
    %s1904 = sld [smem:[#allocation9 + $0x2c]]
    %v1905 = vld [vmem:[%s548 + $0x19] sm:$0xff]
    %v1906 = vld [vmem:[%s548 + $0x21] sm:$0xff]
    %v1907 = vld [vmem:[%s548 + $0x29] sm:$0xff]
    %v1908 = vld [vmem:[%s548 + $0x31] sm:$0xff]
    %v1909 = vstv %s1904
    %v1910 = vmul.f32 %v1909, %v1905
    %v1911 = vmul.f32 %v1909, %v1906
    %v1912 = vmul.f32 %v1909, %v1907
    %v1913 = vmul.f32 %v1909, %v1908
    %v1914 = vadd.f32 %v1858, %v1910
    %v1915 = vadd.f32 %v1859, %v1911
    %v1916 = vadd.f32 %v1860, %v1912
    %v1917 = vadd.f32 %v1861, %v1913
    %s1918 = sld [smem:[#allocation9 + $0x3]]
    %v1919 = vld [vmem:[%s645 + $0x7] sm:$0xff]
    %v1920 = vld [vmem:[%s645 + $0xf] sm:$0xff]
    %v1921 = vld [vmem:[%s645 + $0x17] sm:$0xff]
    %v1922 = vld [vmem:[%s645 + $0x1f] sm:$0xff]
    %v1923 = vstv %s1918
    %v1924 = vmul.f32 %v1923, %v1919
    %v1925 = vmul.f32 %v1923, %v1920
    %v1926 = vmul.f32 %v1923, %v1921
    %v1927 = vmul.f32 %v1923, %v1922
    %v1928 = vadd.f32 %v1872, %v1924
    %v1929 = vadd.f32 %v1873, %v1925
    %v1930 = vadd.f32 %v1874, %v1926
    %v1931 = vadd.f32 %v1875, %v1927
    %s1932 = sld [smem:[#allocation9 + $0xa]]
    %v1933 = vld [vmem:[%s645 + $0xa] sm:$0xff]
    %v1934 = vld [vmem:[%s645 + $0x12] sm:$0xff]
    %v1935 = vld [vmem:[%s645 + $0x1a] sm:$0xff]
    %v1936 = vld [vmem:[%s645 + $0x22] sm:$0xff]
    %v1937 = vstv %s1932
    %v1938 = vmul.f32 %v1937, %v1933
    %v1939 = vmul.f32 %v1937, %v1934
    %v1940 = vmul.f32 %v1937, %v1935
    %v1941 = vmul.f32 %v1937, %v1936
    %v1942 = vadd.f32 %v1886, %v1938
    %v1943 = vadd.f32 %v1887, %v1939
    %v1944 = vadd.f32 %v1888, %v1940
    %v1945 = vadd.f32 %v1889, %v1941
    %s1946 = sld [smem:[#allocation9 + $0x11]]
    %v1947 = vld [vmem:[%s645 + $0xd] sm:$0xff]
    %v1948 = vld [vmem:[%s645 + $0x15] sm:$0xff]
    %v1949 = vld [vmem:[%s645 + $0x1d] sm:$0xff]
    %v1950 = vld [vmem:[%s645 + $0x25] sm:$0xff]
    %v1951 = vstv %s1946
    %v1952 = vmul.f32 %v1951, %v1947
    %v1953 = vmul.f32 %v1951, %v1948
    %v1954 = vmul.f32 %v1951, %v1949
    %v1955 = vmul.f32 %v1951, %v1950
    %v1956 = vadd.f32 %v1900, %v1952
    %v1957 = vadd.f32 %v1901, %v1953
    %v1958 = vadd.f32 %v1902, %v1954
    %v1959 = vadd.f32 %v1903, %v1955
    %s1960 = sld [smem:[#allocation9 + $0x18]]
    %v1961 = vld [vmem:[%s645 + $0x10] sm:$0xff]
    %v1962 = vld [vmem:[%s645 + $0x18] sm:$0xff]
    %v1963 = vld [vmem:[%s645 + $0x20] sm:$0xff]
    %v1964 = vld [vmem:[%s645 + $0x28] sm:$0xff]
    %v1965 = vstv %s1960
    %v1966 = vmul.f32 %v1965, %v1961
    %v1967 = vmul.f32 %v1965, %v1962
    %v1968 = vmul.f32 %v1965, %v1963
    %v1969 = vmul.f32 %v1965, %v1964
    %v1970 = vadd.f32 %v1914, %v1966
    %v1971 = vadd.f32 %v1915, %v1967
    %v1972 = vadd.f32 %v1916, %v1968
    %v1973 = vadd.f32 %v1917, %v1969
    %s1974 = sld [smem:[#allocation9 + $0x1f]]
    %v1975 = vld [vmem:[%s645 + $0x13] sm:$0xff]
    %v1976 = vld [vmem:[%s645 + $0x1b] sm:$0xff]
    %v1977 = vld [vmem:[%s645 + $0x23] sm:$0xff]
    %v1978 = vld [vmem:[%s645 + $0x2b] sm:$0xff]
    %v1979 = vstv %s1974
    %v1980 = vmul.f32 %v1979, %v1975
    %v1981 = vmul.f32 %v1979, %v1976
    %v1982 = vmul.f32 %v1979, %v1977
    %v1983 = vmul.f32 %v1979, %v1978
    %v1984 = vadd.f32 %v1928, %v1980
    %v1985 = vadd.f32 %v1929, %v1981
    %v1986 = vadd.f32 %v1930, %v1982
    %v1987 = vadd.f32 %v1931, %v1983
    %s1988 = sld [smem:[#allocation9 + $0x26]]
    %v1989 = vld [vmem:[%s645 + $0x16] sm:$0xff]
    %v1990 = vld [vmem:[%s645 + $0x1e] sm:$0xff]
    %v1991 = vld [vmem:[%s645 + $0x26] sm:$0xff]
    %v1992 = vld [vmem:[%s645 + $0x2e] sm:$0xff]
    %v1993 = vstv %s1988
    %v1994 = vmul.f32 %v1993, %v1989
    %v1995 = vmul.f32 %v1993, %v1990
    %v1996 = vmul.f32 %v1993, %v1991
    %v1997 = vmul.f32 %v1993, %v1992
    %v1998 = vadd.f32 %v1942, %v1994
    %v1999 = vadd.f32 %v1943, %v1995
    %v2000 = vadd.f32 %v1944, %v1996
    %v2001 = vadd.f32 %v1945, %v1997
    %s2002 = sld [smem:[#allocation9 + $0x2d]]
    %v2003 = vld [vmem:[%s645 + $0x19] sm:$0xff]
    %v2004 = vld [vmem:[%s645 + $0x21] sm:$0xff]
    %v2005 = vld [vmem:[%s645 + $0x29] sm:$0xff]
    %v2006 = vld [vmem:[%s645 + $0x31] sm:$0xff]
    %v2007 = vstv %s2002
    %v2008 = vmul.f32 %v2007, %v2003
    %v2009 = vmul.f32 %v2007, %v2004
    %v2010 = vmul.f32 %v2007, %v2005
    %v2011 = vmul.f32 %v2007, %v2006
    %v2012 = vadd.f32 %v1956, %v2008
    %v2013 = vadd.f32 %v1957, %v2009
    %v2014 = vadd.f32 %v1958, %v2010
    %v2015 = vadd.f32 %v1959, %v2011
    %s2016 = sld [smem:[#allocation9 + $0x4]]
    %v2017 = vld [vmem:[%s742 + $0x7] sm:$0xff]
    %v2018 = vld [vmem:[%s742 + $0xf] sm:$0xff]
    %v2019 = vld [vmem:[%s742 + $0x17] sm:$0xff]
    %v2020 = vld [vmem:[%s742 + $0x1f] sm:$0xff]
    %v2021 = vstv %s2016
    %v2022 = vmul.f32 %v2021, %v2017
    %v2023 = vmul.f32 %v2021, %v2018
    %v2024 = vmul.f32 %v2021, %v2019
    %v2025 = vmul.f32 %v2021, %v2020
    %v2026 = vadd.f32 %v1970, %v2022
    %v2027 = vadd.f32 %v1971, %v2023
    %v2028 = vadd.f32 %v1972, %v2024
    %v2029 = vadd.f32 %v1973, %v2025
    %s2030 = sld [smem:[#allocation9 + $0xb]]
    %v2031 = vld [vmem:[%s742 + $0xa] sm:$0xff]
    %v2032 = vld [vmem:[%s742 + $0x12] sm:$0xff]
    %v2033 = vld [vmem:[%s742 + $0x1a] sm:$0xff]
    %v2034 = vld [vmem:[%s742 + $0x22] sm:$0xff]
    %v2035 = vstv %s2030
    %v2036 = vmul.f32 %v2035, %v2031
    %v2037 = vmul.f32 %v2035, %v2032
    %v2038 = vmul.f32 %v2035, %v2033
    %v2039 = vmul.f32 %v2035, %v2034
    %v2040 = vadd.f32 %v1984, %v2036
    %v2041 = vadd.f32 %v1985, %v2037
    %v2042 = vadd.f32 %v1986, %v2038
    %v2043 = vadd.f32 %v1987, %v2039
    %s2044 = sld [smem:[#allocation9 + $0x12]]
    %v2045 = vld [vmem:[%s742 + $0xd] sm:$0xff]
    %v2046 = vld [vmem:[%s742 + $0x15] sm:$0xff]
    %v2047 = vld [vmem:[%s742 + $0x1d] sm:$0xff]
    %v2048 = vld [vmem:[%s742 + $0x25] sm:$0xff]
    %v2049 = vstv %s2044
    %v2050 = vmul.f32 %v2049, %v2045
    %v2051 = vmul.f32 %v2049, %v2046
    %v2052 = vmul.f32 %v2049, %v2047
    %v2053 = vmul.f32 %v2049, %v2048
    %v2054 = vadd.f32 %v1998, %v2050
    %v2055 = vadd.f32 %v1999, %v2051
    %v2056 = vadd.f32 %v2000, %v2052
    %v2057 = vadd.f32 %v2001, %v2053
    %s2058 = sld [smem:[#allocation9 + $0x19]]
    %v2059 = vld [vmem:[%s742 + $0x10] sm:$0xff]
    %v2060 = vld [vmem:[%s742 + $0x18] sm:$0xff]
    %v2061 = vld [vmem:[%s742 + $0x20] sm:$0xff]
    %v2062 = vld [vmem:[%s742 + $0x28] sm:$0xff]
    %v2063 = vstv %s2058
    %v2064 = vmul.f32 %v2063, %v2059
    %v2065 = vmul.f32 %v2063, %v2060
    %v2066 = vmul.f32 %v2063, %v2061
    %v2067 = vmul.f32 %v2063, %v2062
    %v2068 = vadd.f32 %v2012, %v2064
    %v2069 = vadd.f32 %v2013, %v2065
    %v2070 = vadd.f32 %v2014, %v2066
    %v2071 = vadd.f32 %v2015, %v2067
    %s2072 = sld [smem:[#allocation9 + $0x20]]
    %v2073 = vld [vmem:[%s742 + $0x13] sm:$0xff]
    %v2074 = vld [vmem:[%s742 + $0x1b] sm:$0xff]
    %v2075 = vld [vmem:[%s742 + $0x23] sm:$0xff]
    %v2076 = vld [vmem:[%s742 + $0x2b] sm:$0xff]
    %v2077 = vstv %s2072
    %v2078 = vmul.f32 %v2077, %v2073
    %v2079 = vmul.f32 %v2077, %v2074
    %v2080 = vmul.f32 %v2077, %v2075
    %v2081 = vmul.f32 %v2077, %v2076
    %v2082 = vadd.f32 %v2026, %v2078
    %v2083 = vadd.f32 %v2027, %v2079
    %v2084 = vadd.f32 %v2028, %v2080
    %v2085 = vadd.f32 %v2029, %v2081
    %s2086 = sld [smem:[#allocation9 + $0x27]]
    %v2087 = vld [vmem:[%s742 + $0x16] sm:$0xff]
    %v2088 = vld [vmem:[%s742 + $0x1e] sm:$0xff]
    %v2089 = vld [vmem:[%s742 + $0x26] sm:$0xff]
    %v2090 = vld [vmem:[%s742 + $0x2e] sm:$0xff]
    %v2091 = vstv %s2086
    %v2092 = vmul.f32 %v2091, %v2087
    %v2093 = vmul.f32 %v2091, %v2088
    %v2094 = vmul.f32 %v2091, %v2089
    %v2095 = vmul.f32 %v2091, %v2090
    %v2096 = vadd.f32 %v2040, %v2092
    %v2097 = vadd.f32 %v2041, %v2093
    %v2098 = vadd.f32 %v2042, %v2094
    %v2099 = vadd.f32 %v2043, %v2095
    %s2100 = sld [smem:[#allocation9 + $0x2e]]
    %v2101 = vld [vmem:[%s742 + $0x19] sm:$0xff]
    %v2102 = vld [vmem:[%s742 + $0x21] sm:$0xff]
    %v2103 = vld [vmem:[%s742 + $0x29] sm:$0xff]
    %v2104 = vld [vmem:[%s742 + $0x31] sm:$0xff]
    %v2105 = vstv %s2100
    %v2106 = vmul.f32 %v2105, %v2101
    %v2107 = vmul.f32 %v2105, %v2102
    %v2108 = vmul.f32 %v2105, %v2103
    %v2109 = vmul.f32 %v2105, %v2104
    %v2110 = vadd.f32 %v2054, %v2106
    %v2111 = vadd.f32 %v2055, %v2107
    %v2112 = vadd.f32 %v2056, %v2108
    %v2113 = vadd.f32 %v2057, %v2109
    %s2114 = sld [smem:[#allocation9 + $0x5]]
    %v2115 = vld [vmem:[%s839 + $0x7] sm:$0xff]
    %v2116 = vld [vmem:[%s839 + $0xf] sm:$0xff]
    %v2117 = vld [vmem:[%s839 + $0x17] sm:$0xff]
    %v2118 = vld [vmem:[%s839 + $0x1f] sm:$0xff]
    %v2119 = vstv %s2114
    %v2120 = vmul.f32 %v2119, %v2115
    %v2121 = vmul.f32 %v2119, %v2116
    %v2122 = vmul.f32 %v2119, %v2117
    %v2123 = vmul.f32 %v2119, %v2118
    %v2124 = vadd.f32 %v2068, %v2120
    %v2125 = vadd.f32 %v2069, %v2121
    %v2126 = vadd.f32 %v2070, %v2122
    %v2127 = vadd.f32 %v2071, %v2123
    %s2128 = sld [smem:[#allocation9 + $0xc]]
    %v2129 = vld [vmem:[%s839 + $0xa] sm:$0xff]
    %v2130 = vld [vmem:[%s839 + $0x12] sm:$0xff]
    %v2131 = vld [vmem:[%s839 + $0x1a] sm:$0xff]
    %v2132 = vld [vmem:[%s839 + $0x22] sm:$0xff]
    %v2133 = vstv %s2128
    %v2134 = vmul.f32 %v2133, %v2129
    %v2135 = vmul.f32 %v2133, %v2130
    %v2136 = vmul.f32 %v2133, %v2131
    %v2137 = vmul.f32 %v2133, %v2132
    %v2138 = vadd.f32 %v2082, %v2134
    %v2139 = vadd.f32 %v2083, %v2135
    %v2140 = vadd.f32 %v2084, %v2136
    %v2141 = vadd.f32 %v2085, %v2137
    %s2142 = sld [smem:[#allocation9 + $0x13]]
    %v2143 = vld [vmem:[%s839 + $0xd] sm:$0xff]
    %v2144 = vld [vmem:[%s839 + $0x15] sm:$0xff]
    %v2145 = vld [vmem:[%s839 + $0x1d] sm:$0xff]
    %v2146 = vld [vmem:[%s839 + $0x25] sm:$0xff]
    %v2147 = vstv %s2142
    %v2148 = vmul.f32 %v2147, %v2143
    %v2149 = vmul.f32 %v2147, %v2144
    %v2150 = vmul.f32 %v2147, %v2145
    %v2151 = vmul.f32 %v2147, %v2146
    %v2152 = vadd.f32 %v2096, %v2148
    %v2153 = vadd.f32 %v2097, %v2149
    %v2154 = vadd.f32 %v2098, %v2150
    %v2155 = vadd.f32 %v2099, %v2151
    %s2156 = sld [smem:[#allocation9 + $0x1a]]
    %v2157 = vld [vmem:[%s839 + $0x10] sm:$0xff]
    %v2158 = vld [vmem:[%s839 + $0x18] sm:$0xff]
    %v2159 = vld [vmem:[%s839 + $0x20] sm:$0xff]
    %v2160 = vld [vmem:[%s839 + $0x28] sm:$0xff]
    %v2161 = vstv %s2156
    %v2162 = vmul.f32 %v2161, %v2157
    %v2163 = vmul.f32 %v2161, %v2158
    %v2164 = vmul.f32 %v2161, %v2159
    %v2165 = vmul.f32 %v2161, %v2160
    %v2166 = vadd.f32 %v2110, %v2162
    %v2167 = vadd.f32 %v2111, %v2163
    %v2168 = vadd.f32 %v2112, %v2164
    %v2169 = vadd.f32 %v2113, %v2165
    %s2170 = sld [smem:[#allocation9 + $0x21]]
    %v2171 = vld [vmem:[%s839 + $0x13] sm:$0xff]
    %v2172 = vld [vmem:[%s839 + $0x1b] sm:$0xff]
    %v2173 = vld [vmem:[%s839 + $0x23] sm:$0xff]
    %v2174 = vld [vmem:[%s839 + $0x2b] sm:$0xff]
    %v2175 = vstv %s2170
    %v2176 = vmul.f32 %v2175, %v2171
    %v2177 = vmul.f32 %v2175, %v2172
    %v2178 = vmul.f32 %v2175, %v2173
    %v2179 = vmul.f32 %v2175, %v2174
    %v2180 = vadd.f32 %v2124, %v2176
    %v2181 = vadd.f32 %v2125, %v2177
    %v2182 = vadd.f32 %v2126, %v2178
    %v2183 = vadd.f32 %v2127, %v2179
    %s2184 = sld [smem:[#allocation9 + $0x28]]
    %v2185 = vld [vmem:[%s839 + $0x16] sm:$0xff]
    %v2186 = vld [vmem:[%s839 + $0x1e] sm:$0xff]
    %v2187 = vld [vmem:[%s839 + $0x26] sm:$0xff]
    %v2188 = vld [vmem:[%s839 + $0x2e] sm:$0xff]
    %v2189 = vstv %s2184
    %v2190 = vmul.f32 %v2189, %v2185
    %v2191 = vmul.f32 %v2189, %v2186
    %v2192 = vmul.f32 %v2189, %v2187
    %v2193 = vmul.f32 %v2189, %v2188
    %v2194 = vadd.f32 %v2138, %v2190
    %v2195 = vadd.f32 %v2139, %v2191
    %v2196 = vadd.f32 %v2140, %v2192
    %v2197 = vadd.f32 %v2141, %v2193
    %s2198 = sld [smem:[#allocation9 + $0x2f]]
    %v2199 = vld [vmem:[%s839 + $0x19] sm:$0xff]
    %v2200 = vld [vmem:[%s839 + $0x21] sm:$0xff]
    %v2201 = vld [vmem:[%s839 + $0x29] sm:$0xff]
    %v2202 = vld [vmem:[%s839 + $0x31] sm:$0xff]
    %v2203 = vstv %s2198
    %v2204 = vmul.f32 %v2203, %v2199
    %v2205 = vmul.f32 %v2203, %v2200
    %v2206 = vmul.f32 %v2203, %v2201
    %v2207 = vmul.f32 %v2203, %v2202
    %v2208 = vadd.f32 %v2152, %v2204
    %v2209 = vadd.f32 %v2153, %v2205
    %v2210 = vadd.f32 %v2154, %v2206
    %v2211 = vadd.f32 %v2155, %v2207
    %s2212 = sld [smem:[#allocation9 + $0x6]]
    %v2213 = vld [vmem:[%s936 + $0x7] sm:$0xff]
    %v2214 = vld [vmem:[%s936 + $0xf] sm:$0xff]
    %v2215 = vld [vmem:[%s936 + $0x17] sm:$0xff]
    %v2216 = vld [vmem:[%s936 + $0x1f] sm:$0xff]
    %v2217 = vstv %s2212
    %v2218 = vmul.f32 %v2217, %v2213
    %v2219 = vmul.f32 %v2217, %v2214
    %v2220 = vmul.f32 %v2217, %v2215
    %v2221 = vmul.f32 %v2217, %v2216
    %v2222 = vadd.f32 %v2166, %v2218
    %v2223 = vadd.f32 %v2167, %v2219
    %v2224 = vadd.f32 %v2168, %v2220
    %v2225 = vadd.f32 %v2169, %v2221
    %s2226 = sld [smem:[#allocation9 + $0xd]]
    %v2227 = vld [vmem:[%s936 + $0xa] sm:$0xff]
    %v2228 = vld [vmem:[%s936 + $0x12] sm:$0xff]
    %v2229 = vld [vmem:[%s936 + $0x1a] sm:$0xff]
    %v2230 = vld [vmem:[%s936 + $0x22] sm:$0xff]
    %v2231 = vstv %s2226
    %v2232 = vmul.f32 %v2231, %v2227
    %v2233 = vmul.f32 %v2231, %v2228
    %v2234 = vmul.f32 %v2231, %v2229
    %v2235 = vmul.f32 %v2231, %v2230
    %v2236 = vadd.f32 %v2180, %v2232
    %v2237 = vadd.f32 %v2181, %v2233
    %v2238 = vadd.f32 %v2182, %v2234
    %v2239 = vadd.f32 %v2183, %v2235
    %s2240 = sld [smem:[#allocation9 + $0x14]]
    %v2241 = vld [vmem:[%s936 + $0xd] sm:$0xff]
    %v2242 = vld [vmem:[%s936 + $0x15] sm:$0xff]
    %v2243 = vld [vmem:[%s936 + $0x1d] sm:$0xff]
    %v2244 = vld [vmem:[%s936 + $0x25] sm:$0xff]
    %v2245 = vstv %s2240
    %v2246 = vmul.f32 %v2245, %v2241
    %v2247 = vmul.f32 %v2245, %v2242
    %v2248 = vmul.f32 %v2245, %v2243
    %v2249 = vmul.f32 %v2245, %v2244
    %v2250 = vadd.f32 %v2194, %v2246
    %v2251 = vadd.f32 %v2195, %v2247
    %v2252 = vadd.f32 %v2196, %v2248
    %v2253 = vadd.f32 %v2197, %v2249
    %s2254 = sld [smem:[#allocation9 + $0x1b]]
    %v2255 = vld [vmem:[%s936 + $0x10] sm:$0xff]
    %v2256 = vld [vmem:[%s936 + $0x18] sm:$0xff]
    %v2257 = vld [vmem:[%s936 + $0x20] sm:$0xff]
    %v2258 = vld [vmem:[%s936 + $0x28] sm:$0xff]
    %v2259 = vstv %s2254
    %v2260 = vmul.f32 %v2259, %v2255
    %v2261 = vmul.f32 %v2259, %v2256
    %v2262 = vmul.f32 %v2259, %v2257
    %v2263 = vmul.f32 %v2259, %v2258
    %v2264 = vadd.f32 %v2208, %v2260
    %v2265 = vadd.f32 %v2209, %v2261
    %v2266 = vadd.f32 %v2210, %v2262
    %v2267 = vadd.f32 %v2211, %v2263
    %s2268 = sld [smem:[#allocation9 + $0x22]]
    %v2269 = vld [vmem:[%s936 + $0x13] sm:$0xff]
    %v2270 = vld [vmem:[%s936 + $0x1b] sm:$0xff]
    %v2271 = vld [vmem:[%s936 + $0x23] sm:$0xff]
    %v2272 = vld [vmem:[%s936 + $0x2b] sm:$0xff]
    %v2273 = vstv %s2268
    %v2274 = vmul.f32 %v2273, %v2269
    %v2275 = vmul.f32 %v2273, %v2270
    %v2276 = vmul.f32 %v2273, %v2271
    %v2277 = vmul.f32 %v2273, %v2272
    %v2278 = vadd.f32 %v2222, %v2274
    %v2279 = vadd.f32 %v2223, %v2275
    %v2280 = vadd.f32 %v2224, %v2276
    %v2281 = vadd.f32 %v2225, %v2277
    %s2282 = sld [smem:[#allocation9 + $0x29]]
    %v2283 = vld [vmem:[%s936 + $0x16] sm:$0xff]
    %v2284 = vld [vmem:[%s936 + $0x1e] sm:$0xff]
    %v2285 = vld [vmem:[%s936 + $0x26] sm:$0xff]
    %v2286 = vld [vmem:[%s936 + $0x2e] sm:$0xff]
    %v2287 = vstv %s2282
    %v2288 = vmul.f32 %v2287, %v2283
    %v2289 = vmul.f32 %v2287, %v2284
    %v2290 = vmul.f32 %v2287, %v2285
    %v2291 = vmul.f32 %v2287, %v2286
    %v2292 = vadd.f32 %v2236, %v2288
    %v2293 = vadd.f32 %v2237, %v2289
    %v2294 = vadd.f32 %v2238, %v2290
    %v2295 = vadd.f32 %v2239, %v2291
    %s2296 = sld [smem:[#allocation9 + $0x30]]
    %v2297 = vld [vmem:[%s936 + $0x19] sm:$0xff]
    %v2298 = vld [vmem:[%s936 + $0x21] sm:$0xff]
    %v2299 = vld [vmem:[%s936 + $0x29] sm:$0xff]
    %v2300 = vld [vmem:[%s936 + $0x31] sm:$0xff]
    %v2301 = vstv %s2296
    %v2302 = vmul.f32 %v2301, %v2297
    %v2303 = vmul.f32 %v2301, %v2298
    %v2304 = vmul.f32 %v2301, %v2299
    %v2305 = vmul.f32 %v2301, %v2300
    %v2306 = vadd.f32 %v2250, %v2302
    %v2307 = vadd.f32 %v2251, %v2303
    %v2308 = vadd.f32 %v2252, %v2304
    %v2309 = vadd.f32 %v2253, %v2305
    %s2310 = sld [smem:[#allocation9 + $0x31]]
    %v2311 = vld [vmem:[%s1001 + $0x7] sm:$0xff]
    %v2312 = vld [vmem:[%s1001 + $0xf] sm:$0xff]
    %v2313 = vld [vmem:[%s1001 + $0x17] sm:$0xff]
    %v2314 = vld [vmem:[%s1001 + $0x1f] sm:$0xff]
    %v2315 = vstv %s2310
    %v2316 = vmul.f32 %v2315, %v2311
    %v2317 = vmul.f32 %v2315, %v2312
    %v2318 = vmul.f32 %v2315, %v2313
    %v2319 = vmul.f32 %v2315, %v2314
    %v2320 = vadd.f32 %v2264, %v2316
    %v2321 = vadd.f32 %v2265, %v2317
    %v2322 = vadd.f32 %v2266, %v2318
    %v2323 = vadd.f32 %v2267, %v2319
    %s2324 = sld [smem:[#allocation9 + $0x38]]
    %v2325 = vld [vmem:[%s1001 + $0xa] sm:$0xff]
    %v2326 = vld [vmem:[%s1001 + $0x12] sm:$0xff]
    %v2327 = vld [vmem:[%s1001 + $0x1a] sm:$0xff]
    %v2328 = vld [vmem:[%s1001 + $0x22] sm:$0xff]
    %v2329 = vstv %s2324
    %v2330 = vmul.f32 %v2329, %v2325
    %v2331 = vmul.f32 %v2329, %v2326
    %v2332 = vmul.f32 %v2329, %v2327
    %v2333 = vmul.f32 %v2329, %v2328
    %v2334 = vadd.f32 %v2278, %v2330
    %v2335 = vadd.f32 %v2279, %v2331
    %v2336 = vadd.f32 %v2280, %v2332
    %v2337 = vadd.f32 %v2281, %v2333
    %s2338 = sld [smem:[#allocation9 + $0x3f]]
    %v2339 = vld [vmem:[%s1001 + $0xd] sm:$0xff]
    %v2340 = vld [vmem:[%s1001 + $0x15] sm:$0xff]
    %v2341 = vld [vmem:[%s1001 + $0x1d] sm:$0xff]
    %v2342 = vld [vmem:[%s1001 + $0x25] sm:$0xff]
    %v2343 = vstv %s2338
    %v2344 = vmul.f32 %v2343, %v2339
    %v2345 = vmul.f32 %v2343, %v2340
    %v2346 = vmul.f32 %v2343, %v2341
    %v2347 = vmul.f32 %v2343, %v2342
    %v2348 = vadd.f32 %v2292, %v2344
    %v2349 = vadd.f32 %v2293, %v2345
    %v2350 = vadd.f32 %v2294, %v2346
    %v2351 = vadd.f32 %v2295, %v2347
    %s2352 = sld [smem:[#allocation9 + $0x46]]
    %v2353 = vld [vmem:[%s1001 + $0x10] sm:$0xff]
    %v2354 = vld [vmem:[%s1001 + $0x18] sm:$0xff]
    %v2355 = vld [vmem:[%s1001 + $0x20] sm:$0xff]
    %v2356 = vld [vmem:[%s1001 + $0x28] sm:$0xff]
    %v2357 = vstv %s2352
    %v2358 = vmul.f32 %v2357, %v2353
    %v2359 = vmul.f32 %v2357, %v2354
    %v2360 = vmul.f32 %v2357, %v2355
    %v2361 = vmul.f32 %v2357, %v2356
    %v2362 = vadd.f32 %v2306, %v2358
    %v2363 = vadd.f32 %v2307, %v2359
    %v2364 = vadd.f32 %v2308, %v2360
    %v2365 = vadd.f32 %v2309, %v2361
    %s2366 = sld [smem:[#allocation9 + $0x4d]]
    %v2367 = vld [vmem:[%s1001 + $0x13] sm:$0xff]
    %v2368 = vld [vmem:[%s1001 + $0x1b] sm:$0xff]
    %v2369 = vld [vmem:[%s1001 + $0x23] sm:$0xff]
    %v2370 = vld [vmem:[%s1001 + $0x2b] sm:$0xff]
    %v2371 = vstv %s2366
    %v2372 = vmul.f32 %v2371, %v2367
    %v2373 = vmul.f32 %v2371, %v2368
    %v2374 = vmul.f32 %v2371, %v2369
    %v2375 = vmul.f32 %v2371, %v2370
    %v2376 = vadd.f32 %v2320, %v2372
    %v2377 = vadd.f32 %v2321, %v2373
    %v2378 = vadd.f32 %v2322, %v2374
    %v2379 = vadd.f32 %v2323, %v2375
    %s2380 = sld [smem:[#allocation9 + $0x54]]
    %v2381 = vld [vmem:[%s1001 + $0x16] sm:$0xff]
    %v2382 = vld [vmem:[%s1001 + $0x1e] sm:$0xff]
    %v2383 = vld [vmem:[%s1001 + $0x26] sm:$0xff]
    %v2384 = vld [vmem:[%s1001 + $0x2e] sm:$0xff]
    %v2385 = vstv %s2380
    %v2386 = vmul.f32 %v2385, %v2381
    %v2387 = vmul.f32 %v2385, %v2382
    %v2388 = vmul.f32 %v2385, %v2383
    %v2389 = vmul.f32 %v2385, %v2384
    %v2390 = vadd.f32 %v2334, %v2386
    %v2391 = vadd.f32 %v2335, %v2387
    %v2392 = vadd.f32 %v2336, %v2388
    %v2393 = vadd.f32 %v2337, %v2389
    %s2394 = sld [smem:[#allocation9 + $0x5b]]
    %v2395 = vld [vmem:[%s1001 + $0x19] sm:$0xff]
    %v2396 = vld [vmem:[%s1001 + $0x21] sm:$0xff]
    %v2397 = vld [vmem:[%s1001 + $0x29] sm:$0xff]
    %v2398 = vld [vmem:[%s1001 + $0x31] sm:$0xff]
    %v2399 = vstv %s2394
    %v2400 = vmul.f32 %v2399, %v2395
    %v2401 = vmul.f32 %v2399, %v2396
    %v2402 = vmul.f32 %v2399, %v2397
    %v2403 = vmul.f32 %v2399, %v2398
    %v2404 = vadd.f32 %v2348, %v2400
    %v2405 = vadd.f32 %v2349, %v2401
    %v2406 = vadd.f32 %v2350, %v2402
    %v2407 = vadd.f32 %v2351, %v2403
    %s2408 = sld [smem:[#allocation9 + $0x32]]
    %v2409 = vld [vmem:[%s1098 + $0x7] sm:$0xff]
    %v2410 = vld [vmem:[%s1098 + $0xf] sm:$0xff]
    %v2411 = vld [vmem:[%s1098 + $0x17] sm:$0xff]
    %v2412 = vld [vmem:[%s1098 + $0x1f] sm:$0xff]
    %v2413 = vstv %s2408
    %v2414 = vmul.f32 %v2413, %v2409
    %v2415 = vmul.f32 %v2413, %v2410
    %v2416 = vmul.f32 %v2413, %v2411
    %v2417 = vmul.f32 %v2413, %v2412
    %v2418 = vadd.f32 %v2362, %v2414
    %v2419 = vadd.f32 %v2363, %v2415
    %v2420 = vadd.f32 %v2364, %v2416
    %v2421 = vadd.f32 %v2365, %v2417
    %s2422 = sld [smem:[#allocation9 + $0x39]]
    %v2423 = vld [vmem:[%s1098 + $0xa] sm:$0xff]
    %v2424 = vld [vmem:[%s1098 + $0x12] sm:$0xff]
    %v2425 = vld [vmem:[%s1098 + $0x1a] sm:$0xff]
    %v2426 = vld [vmem:[%s1098 + $0x22] sm:$0xff]
    %v2427 = vstv %s2422
    %v2428 = vmul.f32 %v2427, %v2423
    %v2429 = vmul.f32 %v2427, %v2424
    %v2430 = vmul.f32 %v2427, %v2425
    %v2431 = vmul.f32 %v2427, %v2426
    %v2432 = vadd.f32 %v2376, %v2428
    %v2433 = vadd.f32 %v2377, %v2429
    %v2434 = vadd.f32 %v2378, %v2430
    %v2435 = vadd.f32 %v2379, %v2431
    %s2436 = sld [smem:[#allocation9 + $0x40]]
    %v2437 = vld [vmem:[%s1098 + $0xd] sm:$0xff]
    %v2438 = vld [vmem:[%s1098 + $0x15] sm:$0xff]
    %v2439 = vld [vmem:[%s1098 + $0x1d] sm:$0xff]
    %v2440 = vld [vmem:[%s1098 + $0x25] sm:$0xff]
    %v2441 = vstv %s2436
    %v2442 = vmul.f32 %v2441, %v2437
    %v2443 = vmul.f32 %v2441, %v2438
    %v2444 = vmul.f32 %v2441, %v2439
    %v2445 = vmul.f32 %v2441, %v2440
    %v2446 = vadd.f32 %v2390, %v2442
    %v2447 = vadd.f32 %v2391, %v2443
    %v2448 = vadd.f32 %v2392, %v2444
    %v2449 = vadd.f32 %v2393, %v2445
    %s2450 = sld [smem:[#allocation9 + $0x47]]
    %v2451 = vld [vmem:[%s1098 + $0x10] sm:$0xff]
    %v2452 = vld [vmem:[%s1098 + $0x18] sm:$0xff]
    %v2453 = vld [vmem:[%s1098 + $0x20] sm:$0xff]
    %v2454 = vld [vmem:[%s1098 + $0x28] sm:$0xff]
    %v2455 = vstv %s2450
    %v2456 = vmul.f32 %v2455, %v2451
    %v2457 = vmul.f32 %v2455, %v2452
    %v2458 = vmul.f32 %v2455, %v2453
    %v2459 = vmul.f32 %v2455, %v2454
    %v2460 = vadd.f32 %v2404, %v2456
    %v2461 = vadd.f32 %v2405, %v2457
    %v2462 = vadd.f32 %v2406, %v2458
    %v2463 = vadd.f32 %v2407, %v2459
    %s2464 = sld [smem:[#allocation9 + $0x4e]]
    %v2465 = vld [vmem:[%s1098 + $0x13] sm:$0xff]
    %v2466 = vld [vmem:[%s1098 + $0x1b] sm:$0xff]
    %v2467 = vld [vmem:[%s1098 + $0x23] sm:$0xff]
    %v2468 = vld [vmem:[%s1098 + $0x2b] sm:$0xff]
    %v2469 = vstv %s2464
    %v2470 = vmul.f32 %v2469, %v2465
    %v2471 = vmul.f32 %v2469, %v2466
    %v2472 = vmul.f32 %v2469, %v2467
    %v2473 = vmul.f32 %v2469, %v2468
    %v2474 = vadd.f32 %v2418, %v2470
    %v2475 = vadd.f32 %v2419, %v2471
    %v2476 = vadd.f32 %v2420, %v2472
    %v2477 = vadd.f32 %v2421, %v2473
    %s2478 = sld [smem:[#allocation9 + $0x55]]
    %v2479 = vld [vmem:[%s1098 + $0x16] sm:$0xff]
    %v2480 = vld [vmem:[%s1098 + $0x1e] sm:$0xff]
    %v2481 = vld [vmem:[%s1098 + $0x26] sm:$0xff]
    %v2482 = vld [vmem:[%s1098 + $0x2e] sm:$0xff]
    %v2483 = vstv %s2478
    %v2484 = vmul.f32 %v2483, %v2479
    %v2485 = vmul.f32 %v2483, %v2480
    %v2486 = vmul.f32 %v2483, %v2481
    %v2487 = vmul.f32 %v2483, %v2482
    %v2488 = vadd.f32 %v2432, %v2484
    %v2489 = vadd.f32 %v2433, %v2485
    %v2490 = vadd.f32 %v2434, %v2486
    %v2491 = vadd.f32 %v2435, %v2487
    %s2492 = sld [smem:[#allocation9 + $0x5c]]
    %v2493 = vld [vmem:[%s1098 + $0x19] sm:$0xff]
    %v2494 = vld [vmem:[%s1098 + $0x21] sm:$0xff]
    %v2495 = vld [vmem:[%s1098 + $0x29] sm:$0xff]
    %v2496 = vld [vmem:[%s1098 + $0x31] sm:$0xff]
    %v2497 = vstv %s2492
    %v2498 = vmul.f32 %v2497, %v2493
    %v2499 = vmul.f32 %v2497, %v2494
    %v2500 = vmul.f32 %v2497, %v2495
    %v2501 = vmul.f32 %v2497, %v2496
    %v2502 = vadd.f32 %v2446, %v2498
    %v2503 = vadd.f32 %v2447, %v2499
    %v2504 = vadd.f32 %v2448, %v2500
    %v2505 = vadd.f32 %v2449, %v2501
    %s2506 = sld [smem:[#allocation9 + $0x33]]
    %v2507 = vld [vmem:[%s1195 + $0x7] sm:$0xff]
    %v2508 = vld [vmem:[%s1195 + $0xf] sm:$0xff]
    %v2509 = vld [vmem:[%s1195 + $0x17] sm:$0xff]
    %v2510 = vld [vmem:[%s1195 + $0x1f] sm:$0xff]
    %v2511 = vstv %s2506
    %v2512 = vmul.f32 %v2511, %v2507
    %v2513 = vmul.f32 %v2511, %v2508
    %v2514 = vmul.f32 %v2511, %v2509
    %v2515 = vmul.f32 %v2511, %v2510
    %v2516 = vadd.f32 %v2460, %v2512
    %v2517 = vadd.f32 %v2461, %v2513
    %v2518 = vadd.f32 %v2462, %v2514
    %v2519 = vadd.f32 %v2463, %v2515
    %s2520 = sld [smem:[#allocation9 + $0x3a]]
    %v2521 = vld [vmem:[%s1195 + $0xa] sm:$0xff]
    %v2522 = vld [vmem:[%s1195 + $0x12] sm:$0xff]
    %v2523 = vld [vmem:[%s1195 + $0x1a] sm:$0xff]
    %v2524 = vld [vmem:[%s1195 + $0x22] sm:$0xff]
    %v2525 = vstv %s2520
    %v2526 = vmul.f32 %v2525, %v2521
    %v2527 = vmul.f32 %v2525, %v2522
    %v2528 = vmul.f32 %v2525, %v2523
    %v2529 = vmul.f32 %v2525, %v2524
    %v2530 = vadd.f32 %v2474, %v2526
    %v2531 = vadd.f32 %v2475, %v2527
    %v2532 = vadd.f32 %v2476, %v2528
    %v2533 = vadd.f32 %v2477, %v2529
    %s2534 = sld [smem:[#allocation9 + $0x41]]
    %v2535 = vld [vmem:[%s1195 + $0xd] sm:$0xff]
    %v2536 = vld [vmem:[%s1195 + $0x15] sm:$0xff]
    %v2537 = vld [vmem:[%s1195 + $0x1d] sm:$0xff]
    %v2538 = vld [vmem:[%s1195 + $0x25] sm:$0xff]
    %v2539 = vstv %s2534
    %v2540 = vmul.f32 %v2539, %v2535
    %v2541 = vmul.f32 %v2539, %v2536
    %v2542 = vmul.f32 %v2539, %v2537
    %v2543 = vmul.f32 %v2539, %v2538
    %v2544 = vadd.f32 %v2488, %v2540
    %v2545 = vadd.f32 %v2489, %v2541
    %v2546 = vadd.f32 %v2490, %v2542
    %v2547 = vadd.f32 %v2491, %v2543
    %s2548 = sld [smem:[#allocation9 + $0x48]]
    %v2549 = vld [vmem:[%s1195 + $0x10] sm:$0xff]
    %v2550 = vld [vmem:[%s1195 + $0x18] sm:$0xff]
    %v2551 = vld [vmem:[%s1195 + $0x20] sm:$0xff]
    %v2552 = vld [vmem:[%s1195 + $0x28] sm:$0xff]
    %v2553 = vstv %s2548
    %v2554 = vmul.f32 %v2553, %v2549
    %v2555 = vmul.f32 %v2553, %v2550
    %v2556 = vmul.f32 %v2553, %v2551
    %v2557 = vmul.f32 %v2553, %v2552
    %v2558 = vadd.f32 %v2502, %v2554
    %v2559 = vadd.f32 %v2503, %v2555
    %v2560 = vadd.f32 %v2504, %v2556
    %v2561 = vadd.f32 %v2505, %v2557
    %s2562 = sld [smem:[#allocation9 + $0x4f]]
    %v2563 = vld [vmem:[%s1195 + $0x13] sm:$0xff]
    %v2564 = vld [vmem:[%s1195 + $0x1b] sm:$0xff]
    %v2565 = vld [vmem:[%s1195 + $0x23] sm:$0xff]
    %v2566 = vld [vmem:[%s1195 + $0x2b] sm:$0xff]
    %v2567 = vstv %s2562
    %v2568 = vmul.f32 %v2567, %v2563
    %v2569 = vmul.f32 %v2567, %v2564
    %v2570 = vmul.f32 %v2567, %v2565
    %v2571 = vmul.f32 %v2567, %v2566
    %v2572 = vadd.f32 %v2516, %v2568
    %v2573 = vadd.f32 %v2517, %v2569
    %v2574 = vadd.f32 %v2518, %v2570
    %v2575 = vadd.f32 %v2519, %v2571
    %s2576 = sld [smem:[#allocation9 + $0x56]]
    %v2577 = vld [vmem:[%s1195 + $0x16] sm:$0xff]
    %v2578 = vld [vmem:[%s1195 + $0x1e] sm:$0xff]
    %v2579 = vld [vmem:[%s1195 + $0x26] sm:$0xff]
    %v2580 = vld [vmem:[%s1195 + $0x2e] sm:$0xff]
    %v2581 = vstv %s2576
    %v2582 = vmul.f32 %v2581, %v2577
    %v2583 = vmul.f32 %v2581, %v2578
    %v2584 = vmul.f32 %v2581, %v2579
    %v2585 = vmul.f32 %v2581, %v2580
    %v2586 = vadd.f32 %v2530, %v2582
    %v2587 = vadd.f32 %v2531, %v2583
    %v2588 = vadd.f32 %v2532, %v2584
    %v2589 = vadd.f32 %v2533, %v2585
    %s2590 = sld [smem:[#allocation9 + $0x5d]]
    %v2591 = vld [vmem:[%s1195 + $0x19] sm:$0xff]
    %v2592 = vld [vmem:[%s1195 + $0x21] sm:$0xff]
    %v2593 = vld [vmem:[%s1195 + $0x29] sm:$0xff]
    %v2594 = vld [vmem:[%s1195 + $0x31] sm:$0xff]
    %v2595 = vstv %s2590
    %v2596 = vmul.f32 %v2595, %v2591
    %v2597 = vmul.f32 %v2595, %v2592
    %v2598 = vmul.f32 %v2595, %v2593
    %v2599 = vmul.f32 %v2595, %v2594
    %v2600 = vadd.f32 %v2544, %v2596
    %v2601 = vadd.f32 %v2545, %v2597
    %v2602 = vadd.f32 %v2546, %v2598
    %v2603 = vadd.f32 %v2547, %v2599
    %s2604 = sld [smem:[#allocation9 + $0x34]]
    %v2605 = vld [vmem:[%s1292 + $0x7] sm:$0xff]
    %v2606 = vld [vmem:[%s1292 + $0xf] sm:$0xff]
    %v2607 = vld [vmem:[%s1292 + $0x17] sm:$0xff]
    %v2608 = vld [vmem:[%s1292 + $0x1f] sm:$0xff]
    %v2609 = vstv %s2604
    %v2610 = vmul.f32 %v2609, %v2605
    %v2611 = vmul.f32 %v2609, %v2606
    %v2612 = vmul.f32 %v2609, %v2607
    %v2613 = vmul.f32 %v2609, %v2608
    %v2614 = vadd.f32 %v2558, %v2610
    %v2615 = vadd.f32 %v2559, %v2611
    %v2616 = vadd.f32 %v2560, %v2612
    %v2617 = vadd.f32 %v2561, %v2613
    %s2618 = sld [smem:[#allocation9 + $0x3b]]
    %v2619 = vld [vmem:[%s1292 + $0xa] sm:$0xff]
    %v2620 = vld [vmem:[%s1292 + $0x12] sm:$0xff]
    %v2621 = vld [vmem:[%s1292 + $0x1a] sm:$0xff]
    %v2622 = vld [vmem:[%s1292 + $0x22] sm:$0xff]
    %v2623 = vstv %s2618
    %v2624 = vmul.f32 %v2623, %v2619
    %v2625 = vmul.f32 %v2623, %v2620
    %v2626 = vmul.f32 %v2623, %v2621
    %v2627 = vmul.f32 %v2623, %v2622
    %v2628 = vadd.f32 %v2572, %v2624
    %v2629 = vadd.f32 %v2573, %v2625
    %v2630 = vadd.f32 %v2574, %v2626
    %v2631 = vadd.f32 %v2575, %v2627
    %s2632 = sld [smem:[#allocation9 + $0x42]]
    %v2633 = vld [vmem:[%s1292 + $0xd] sm:$0xff]
    %v2634 = vld [vmem:[%s1292 + $0x15] sm:$0xff]
    %v2635 = vld [vmem:[%s1292 + $0x1d] sm:$0xff]
    %v2636 = vld [vmem:[%s1292 + $0x25] sm:$0xff]
    %v2637 = vstv %s2632
    %v2638 = vmul.f32 %v2637, %v2633
    %v2639 = vmul.f32 %v2637, %v2634
    %v2640 = vmul.f32 %v2637, %v2635
    %v2641 = vmul.f32 %v2637, %v2636
    %v2642 = vadd.f32 %v2586, %v2638
    %v2643 = vadd.f32 %v2587, %v2639
    %v2644 = vadd.f32 %v2588, %v2640
    %v2645 = vadd.f32 %v2589, %v2641
    %s2646 = sld [smem:[#allocation9 + $0x49]]
    %v2647 = vld [vmem:[%s1292 + $0x10] sm:$0xff]
    %v2648 = vld [vmem:[%s1292 + $0x18] sm:$0xff]
    %v2649 = vld [vmem:[%s1292 + $0x20] sm:$0xff]
    %v2650 = vld [vmem:[%s1292 + $0x28] sm:$0xff]
    %v2651 = vstv %s2646
    %v2652 = vmul.f32 %v2651, %v2647
    %v2653 = vmul.f32 %v2651, %v2648
    %v2654 = vmul.f32 %v2651, %v2649
    %v2655 = vmul.f32 %v2651, %v2650
    %v2656 = vadd.f32 %v2600, %v2652
    %v2657 = vadd.f32 %v2601, %v2653
    %v2658 = vadd.f32 %v2602, %v2654
    %v2659 = vadd.f32 %v2603, %v2655
    %s2660 = sld [smem:[#allocation9 + $0x50]]
    %v2661 = vld [vmem:[%s1292 + $0x13] sm:$0xff]
    %v2662 = vld [vmem:[%s1292 + $0x1b] sm:$0xff]
    %v2663 = vld [vmem:[%s1292 + $0x23] sm:$0xff]
    %v2664 = vld [vmem:[%s1292 + $0x2b] sm:$0xff]
    %v2665 = vstv %s2660
    %v2666 = vmul.f32 %v2665, %v2661
    %v2667 = vmul.f32 %v2665, %v2662
    %v2668 = vmul.f32 %v2665, %v2663
    %v2669 = vmul.f32 %v2665, %v2664
    %v2670 = vadd.f32 %v2614, %v2666
    %v2671 = vadd.f32 %v2615, %v2667
    %v2672 = vadd.f32 %v2616, %v2668
    %v2673 = vadd.f32 %v2617, %v2669
    %s2674 = sld [smem:[#allocation9 + $0x57]]
    %v2675 = vld [vmem:[%s1292 + $0x16] sm:$0xff]
    %v2676 = vld [vmem:[%s1292 + $0x1e] sm:$0xff]
    %v2677 = vld [vmem:[%s1292 + $0x26] sm:$0xff]
    %v2678 = vld [vmem:[%s1292 + $0x2e] sm:$0xff]
    %v2679 = vstv %s2674
    %v2680 = vmul.f32 %v2679, %v2675
    %v2681 = vmul.f32 %v2679, %v2676
    %v2682 = vmul.f32 %v2679, %v2677
    %v2683 = vmul.f32 %v2679, %v2678
    %v2684 = vadd.f32 %v2628, %v2680
    %v2685 = vadd.f32 %v2629, %v2681
    %v2686 = vadd.f32 %v2630, %v2682
    %v2687 = vadd.f32 %v2631, %v2683
    %s2688 = sld [smem:[#allocation9 + $0x5e]]
    %v2689 = vld [vmem:[%s1292 + $0x19] sm:$0xff]
    %v2690 = vld [vmem:[%s1292 + $0x21] sm:$0xff]
    %v2691 = vld [vmem:[%s1292 + $0x29] sm:$0xff]
    %v2692 = vld [vmem:[%s1292 + $0x31] sm:$0xff]
    %v2693 = vstv %s2688
    %v2694 = vmul.f32 %v2693, %v2689
    %v2695 = vmul.f32 %v2693, %v2690
    %v2696 = vmul.f32 %v2693, %v2691
    %v2697 = vmul.f32 %v2693, %v2692
    %v2698 = vadd.f32 %v2642, %v2694
    %v2699 = vadd.f32 %v2643, %v2695
    %v2700 = vadd.f32 %v2644, %v2696
    %v2701 = vadd.f32 %v2645, %v2697
    %s2702 = sld [smem:[#allocation9 + $0x35]]
    %v2703 = vld [vmem:[%s1389 + $0x7] sm:$0xff]
    %v2704 = vld [vmem:[%s1389 + $0xf] sm:$0xff]
    %v2705 = vld [vmem:[%s1389 + $0x17] sm:$0xff]
    %v2706 = vld [vmem:[%s1389 + $0x1f] sm:$0xff]
    %v2707 = vstv %s2702
    %v2708 = vmul.f32 %v2707, %v2703
    %v2709 = vmul.f32 %v2707, %v2704
    %v2710 = vmul.f32 %v2707, %v2705
    %v2711 = vmul.f32 %v2707, %v2706
    %v2712 = vadd.f32 %v2656, %v2708
    %v2713 = vadd.f32 %v2657, %v2709
    %v2714 = vadd.f32 %v2658, %v2710
    %v2715 = vadd.f32 %v2659, %v2711
    %s2716 = sld [smem:[#allocation9 + $0x3c]]
    %v2717 = vld [vmem:[%s1389 + $0xa] sm:$0xff]
    %v2718 = vld [vmem:[%s1389 + $0x12] sm:$0xff]
    %v2719 = vld [vmem:[%s1389 + $0x1a] sm:$0xff]
    %v2720 = vld [vmem:[%s1389 + $0x22] sm:$0xff]
    %v2721 = vstv %s2716
    %v2722 = vmul.f32 %v2721, %v2717
    %v2723 = vmul.f32 %v2721, %v2718
    %v2724 = vmul.f32 %v2721, %v2719
    %v2725 = vmul.f32 %v2721, %v2720
    %v2726 = vadd.f32 %v2670, %v2722
    %v2727 = vadd.f32 %v2671, %v2723
    %v2728 = vadd.f32 %v2672, %v2724
    %v2729 = vadd.f32 %v2673, %v2725
    %s2730 = sld [smem:[#allocation9 + $0x43]]
    %v2731 = vld [vmem:[%s1389 + $0xd] sm:$0xff]
    %v2732 = vld [vmem:[%s1389 + $0x15] sm:$0xff]
    %v2733 = vld [vmem:[%s1389 + $0x1d] sm:$0xff]
    %v2734 = vld [vmem:[%s1389 + $0x25] sm:$0xff]
    %v2735 = vstv %s2730
    %v2736 = vmul.f32 %v2735, %v2731
    %v2737 = vmul.f32 %v2735, %v2732
    %v2738 = vmul.f32 %v2735, %v2733
    %v2739 = vmul.f32 %v2735, %v2734
    %v2740 = vadd.f32 %v2684, %v2736
    %v2741 = vadd.f32 %v2685, %v2737
    %v2742 = vadd.f32 %v2686, %v2738
    %v2743 = vadd.f32 %v2687, %v2739
    %s2744 = sld [smem:[#allocation9 + $0x4a]]
    %v2745 = vld [vmem:[%s1389 + $0x10] sm:$0xff]
    %v2746 = vld [vmem:[%s1389 + $0x18] sm:$0xff]
    %v2747 = vld [vmem:[%s1389 + $0x20] sm:$0xff]
    %v2748 = vld [vmem:[%s1389 + $0x28] sm:$0xff]
    %v2749 = vstv %s2744
    %v2750 = vmul.f32 %v2749, %v2745
    %v2751 = vmul.f32 %v2749, %v2746
    %v2752 = vmul.f32 %v2749, %v2747
    %v2753 = vmul.f32 %v2749, %v2748
    %v2754 = vadd.f32 %v2698, %v2750
    %v2755 = vadd.f32 %v2699, %v2751
    %v2756 = vadd.f32 %v2700, %v2752
    %v2757 = vadd.f32 %v2701, %v2753
    %s2758 = sld [smem:[#allocation9 + $0x51]]
    %v2759 = vld [vmem:[%s1389 + $0x13] sm:$0xff]
    %v2760 = vld [vmem:[%s1389 + $0x1b] sm:$0xff]
    %v2761 = vld [vmem:[%s1389 + $0x23] sm:$0xff]
    %v2762 = vld [vmem:[%s1389 + $0x2b] sm:$0xff]
    %v2763 = vstv %s2758
    %v2764 = vmul.f32 %v2763, %v2759
    %v2765 = vmul.f32 %v2763, %v2760
    %v2766 = vmul.f32 %v2763, %v2761
    %v2767 = vmul.f32 %v2763, %v2762
    %v2768 = vadd.f32 %v2712, %v2764
    %v2769 = vadd.f32 %v2713, %v2765
    %v2770 = vadd.f32 %v2714, %v2766
    %v2771 = vadd.f32 %v2715, %v2767
    %s2772 = sld [smem:[#allocation9 + $0x58]]
    %v2773 = vld [vmem:[%s1389 + $0x16] sm:$0xff]
    %v2774 = vld [vmem:[%s1389 + $0x1e] sm:$0xff]
    %v2775 = vld [vmem:[%s1389 + $0x26] sm:$0xff]
    %v2776 = vld [vmem:[%s1389 + $0x2e] sm:$0xff]
    %v2777 = vstv %s2772
    %v2778 = vmul.f32 %v2777, %v2773
    %v2779 = vmul.f32 %v2777, %v2774
    %v2780 = vmul.f32 %v2777, %v2775
    %v2781 = vmul.f32 %v2777, %v2776
    %v2782 = vadd.f32 %v2726, %v2778
    %v2783 = vadd.f32 %v2727, %v2779
    %v2784 = vadd.f32 %v2728, %v2780
    %v2785 = vadd.f32 %v2729, %v2781
    %s2786 = sld [smem:[#allocation9 + $0x5f]]
    %v2787 = vld [vmem:[%s1389 + $0x19] sm:$0xff]
    %v2788 = vld [vmem:[%s1389 + $0x21] sm:$0xff]
    %v2789 = vld [vmem:[%s1389 + $0x29] sm:$0xff]
    %v2790 = vld [vmem:[%s1389 + $0x31] sm:$0xff]
    %v2791 = vstv %s2786
    %v2792 = vmul.f32 %v2791, %v2787
    %v2793 = vmul.f32 %v2791, %v2788
    %v2794 = vmul.f32 %v2791, %v2789
    %v2795 = vmul.f32 %v2791, %v2790
    %v2796 = vadd.f32 %v2740, %v2792
    %v2797 = vadd.f32 %v2741, %v2793
    %v2798 = vadd.f32 %v2742, %v2794
    %v2799 = vadd.f32 %v2743, %v2795
    %s2800 = sld [smem:[#allocation9 + $0x36]]
    %v2801 = vld [vmem:[%s1486 + $0x7] sm:$0xff]
    %v2802 = vld [vmem:[%s1486 + $0xf] sm:$0xff]
    %v2803 = vld [vmem:[%s1486 + $0x17] sm:$0xff]
    %v2804 = vld [vmem:[%s1486 + $0x1f] sm:$0xff]
    %v2805 = vstv %s2800
    %v2806 = vmul.f32 %v2805, %v2801
    %v2807 = vmul.f32 %v2805, %v2802
    %v2808 = vmul.f32 %v2805, %v2803
    %v2809 = vmul.f32 %v2805, %v2804
    %v2810 = vadd.f32 %v2754, %v2806
    %v2811 = vadd.f32 %v2755, %v2807
    %v2812 = vadd.f32 %v2756, %v2808
    %v2813 = vadd.f32 %v2757, %v2809
    %s2814 = sld [smem:[#allocation9 + $0x3d]]
    %v2815 = vld [vmem:[%s1486 + $0xa] sm:$0xff]
    %v2816 = vld [vmem:[%s1486 + $0x12] sm:$0xff]
    %v2817 = vld [vmem:[%s1486 + $0x1a] sm:$0xff]
    %v2818 = vld [vmem:[%s1486 + $0x22] sm:$0xff]
    %v2819 = vstv %s2814
    %v2820 = vmul.f32 %v2819, %v2815
    %v2821 = vmul.f32 %v2819, %v2816
    %v2822 = vmul.f32 %v2819, %v2817
    %v2823 = vmul.f32 %v2819, %v2818
    %v2824 = vadd.f32 %v2768, %v2820
    %v2825 = vadd.f32 %v2769, %v2821
    %v2826 = vadd.f32 %v2770, %v2822
    %v2827 = vadd.f32 %v2771, %v2823
    %s2828 = sld [smem:[#allocation9 + $0x44]]
    %v2829 = vld [vmem:[%s1486 + $0xd] sm:$0xff]
    %v2830 = vld [vmem:[%s1486 + $0x15] sm:$0xff]
    %v2831 = vld [vmem:[%s1486 + $0x1d] sm:$0xff]
    %v2832 = vld [vmem:[%s1486 + $0x25] sm:$0xff]
    %v2833 = vstv %s2828
    %v2834 = vmul.f32 %v2833, %v2829
    %v2835 = vmul.f32 %v2833, %v2830
    %v2836 = vmul.f32 %v2833, %v2831
    %v2837 = vmul.f32 %v2833, %v2832
    %v2838 = vadd.f32 %v2782, %v2834
    %v2839 = vadd.f32 %v2783, %v2835
    %v2840 = vadd.f32 %v2784, %v2836
    %v2841 = vadd.f32 %v2785, %v2837
    %s2842 = sld [smem:[#allocation9 + $0x4b]]
    %v2843 = vld [vmem:[%s1486 + $0x10] sm:$0xff]
    %v2844 = vld [vmem:[%s1486 + $0x18] sm:$0xff]
    %v2845 = vld [vmem:[%s1486 + $0x20] sm:$0xff]
    %v2846 = vld [vmem:[%s1486 + $0x28] sm:$0xff]
    %v2847 = vstv %s2842
    %v2848 = vmul.f32 %v2847, %v2843
    %v2849 = vmul.f32 %v2847, %v2844
    %v2850 = vmul.f32 %v2847, %v2845
    %v2851 = vmul.f32 %v2847, %v2846
    %v2852 = vadd.f32 %v2796, %v2848
    %v2853 = vadd.f32 %v2797, %v2849
    %v2854 = vadd.f32 %v2798, %v2850
    %v2855 = vadd.f32 %v2799, %v2851
    %s2856 = sld [smem:[#allocation9 + $0x52]]
    %v2857 = vld [vmem:[%s1486 + $0x13] sm:$0xff]
    %v2858 = vld [vmem:[%s1486 + $0x1b] sm:$0xff]
    %v2859 = vld [vmem:[%s1486 + $0x23] sm:$0xff]
    %v2860 = vld [vmem:[%s1486 + $0x2b] sm:$0xff]
    %v2861 = vstv %s2856
    %v2862 = vmul.f32 %v2861, %v2857
    %v2863 = vmul.f32 %v2861, %v2858
    %v2864 = vmul.f32 %v2861, %v2859
    %v2865 = vmul.f32 %v2861, %v2860
    %v2866 = vadd.f32 %v2810, %v2862
    %v2867 = vadd.f32 %v2811, %v2863
    %v2868 = vadd.f32 %v2812, %v2864
    %v2869 = vadd.f32 %v2813, %v2865
    %s2870 = sld [smem:[#allocation9 + $0x59]]
    %v2871 = vld [vmem:[%s1486 + $0x16] sm:$0xff]
    %v2872 = vld [vmem:[%s1486 + $0x1e] sm:$0xff]
    %v2873 = vld [vmem:[%s1486 + $0x26] sm:$0xff]
    %v2874 = vld [vmem:[%s1486 + $0x2e] sm:$0xff]
    %v2875 = vstv %s2870
    %v2876 = vmul.f32 %v2875, %v2871
    %v2877 = vmul.f32 %v2875, %v2872
    %v2878 = vmul.f32 %v2875, %v2873
    %v2879 = vmul.f32 %v2875, %v2874
    %v2880 = vadd.f32 %v2824, %v2876
    %v2881 = vadd.f32 %v2825, %v2877
    %v2882 = vadd.f32 %v2826, %v2878
    %v2883 = vadd.f32 %v2827, %v2879
    %s2884 = sld [smem:[#allocation9 + $0x60]]
    %v2885 = vld [vmem:[%s1486 + $0x19] sm:$0xff]
    %v2886 = vld [vmem:[%s1486 + $0x21] sm:$0xff]
    %v2887 = vld [vmem:[%s1486 + $0x29] sm:$0xff]
    %v2888 = vld [vmem:[%s1486 + $0x31] sm:$0xff]
    %v2889 = vstv %s2884
    %v2890 = vmul.f32 %v2889, %v2885
    %v2891 = vmul.f32 %v2889, %v2886
    %v2892 = vmul.f32 %v2889, %v2887
    %v2893 = vmul.f32 %v2889, %v2888
    %v2894 = vadd.f32 %v2838, %v2890
    %v2895 = vadd.f32 %v2839, %v2891
    %v2896 = vadd.f32 %v2840, %v2892
    %v2897 = vadd.f32 %v2841, %v2893
    %s2898 = sld [smem:[#allocation9 + $0x37]]
    %v2899 = vld [vmem:[%s1583 + $0x7] sm:$0xff]
    %v2900 = vld [vmem:[%s1583 + $0xf] sm:$0xff]
    %v2901 = vld [vmem:[%s1583 + $0x17] sm:$0xff]
    %v2902 = vld [vmem:[%s1583 + $0x1f] sm:$0xff]
    %v2903 = vstv %s2898
    %v2904 = vmul.f32 %v2903, %v2899
    %v2905 = vmul.f32 %v2903, %v2900
    %v2906 = vmul.f32 %v2903, %v2901
    %v2907 = vmul.f32 %v2903, %v2902
    %v2908 = vadd.f32 %v2852, %v2904
    %v2909 = vadd.f32 %v2853, %v2905
    %v2910 = vadd.f32 %v2854, %v2906
    %v2911 = vadd.f32 %v2855, %v2907
    %s2912 = sld [smem:[#allocation9 + $0x3e]]
    %v2913 = vld [vmem:[%s1583 + $0xa] sm:$0xff]
    %v2914 = vld [vmem:[%s1583 + $0x12] sm:$0xff]
    %v2915 = vld [vmem:[%s1583 + $0x1a] sm:$0xff]
    %v2916 = vld [vmem:[%s1583 + $0x22] sm:$0xff]
    %v2917 = vstv %s2912
    %v2918 = vmul.f32 %v2917, %v2913
    %v2919 = vmul.f32 %v2917, %v2914
    %v2920 = vmul.f32 %v2917, %v2915
    %v2921 = vmul.f32 %v2917, %v2916
    %v2922 = vadd.f32 %v2866, %v2918
    %v2923 = vadd.f32 %v2867, %v2919
    %v2924 = vadd.f32 %v2868, %v2920
    %v2925 = vadd.f32 %v2869, %v2921
    %s2926 = sld [smem:[#allocation9 + $0x45]]
    %v2927 = vld [vmem:[%s1583 + $0xd] sm:$0xff]
    %v2928 = vld [vmem:[%s1583 + $0x15] sm:$0xff]
    %v2929 = vld [vmem:[%s1583 + $0x1d] sm:$0xff]
    %v2930 = vld [vmem:[%s1583 + $0x25] sm:$0xff]
    %v2931 = vstv %s2926
    %v2932 = vmul.f32 %v2931, %v2927
    %v2933 = vmul.f32 %v2931, %v2928
    %v2934 = vmul.f32 %v2931, %v2929
    %v2935 = vmul.f32 %v2931, %v2930
    %v2936 = vadd.f32 %v2880, %v2932
    %v2937 = vadd.f32 %v2881, %v2933
    %v2938 = vadd.f32 %v2882, %v2934
    %v2939 = vadd.f32 %v2883, %v2935
    %s2940 = sld [smem:[#allocation9 + $0x4c]]
    %v2941 = vld [vmem:[%s1583 + $0x10] sm:$0xff]
    %v2942 = vld [vmem:[%s1583 + $0x18] sm:$0xff]
    %v2943 = vld [vmem:[%s1583 + $0x20] sm:$0xff]
    %v2944 = vld [vmem:[%s1583 + $0x28] sm:$0xff]
    %v2945 = vstv %s2940
    %v2946 = vmul.f32 %v2945, %v2941
    %v2947 = vmul.f32 %v2945, %v2942
    %v2948 = vmul.f32 %v2945, %v2943
    %v2949 = vmul.f32 %v2945, %v2944
    %v2950 = vadd.f32 %v2894, %v2946
    %v2951 = vadd.f32 %v2895, %v2947
    %v2952 = vadd.f32 %v2896, %v2948
    %v2953 = vadd.f32 %v2897, %v2949
    %s2954 = sld [smem:[#allocation9 + $0x53]]
    %v2955 = vld [vmem:[%s1583 + $0x13] sm:$0xff]
    %v2956 = vld [vmem:[%s1583 + $0x1b] sm:$0xff]
    %v2957 = vld [vmem:[%s1583 + $0x23] sm:$0xff]
    %v2958 = vld [vmem:[%s1583 + $0x2b] sm:$0xff]
    %v2959 = vstv %s2954
    %v2960 = vmul.f32 %v2959, %v2955
    %v2961 = vmul.f32 %v2959, %v2956
    %v2962 = vmul.f32 %v2959, %v2957
    %v2963 = vmul.f32 %v2959, %v2958
    %v2964 = vadd.f32 %v2908, %v2960
    %v2965 = vadd.f32 %v2909, %v2961
    %v2966 = vadd.f32 %v2910, %v2962
    %v2967 = vadd.f32 %v2911, %v2963
    %s2968 = sld [smem:[#allocation9 + $0x5a]]
    %v2969 = vld [vmem:[%s1583 + $0x16] sm:$0xff]
    %v2970 = vld [vmem:[%s1583 + $0x1e] sm:$0xff]
    %v2971 = vld [vmem:[%s1583 + $0x26] sm:$0xff]
    %v2972 = vld [vmem:[%s1583 + $0x2e] sm:$0xff]
    %v2973 = vstv %s2968
    %v2974 = vmul.f32 %v2973, %v2969
    %v2975 = vmul.f32 %v2973, %v2970
    %v2976 = vmul.f32 %v2973, %v2971
    %v2977 = vmul.f32 %v2973, %v2972
    %v2978 = vadd.f32 %v2922, %v2974
    %v2979 = vadd.f32 %v2923, %v2975
    %v2980 = vadd.f32 %v2924, %v2976
    %v2981 = vadd.f32 %v2925, %v2977
    %s2982 = sld [smem:[#allocation9 + $0x61]]
    %v2983 = vld [vmem:[%s1583 + $0x19] sm:$0xff]
    %v2984 = vld [vmem:[%s1583 + $0x21] sm:$0xff]
    %v2985 = vld [vmem:[%s1583 + $0x29] sm:$0xff]
    %v2986 = vld [vmem:[%s1583 + $0x31] sm:$0xff]
    %v2987 = vstv %s2982
    %v2988 = vmul.f32 %v2987, %v2983
    %v2989 = vmul.f32 %v2987, %v2984
    %v2990 = vmul.f32 %v2987, %v2985
    %v2991 = vmul.f32 %v2987, %v2986
    %v2992 = vadd.f32 %v2936, %v2988
    %v2993 = vadd.f32 %v2937, %v2989
    %v2994 = vadd.f32 %v2938, %v2990
    %v2995 = vadd.f32 %v2939, %v2991
    %v2996 = vadd.f32 %v2978, %v2992
    %v2997 = vadd.f32 %v2979, %v2993
    %v2998 = vadd.f32 %v2980, %v2994
    %v2999 = vadd.f32 %v2981, %v2995
    %v3000 = vadd.f32 %v2950, %v2964
    %v3001 = vadd.f32 %v2951, %v2965
    %v3002 = vadd.f32 %v2952, %v2966
    %v3003 = vadd.f32 %v2953, %v2967
    %v3004 = vadd.f32 %v2996, %v3000
    %v3005 = vadd.f32 %v2997, %v3001
    %v3006 = vadd.f32 %v2998, %v3002
    %v3007 = vadd.f32 %v2999, %v3003
    %s3008 = sld [smem:[#allocation4]]
    %v3009 = vstv %s3008
    %v3010 = vadd.f32 %v3004, %v3009
    %v3011 = vadd.f32 %v3005, %v3009
    %v3012 = vadd.f32 %v3006, %v3009
    %v3013 = vadd.f32 %v3007, %v3009
    %v3014 = vxor.u32 %v3010, 2147483648
    %v3015 = vxor.u32 %v3011, 2147483648
    %v3016 = vxor.u32 %v3012, 2147483648
    %v3017 = vxor.u32 %v3013, 2147483648
    %v3018 = vmul.f32 %v3014, 1.442695
    %v3019 = vpow.pop %v3018
    %v3020 = vmul.f32 %v3015, 1.442695
    %v3021 = vpow.pop %v3020
    %v3022 = vmul.f32 %v3016, 1.442695
    %v3023 = vpow.pop %v3022
    %v3024 = vmul.f32 %v3017, 1.442695
    %v3025 = vpow.pop %v3024
    %v3026 = vadd.f32 %v3019, 1.0
    %v3027 = vadd.f32 %v3021, 1.0
    %v3028 = vadd.f32 %v3023, 1.0
    %v3029 = vadd.f32 %v3025, 1.0
    %v3030 = vrcp.pop %v3026
    %v3031 = vmul.f32 1.0, %v3030
    %v3032 = vrcp.pop %v3027
    %v3033 = vmul.f32 1.0, %v3032
    %v3034 = vrcp.pop %v3028
    %v3035 = vmul.f32 1.0, %v3034
    %v3036 = vrcp.pop %v3029
    %v3037 = vmul.f32 1.0, %v3036
    %vm3038 = vcmask 523264
    %3039 = vst.msk [vmem:[#allocation10] sm:$0xff] %vm3038, %v3031
    %3040 = vst.msk [vmem:[#allocation10 + $0x8] sm:$0xff] %vm3038, %v3033
    %3041 = vst.msk [vmem:[#allocation10 + $0x10] sm:$0xff] %vm3038, %v3035
    %3042 = vst.msk [vmem:[#allocation10 + $0x18] sm:$0xff] %vm3038, %v3037
    // Predicated region
    $region22: #{tpu_custom_call.1} parent=1 // pred_check
      _
    $region23: #{tpu_custom_call.1} parent=1 // pred_check_branch
      %3044 = sbr.rel (0) target = $region25
    $region24: #{tpu_custom_call.1} parent=1 // pred_region
      %s3046 = ssub.s32 512, 512
      %3047 = vsyncadd [#allocation7], %s3046
      %s3048 = sshll.u32 [#allocation10], 4
      %s3049 = int_to_ptr.vmem [resolvable:$true] %s3048
      %3054 = dma.vmem_to_hbm [thread:$0]  %s3049, 512, %s3, [#allocation7], 128, 128, 8
    $region25: #{tpu_custom_call.1} parent=1 // pred_fallthru
      _
    // Predicated region
    $region26: #{tpu_custom_call.1} parent=1 // pred_check
      _
    $region27: #{tpu_custom_call.1} parent=1 // pred_check_branch
      %3056 = sbr.rel (0) target = $region29
    $region28: #{tpu_custom_call.1} parent=1 // pred_region
      %3057 = dma.done [#allocation7], 512
    $region29: #{tpu_custom_call.1} parent=1 // pred_fallthru
      _
    %3058 = vsyncpa [#allocation6], 1
    %3059 = vsyncpa [#allocation7], 1
    %3060 = vsyncpa [#allocation8], 1

</llo_original>
